<compile_context>
chip_gen: v7x
topology: tpu7x:2x2x1
jax: 0.10.0
libtpu: 0.0.40
codegen_flags: <defaults>
</compile_context>

<pallas_src>
import math
from functools import partial

import jax
import jax.numpy as jnp
from jax import lax
from jax.experimental import pallas as pl
from jax.experimental.pallas import tpu as pltpu

EPS = 1e-6


def _layer_norm(x, alpha, bias):
    # alpha * (x - mean) / (std + eps) + bias, std with Bessel's correction (N-1)
    d = x.shape[-1]
    mean = jnp.mean(x, axis=-1, keepdims=True)
    var = jnp.sum((x - mean) ** 2, axis=-1, keepdims=True) / (d - 1)
    return alpha * (x - mean) / (jnp.sqrt(var) + EPS) + bias


def encoder_kernel(n_heads, block_b, seq, d_model, d_ff,
                   ln_ref,                                   # SMEM (4L+2,) f32
                   x_ref, mb_ref,                            # (M,D) f32, (Bt,1,S) f32
                   wqkv_ref, bqkv_ref, wo_ref, w1_ref, w2_ref, brest_ref,
                   o_ref,
                   x_scr, qkv_scr, ctx_scr):
    l = pl.program_id(1)
    n_layers = pl.num_programs(1)
    dk = d_model // n_heads

    # First layer for this batch block: load activations into resident VMEM.
    @pl.when(l == 0)
    def _():
        x_scr[...] = x_ref[...]

    x = x_scr[...]                                           # (M, D) f32

    # ---- sublayer 1: x + MHA(LN1(x)) ----
    a1 = ln_ref[4 * l + 0]
    b1 = ln_ref[4 * l + 1]
    xn = _layer_norm(x, a1, b1).astype(jnp.bfloat16)

    # Fused lane-dense QKV projection: (M, D) @ (D, 3D).  1/sqrt(dk) is already
    # folded into the q columns of wqkv/bqkv host-side.
    qkv = jnp.dot(xn, wqkv_ref[0], preferred_element_type=jnp.float32) + bqkv_ref[0]
    qkv_scr[...] = qkv.astype(jnp.bfloat16)

    # Attention per (batch element in block, head).  Every per-iteration value
    # dies at the ctx_scr store, so vreg pressure stays flat in Bt and H.
    # TODO(synk): flash-style KV tiling of the (S,S) scores for long sequences.
    def attend_one(i, carry):
        row = pl.multiple_of(i * seq, seq)
        mb = mb_ref[i]                                       # (1, S) additive key-mask bias
        for h in range(n_heads):                             # small static H -> static lane slices
            qh = qkv_scr[pl.ds(row, seq), h * dk:(h + 1) * dk]
            kh = qkv_scr[pl.ds(row, seq), d_model + h * dk:d_model + (h + 1) * dk]
            vh = qkv_scr[pl.ds(row, seq), 2 * d_model + h * dk:2 * d_model + (h + 1) * dk]
            s = lax.dot_general(qh, kh, (((1,), (1,)), ((), ())),
                                preferred_element_type=jnp.float32)     # (S, S)
            s = s + mb
            s = s - jnp.max(s, axis=-1, keepdims=True)
            p = jnp.exp(s)
            p = p * pl.reciprocal(jnp.sum(p, axis=-1, keepdims=True), approx=True)
            ctx = jnp.dot(p.astype(jnp.bfloat16), vh,
                          preferred_element_type=jnp.float32)           # (S, dk)
            ctx_scr[pl.ds(row, seq), h * dk:(h + 1) * dk] = ctx.astype(jnp.bfloat16)
        return carry

    lax.fori_loop(0, block_b, attend_one, 0, unroll=block_b <= 4)

    # Single lane-dense output projection on the assembled context: (M, D) @ (D, D).
    bo = brest_ref[0, :, 0:d_model]                          # (1, D)
    attn = jnp.dot(ctx_scr[...], wo_ref[0], preferred_element_type=jnp.float32)
    x = x + attn + bo                                        # dropout = identity (eval)

    # ---- sublayer 2: x + FFN(LN2(x)) ----
    a2 = ln_ref[4 * l + 2]
    b2 = ln_ref[4 * l + 3]
    xn2 = _layer_norm(x, a2, b2).astype(jnp.bfloat16)
    b1_ff = brest_ref[0, :, d_model:d_model + d_ff]          # (1, d_ff)
    b2_ff = brest_ref[0, :, d_model + d_ff:2 * d_model + d_ff]
    h1 = jnp.dot(xn2, w1_ref[0], preferred_element_type=jnp.float32) + b1_ff
    h1 = jnp.maximum(h1, 0.0).astype(jnp.bfloat16)
    ff = jnp.dot(h1, w2_ref[0], preferred_element_type=jnp.float32) + b2_ff
    x = x + ff

    x_scr[...] = x

    # Last layer: apply the final LayerNormalization and write the output block.
    @pl.when(l == n_layers - 1)
    def _():
        af = ln_ref[4 * n_layers + 0]
        bf = ln_ref[4 * n_layers + 1]
        o_ref[...] = _layer_norm(x, af, bf)


def _pick_block_b(batch, seq, max_tokens=1024):
    """Largest divisor of `batch` whose token block Bt*S stays within max_tokens."""
    bt = 1
    for cand in range(1, batch + 1):
        if batch % cand == 0 and cand * seq <= max_tokens:
            bt = cand
    return bt


def encoder_forward(x, mask, layer_params, final_ln, n_heads):
    """Fused encoder: single pallas_call over grid=(B // Bt, n_layers)."""
    B, S, D = x.shape
    L = len(layer_params)
    H = n_heads
    dk = D // H
    d_ff = layer_params[0]["w1"].shape[-1]

    assert D % H == 0
    assert D % 128 == 0, "d_model must be a multiple of 128 (lane width)"
    assert d_ff % 128 == 0, "d_ff must be a multiple of 128 (lane width)"
    assert S % 8 == 0, "seq length must be a multiple of 8 (sublane width)"

    bt = _pick_block_b(B, S)
    M = bt * S

    def stack(name):
        return jnp.stack([p[name] for p in layer_params])

    # Fused, lane-dense weights; bf16 for MXU inputs, biases stay f32.
    scale = 1.0 / math.sqrt(dk)
    wqkv = jnp.concatenate([stack("wq") * scale, stack("wk"), stack("wv")],
                           axis=-1).astype(jnp.bfloat16)               # (L, D, 3D)
    bqkv = jnp.concatenate([stack("bq") * scale, stack("bk"), stack("bv")],
                           axis=-1).astype(jnp.float32)                # (L, 1, 3D)
    wo = stack("wo").astype(jnp.bfloat16)                              # (L, D, D)
    w1 = stack("w1").astype(jnp.bfloat16)                              # (L, D, d_ff)
    w2 = stack("w2").astype(jnp.bfloat16)                              # (L, d_ff, D)
    brest = jnp.concatenate([stack("bo"), stack("b1"), stack("b2")],
                            axis=-1).astype(jnp.float32)               # (L, 1, 2D+d_ff)

    # Per-norm learnable LayerNorm scalars (2 residual norms per layer + final norm).
    ln = jnp.stack([jnp.stack([jnp.asarray(p["ln1_a"], jnp.float32),
                               jnp.asarray(p["ln1_b"], jnp.float32),
                               jnp.asarray(p["ln2_a"], jnp.float32),
                               jnp.asarray(p["ln2_b"], jnp.float32)])
                    for p in layer_params]).reshape(4 * L)
    ln = jnp.concatenate([ln, jnp.asarray(final_ln, jnp.float32).reshape(2)])  # (4L+2,)

    # Additive key-mask bias precomputed once (1 = attend, 0 = masked key).
    mask_bias = jnp.where(mask == 0, -1e9, 0.0).astype(jnp.float32)    # (B, 1, S)
    x2d = x.reshape(B * S, D).astype(jnp.float32)

    # VMEM budget from the actual double-buffered weight blocks + scratch + activations.
    wbytes = 2 * (D * 3 * D + D * D + 2 * D * d_ff)                    # bf16 weights / layer
    bbytes = 4 * (3 * D + 2 * D + d_ff)                                # f32 biases / layer
    act = M * D * 4
    scratch = M * D * 4 + M * 3 * D * 2 + M * D * 2
    vmem_est = 2 * (wbytes + bbytes) + 4 * act + scratch + (1 << 20)
    vmem_limit = int(min(max(2 * vmem_est, 32 << 20), 100 << 20))

    wmap = lambda b, l: (l, 0, 0)

    out = pl.pallas_call(
        partial(encoder_kernel, H, bt, S, D, d_ff),
        out_shape=jax.ShapeDtypeStruct((B * S, D), jnp.float32),
        grid=(B // bt, L),
        in_specs=[
            pl.BlockSpec(memory_space=pltpu.MemorySpace.SMEM),         # LN scalars (whole, SMEM)
            pl.BlockSpec((M, D), lambda b, l: (b, 0)),                 # x (same block across l)
            pl.BlockSpec((bt, 1, S), lambda b, l: (b, 0, 0)),          # key-mask bias
            pl.BlockSpec((1, D, 3 * D), wmap),                         # wqkv
            pl.BlockSpec((1, 1, 3 * D), wmap),                         # bqkv
            pl.BlockSpec((1, D, D), wmap),                             # wo
            pl.BlockSpec((1, D, d_ff), wmap),                          # w1
            pl.BlockSpec((1, d_ff, D), wmap),                          # w2
            pl.BlockSpec((1, 1, 2 * D + d_ff), wmap),                  # bo | b1 | b2
        ],
        out_specs=pl.BlockSpec((M, D), lambda b, l: (b, 0)),
        scratch_shapes=[
            pltpu.VMEM((M, D), jnp.float32),        # resident activation across layers
            pltpu.VMEM((M, 3 * D), jnp.bfloat16),   # fused QKV projections
            pltpu.VMEM((M, D), jnp.bfloat16),       # assembled attention context
        ],
        compiler_params=pltpu.CompilerParams(
            dimension_semantics=("parallel", "arbitrary"),
            vmem_limit_bytes=vmem_limit),
    )(ln, x2d, mask_bias, wqkv, bqkv, wo, w1, w2, brest)

    return out.reshape(B, S, D)


# ----------------------------- pure-JAX fp32 reference -----------------------------
def _ref_forward(x, mask, layer_params, final_ln, n_heads):
    def ln(x, a, b):
        d = x.shape[-1]
        mean = jnp.mean(x, axis=-1, keepdims=True)
        var = jnp.sum((x - mean) ** 2, axis=-1, keepdims=True) / (d - 1)
        return a * (x - mean) / (jnp.sqrt(var) + EPS) + b

    B, S, D = x.shape
    dk = D // n_heads
    key_mask = (mask == 0)[:, :, None, :]                    # (B, 1, 1, S)
    for p in layer_params:
        xn = ln(x, p["ln1_a"], p["ln1_b"])
        q = xn @ p["wq"] + p["bq"]
        k = xn @ p["wk"] + p["bk"]
        v = xn @ p["wv"] + p["bv"]
        q = q.reshape(B, S, n_heads, dk).transpose(0, 2, 1, 3)
        k = k.reshape(B, S, n_heads, dk).transpose(0, 2, 1, 3)
        v = v.reshape(B, S, n_heads, dk).transpose(0, 2, 1, 3)
        s = jnp.einsum("bhqd,bhkd->bhqk", q, k) / math.sqrt(dk)
        s = jnp.where(key_mask, -1e9, s)
        a = jax.nn.softmax(s, axis=-1)
        o = jnp.einsum("bhqk,bhkd->bhqd", a, v).transpose(0, 2, 1, 3).reshape(B, S, D)
        x = x + (o @ p["wo"] + p["bo"])
        xn2 = ln(x, p["ln2_a"], p["ln2_b"])
        x = x + (jnp.maximum(xn2 @ p["w1"] + p["b1"], 0.0) @ p["w2"] + p["b2"])
    return ln(x, final_ln[0], final_ln[1])


# ------------------------------- parameter init --------------------------------
def make_layer_params(key, d_model, d_ff):
    ks = jax.random.split(key, 16)
    s = 0.1

    def rnd(k, shape):
        return s * jax.random.normal(k, shape, jnp.float32)

    return dict(
        wq=rnd(ks[0], (d_model, d_model)), bq=rnd(ks[1], (1, d_model)),
        wk=rnd(ks[2], (d_model, d_model)), bk=rnd(ks[3], (1, d_model)),
        wv=rnd(ks[4], (d_model, d_model)), bv=rnd(ks[5], (1, d_model)),
        wo=rnd(ks[6], (d_model, d_model)), bo=rnd(ks[7], (1, d_model)),
        w1=rnd(ks[8], (d_model, d_ff)),    b1=rnd(ks[9], (1, d_ff)),
        w2=rnd(ks[10], (d_ff, d_model)),   b2=rnd(ks[11], (1, d_model)),
        # learnable per-norm LayerNormalization scalars (alpha init ~1, bias ~0)
        ln1_a=1.0 + 0.1 * jax.random.normal(ks[12], (), jnp.float32),
        ln1_b=0.1 * jax.random.normal(ks[13], (), jnp.float32),
        ln2_a=1.0 + 0.1 * jax.random.normal(ks[14], (), jnp.float32),
        ln2_b=0.1 * jax.random.normal(ks[15], (), jnp.float32),
    )


if __name__ == "__main__":
    # Small but lane/sublane-friendly shapes (D, d_ff multiples of 128; S multiple of 8).
    B, S, D, H, D_FF, N_LAYERS = 2, 16, 128, 4, 256, 2

    root = jax.random.PRNGKey(0)
    kx, kp, kf = jax.random.split(root, 3)
    x = jax.random.normal(kx, (B, S, D), jnp.float32)

    # mask: (B, 1, S); mask out the last 3 key positions of batch element 1
    mask = jnp.ones((B, 1, S), jnp.int32)
    mask = mask.at[1, 0, S - 3:].set(0)

    layer_keys = jax.random.split(kp, N_LAYERS)
    layer_params = [make_layer_params(k, D, D_FF) for k in layer_keys]
    final_ln = jnp.array([1.0, 0.0], jnp.float32) + 0.1 * jax.random.normal(kf, (2,), jnp.float32)

    out = encoder_forward(x, mask, layer_params, final_ln, H)
    out = jax.block_until_ready(out)

    ref = _ref_forward(x, mask, layer_params, final_ln, H)
    assert out.shape == (B, S, D)
    # bf16 MXU inputs with f32 accumulation + approx softmax reciprocal -> compare
    # against the fp32 reference with a tolerance covering deliberate bf16 rounding.
    assert jnp.allclose(out, ref, atol=5e-2, rtol=5e-2), "mismatch vs pure-JAX reference"

    print("KERNEL_OK")
</pallas_src>

<mosaic_0001>
module attributes {stable_mosaic.version = 11 : i64} {
  func.func @encoder_kernel(%arg0: i32, %arg1: i32, %arg2: memref<10xf32, #tpu.memory_space<smem>>, %arg3: memref<32x128xf32, #tpu.memory_space<vmem>>, %arg4: memref<2x1x16xf32, #tpu.memory_space<vmem>>, %arg5: memref<1x128x384xbf16, #tpu.memory_space<vmem>>, %arg6: memref<1x1x384xf32, #tpu.memory_space<vmem>>, %arg7: memref<1x128x128xbf16, #tpu.memory_space<vmem>>, %arg8: memref<1x128x256xbf16, #tpu.memory_space<vmem>>, %arg9: memref<1x256x128xbf16, #tpu.memory_space<vmem>>, %arg10: memref<1x1x512xf32, #tpu.memory_space<vmem>>, %arg11: memref<32x128xf32, #tpu.memory_space<vmem>>, %arg12: memref<32x128xf32, #tpu.memory_space<vmem>>, %arg13: memref<32x384xbf16, #tpu.memory_space<vmem>>, %arg14: memref<32x128xbf16, #tpu.memory_space<vmem>>) attributes {dimension_semantics = [#tpu.dimension_semantics<parallel>, #tpu.dimension_semantics<arbitrary>], iteration_bounds = array<i64: 1, 2>, scalar_prefetch = 0 : i64, scratch_operands = 3 : i64, tpu.core_type = #tpu.core_type<tc>, window_params = [{transform_indices = @transform_0, window_bounds = array<i64: 10>}, {transform_indices = @transform_1, window_bounds = array<i64: 32, 128>}, {transform_indices = @transform_2, window_bounds = array<i64: 2, 1, 16>}, {transform_indices = @transform_3, window_bounds = array<i64: 1, 128, 384>}, {transform_indices = @transform_4, window_bounds = array<i64: 1, 1, 384>}, {transform_indices = @transform_5, window_bounds = array<i64: 1, 128, 128>}, {transform_indices = @transform_6, window_bounds = array<i64: 1, 128, 256>}, {transform_indices = @transform_7, window_bounds = array<i64: 1, 256, 128>}, {transform_indices = @transform_8, window_bounds = array<i64: 1, 1, 512>}, {transform_indices = @transform_9, window_bounds = array<i64: 32, 128>}]} {
    %c0_i32 = arith.constant 0 : i32
    %0 = arith.cmpi eq, %arg1, %c0_i32 : i32
    %1 = arith.extui %0 : i1 to i32
    %c0_i32_0 = arith.constant 0 : i32
    %2 = arith.cmpi ne, %1, %c0_i32_0 : i32
    scf.if %2 {
      %c0_112 = arith.constant 0 : index
      %c0_113 = arith.constant 0 : index
      %308 = vector.load %arg3[%c0_112, %c0_113] : memref<32x128xf32, #tpu.memory_space<vmem>>, vector<32x128xf32>
      %c0_114 = arith.constant 0 : index
      %c0_115 = arith.constant 0 : index
      %309 = vector.load %arg12[%c0_114, %c0_115] : memref<32x128xf32, #tpu.memory_space<vmem>>, vector<32x128xf32>
      tpu.vector_store %arg12[%c0_114, %c0_115], %308 {strides = array<i32>} : memref<32x128xf32, #tpu.memory_space<vmem>>, vector<32x128xf32>,
    } else {
    }
    %c0 = arith.constant 0 : index
    %c0_1 = arith.constant 0 : index
    %3 = vector.load %arg12[%c0, %c0_1] : memref<32x128xf32, #tpu.memory_space<vmem>>, vector<32x128xf32>
    %c4_i32 = arith.constant 4 : i32
    %4 = arith.muli %c4_i32, %arg1 : i32
    %c0_i32_2 = arith.constant 0 : i32
    %5 = arith.addi %4, %c0_i32_2 : i32
    %6 = arith.index_cast %5 : i32 to index
    %7 = memref.load %arg2[%6] : memref<10xf32, #tpu.memory_space<smem>>
    %c4_i32_3 = arith.constant 4 : i32
    %8 = arith.muli %c4_i32_3, %arg1 : i32
    %c1_i32 = arith.constant 1 : i32
    %9 = arith.addi %8, %c1_i32 : i32
    %10 = arith.index_cast %9 : i32 to index
    %11 = memref.load %arg2[%10] : memref<10xf32, #tpu.memory_space<smem>>
    %cst = arith.constant dense<0.000000e+00> : vector<32xf32>
    %12 = vector.multi_reduction <add>, %3, %cst [1] : vector<32x128xf32> to vector<32xf32>
    %13 = vector.shape_cast %12 : vector<32xf32> to vector<32x1xf32>
    %cst_4 = arith.constant 1.280000e+02 : f32
    %14 = vector.broadcast %cst_4 : f32 to vector<32x1xf32>
    %15 = arith.divf %13, %14 : vector<32x1xf32>
    %16 = vector.broadcast %15 : vector<32x1xf32> to vector<32x128xf32>
    %17 = arith.subf %3, %16 : vector<32x128xf32>
    %18 = arith.mulf %17, %17 : vector<32x128xf32>
    %cst_5 = arith.constant dense<0.000000e+00> : vector<32xf32>
    %19 = vector.multi_reduction <add>, %18, %cst_5 [1] : vector<32x128xf32> to vector<32xf32>
    %20 = vector.shape_cast %19 : vector<32xf32> to vector<32x1xf32>
    %cst_6 = arith.constant 1.270000e+02 : f32
    %21 = vector.broadcast %cst_6 : f32 to vector<32x1xf32>
    %22 = arith.divf %20, %21 : vector<32x1xf32>
    %23 = vector.broadcast %15 : vector<32x1xf32> to vector<32x128xf32>
    %24 = arith.subf %3, %23 : vector<32x128xf32>
    %25 = vector.broadcast %7 : f32 to vector<32x128xf32>
    %26 = arith.mulf %25, %24 : vector<32x128xf32>
    %27 = math.sqrt %22 : vector<32x1xf32>
    %cst_7 = arith.constant 9.99999997E-7 : f32
    %28 = vector.broadcast %cst_7 : f32 to vector<32x1xf32>
    %29 = arith.addf %27, %28 : vector<32x1xf32>
    %30 = vector.broadcast %29 : vector<32x1xf32> to vector<32x128xf32>
    %31 = arith.divf %26, %30 : vector<32x128xf32>
    %32 = vector.broadcast %11 : f32 to vector<32x128xf32>
    %33 = arith.addf %31, %32 : vector<32x128xf32>
    %34 = arith.truncf %33 : vector<32x128xf32> to vector<32x128xbf16>
    %c0_8 = arith.constant 0 : index
    %c0_9 = arith.constant 0 : index
    %c0_10 = arith.constant 0 : index
    %35 = vector.load %arg5[%c0_8, %c0_9, %c0_10] : memref<1x128x384xbf16, #tpu.memory_space<vmem>>, vector<1x128x384xbf16>
    %36 = vector.shape_cast %35 : vector<1x128x384xbf16> to vector<128x384xbf16>
    %cst_11 = arith.constant dense<0.000000e+00> : vector<32x384xf32>
    %37 = tpu.matmul %34, %36, %cst_11 {dimension_numbers = #tpu.dot_dimension_numbers<[1], [0], [0], [1], [0, 0, 1, 1], [], []>} : vector<32x128xbf16>, vector<128x384xbf16>, vector<32x384xf32> -> vector<32x384xf32>
    %c0_12 = arith.constant 0 : index
    %c0_13 = arith.constant 0 : index
    %c0_14 = arith.constant 0 : index
    %38 = vector.load %arg6[%c0_12, %c0_13, %c0_14] : memref<1x1x384xf32, #tpu.memory_space<vmem>>, vector<1x1x384xf32>
    %39 = vector.shape_cast %38 : vector<1x1x384xf32> to vector<1x384xf32>
    %40 = vector.broadcast %39 : vector<1x384xf32> to vector<32x384xf32>
    %41 = arith.addf %37, %40 : vector<32x384xf32>
    %42 = arith.truncf %41 : vector<32x384xf32> to vector<32x384xbf16>
    %c0_15 = arith.constant 0 : index
    %c0_16 = arith.constant 0 : index
    %43 = vector.load %arg13[%c0_15, %c0_16] : memref<32x384xbf16, #tpu.memory_space<vmem>>, vector<32x384xbf16>
    tpu.vector_store %arg13[%c0_15, %c0_16], %42 {strides = array<i32>} : memref<32x384xbf16, #tpu.memory_space<vmem>>, vector<32x384xbf16>,
    %c0_i32_17 = arith.constant 0 : i32
    %c16_i32 = arith.constant 16 : i32
    %44 = arith.muli %c0_i32_17, %c16_i32 : i32
    %45 = tpu.assume_multiple %44, 16 : i32
    %46 = arith.index_cast %c0_i32_17 : i32 to index
    %c0_18 = arith.constant 0 : index
    %c0_19 = arith.constant 0 : index
    %47 = vector.load %arg4[%46, %c0_18, %c0_19] : memref<2x1x16xf32, #tpu.memory_space<vmem>>, vector<1x1x16xf32>
    %48 = vector.shape_cast %47 : vector<1x1x16xf32> to vector<1x16xf32>
    %49 = arith.index_cast %45 : i32 to index
    %c0_20 = arith.constant 0 : index
    %50 = vector.load %arg13[%49, %c0_20] : memref<32x384xbf16, #tpu.memory_space<vmem>>, vector<16x32xbf16>
    %51 = arith.index_cast %45 : i32 to index
    %c128 = arith.constant 128 : index
    %52 = vector.load %arg13[%51, %c128] : memref<32x384xbf16, #tpu.memory_space<vmem>>, vector<16x32xbf16>
    %53 = arith.index_cast %45 : i32 to index
    %c256 = arith.constant 256 : index
    %54 = vector.load %arg13[%53, %c256] : memref<32x384xbf16, #tpu.memory_space<vmem>>, vector<16x32xbf16>
    %cst_21 = arith.constant dense<0.000000e+00> : vector<16x16xf32>
    %55 = tpu.matmul %50, %52, %cst_21 {dimension_numbers = #tpu.dot_dimension_numbers<[1], [1], [0], [0], [0, 0, 1, 0], [], []>} : vector<16x32xbf16>, vector<16x32xbf16>, vector<16x16xf32> -> vector<16x16xf32>
    %56 = vector.broadcast %48 : vector<1x16xf32> to vector<16x16xf32>
    %57 = arith.addf %55, %56 : vector<16x16xf32>
    %cst_22 = arith.constant dense<0xFF800000> : vector<16xf32>
    %58 = vector.multi_reduction <maximumf>, %57, %cst_22 [1] : vector<16x16xf32> to vector<16xf32>
    %59 = vector.shape_cast %58 : vector<16xf32> to vector<16x1xf32>
    %60 = vector.broadcast %59 : vector<16x1xf32> to vector<16x16xf32>
    %61 = arith.subf %57, %60 : vector<16x16xf32>
    %62 = math.exp %61 : vector<16x16xf32>
    %cst_23 = arith.constant dense<0.000000e+00> : vector<16xf32>
    %63 = vector.multi_reduction <add>, %62, %cst_23 [1] : vector<16x16xf32> to vector<16xf32>
    %64 = vector.shape_cast %63 : vector<16xf32> to vector<16x1xf32>
    %65 = tpu.reciprocal %64 {approx = true} : vector<16x1xf32> -> vector<16x1xf32>
    %66 = vector.broadcast %65 : vector<16x1xf32> to vector<16x16xf32>
    %67 = arith.mulf %62, %66 : vector<16x16xf32>
    %68 = arith.truncf %67 : vector<16x16xf32> to vector<16x16xbf16>
    %cst_24 = arith.constant dense<0.000000e+00> : vector<16x32xf32>
    %69 = tpu.matmul %68, %54, %cst_24 {dimension_numbers = #tpu.dot_dimension_numbers<[1], [0], [0], [1], [0, 0, 1, 1], [], []>} : vector<16x16xbf16>, vector<16x32xbf16>, vector<16x32xf32> -> vector<16x32xf32>
    %70 = arith.truncf %69 : vector<16x32xf32> to vector<16x32xbf16>
    %71 = arith.index_cast %45 : i32 to index
    %c0_25 = arith.constant 0 : index
    %72 = vector.load %arg14[%71, %c0_25] : memref<32x128xbf16, #tpu.memory_space<vmem>>, vector<16x32xbf16>
    tpu.vector_store %arg14[%71, %c0_25], %70 {strides = array<i32>} : memref<32x128xbf16, #tpu.memory_space<vmem>>, vector<16x32xbf16>,
    %73 = arith.index_cast %45 : i32 to index
    %c32 = arith.constant 32 : index
    %74 = vector.load %arg13[%73, %c32] : memref<32x384xbf16, #tpu.memory_space<vmem>>, vector<16x32xbf16>
    %75 = arith.index_cast %45 : i32 to index
    %c160 = arith.constant 160 : index
    %76 = vector.load %arg13[%75, %c160] : memref<32x384xbf16, #tpu.memory_space<vmem>>, vector<16x32xbf16>
    %77 = arith.index_cast %45 : i32 to index
    %c288 = arith.constant 288 : index
    %78 = vector.load %arg13[%77, %c288] : memref<32x384xbf16, #tpu.memory_space<vmem>>, vector<16x32xbf16>
    %cst_26 = arith.constant dense<0.000000e+00> : vector<16x16xf32>
    %79 = tpu.matmul %74, %76, %cst_26 {dimension_numbers = #tpu.dot_dimension_numbers<[1], [1], [0], [0], [0, 0, 1, 0], [], []>} : vector<16x32xbf16>, vector<16x32xbf16>, vector<16x16xf32> -> vector<16x16xf32>
    %80 = vector.broadcast %48 : vector<1x16xf32> to vector<16x16xf32>
    %81 = arith.addf %79, %80 : vector<16x16xf32>
    %cst_27 = arith.constant dense<0xFF800000> : vector<16xf32>
    %82 = vector.multi_reduction <maximumf>, %81, %cst_27 [1] : vector<16x16xf32> to vector<16xf32>
    %83 = vector.shape_cast %82 : vector<16xf32> to vector<16x1xf32>
    %84 = vector.broadcast %83 : vector<16x1xf32> to vector<16x16xf32>
    %85 = arith.subf %81, %84 : vector<16x16xf32>
    %86 = math.exp %85 : vector<16x16xf32>
    %cst_28 = arith.constant dense<0.000000e+00> : vector<16xf32>
    %87 = vector.multi_reduction <add>, %86, %cst_28 [1] : vector<16x16xf32> to vector<16xf32>
    %88 = vector.shape_cast %87 : vector<16xf32> to vector<16x1xf32>
    %89 = tpu.reciprocal %88 {approx = true} : vector<16x1xf32> -> vector<16x1xf32>
    %90 = vector.broadcast %89 : vector<16x1xf32> to vector<16x16xf32>
    %91 = arith.mulf %86, %90 : vector<16x16xf32>
    %92 = arith.truncf %91 : vector<16x16xf32> to vector<16x16xbf16>
    %cst_29 = arith.constant dense<0.000000e+00> : vector<16x32xf32>
    %93 = tpu.matmul %92, %78, %cst_29 {dimension_numbers = #tpu.dot_dimension_numbers<[1], [0], [0], [1], [0, 0, 1, 1], [], []>} : vector<16x16xbf16>, vector<16x32xbf16>, vector<16x32xf32> -> vector<16x32xf32>
    %94 = arith.truncf %93 : vector<16x32xf32> to vector<16x32xbf16>
    %95 = arith.index_cast %45 : i32 to index
    %c32_30 = arith.constant 32 : index
    %96 = vector.load %arg14[%95, %c32_30] : memref<32x128xbf16, #tpu.memory_space<vmem>>, vector<16x32xbf16>
    tpu.vector_store %arg14[%95, %c32_30], %94 {strides = array<i32>} : memref<32x128xbf16, #tpu.memory_space<vmem>>, vector<16x32xbf16>,
    %97 = arith.index_cast %45 : i32 to index
    %c64 = arith.constant 64 : index
    %98 = vector.load %arg13[%97, %c64] : memref<32x384xbf16, #tpu.memory_space<vmem>>, vector<16x32xbf16>
    %99 = arith.index_cast %45 : i32 to index
    %c192 = arith.constant 192 : index
    %100 = vector.load %arg13[%99, %c192] : memref<32x384xbf16, #tpu.memory_space<vmem>>, vector<16x32xbf16>
    %101 = arith.index_cast %45 : i32 to index
    %c320 = arith.constant 320 : index
    %102 = vector.load %arg13[%101, %c320] : memref<32x384xbf16, #tpu.memory_space<vmem>>, vector<16x32xbf16>
    %cst_31 = arith.constant dense<0.000000e+00> : vector<16x16xf32>
    %103 = tpu.matmul %98, %100, %cst_31 {dimension_numbers = #tpu.dot_dimension_numbers<[1], [1], [0], [0], [0, 0, 1, 0], [], []>} : vector<16x32xbf16>, vector<16x32xbf16>, vector<16x16xf32> -> vector<16x16xf32>
    %104 = vector.broadcast %48 : vector<1x16xf32> to vector<16x16xf32>
    %105 = arith.addf %103, %104 : vector<16x16xf32>
    %cst_32 = arith.constant dense<0xFF800000> : vector<16xf32>
    %106 = vector.multi_reduction <maximumf>, %105, %cst_32 [1] : vector<16x16xf32> to vector<16xf32>
    %107 = vector.shape_cast %106 : vector<16xf32> to vector<16x1xf32>
    %108 = vector.broadcast %107 : vector<16x1xf32> to vector<16x16xf32>
    %109 = arith.subf %105, %108 : vector<16x16xf32>
    %110 = math.exp %109 : vector<16x16xf32>
    %cst_33 = arith.constant dense<0.000000e+00> : vector<16xf32>
    %111 = vector.multi_reduction <add>, %110, %cst_33 [1] : vector<16x16xf32> to vector<16xf32>
    %112 = vector.shape_cast %111 : vector<16xf32> to vector<16x1xf32>
    %113 = tpu.reciprocal %112 {approx = true} : vector<16x1xf32> -> vector<16x1xf32>
    %114 = vector.broadcast %113 : vector<16x1xf32> to vector<16x16xf32>
    %115 = arith.mulf %110, %114 : vector<16x16xf32>
    %116 = arith.truncf %115 : vector<16x16xf32> to vector<16x16xbf16>
    %cst_34 = arith.constant dense<0.000000e+00> : vector<16x32xf32>
    %117 = tpu.matmul %116, %102, %cst_34 {dimension_numbers = #tpu.dot_dimension_numbers<[1], [0], [0], [1], [0, 0, 1, 1], [], []>} : vector<16x16xbf16>, vector<16x32xbf16>, vector<16x32xf32> -> vector<16x32xf32>
    %118 = arith.truncf %117 : vector<16x32xf32> to vector<16x32xbf16>
    %119 = arith.index_cast %45 : i32 to index
    %c64_35 = arith.constant 64 : index
    %120 = vector.load %arg14[%119, %c64_35] : memref<32x128xbf16, #tpu.memory_space<vmem>>, vector<16x32xbf16>
    tpu.vector_store %arg14[%119, %c64_35], %118 {strides = array<i32>} : memref<32x128xbf16, #tpu.memory_space<vmem>>, vector<16x32xbf16>,
    %121 = arith.index_cast %45 : i32 to index
    %c96 = arith.constant 96 : index
    %122 = vector.load %arg13[%121, %c96] : memref<32x384xbf16, #tpu.memory_space<vmem>>, vector<16x32xbf16>
    %123 = arith.index_cast %45 : i32 to index
    %c224 = arith.constant 224 : index
    %124 = vector.load %arg13[%123, %c224] : memref<32x384xbf16, #tpu.memory_space<vmem>>, vector<16x32xbf16>
    %125 = arith.index_cast %45 : i32 to index
    %c352 = arith.constant 352 : index
    %126 = vector.load %arg13[%125, %c352] : memref<32x384xbf16, #tpu.memory_space<vmem>>, vector<16x32xbf16>
    %cst_36 = arith.constant dense<0.000000e+00> : vector<16x16xf32>
    %127 = tpu.matmul %122, %124, %cst_36 {dimension_numbers = #tpu.dot_dimension_numbers<[1], [1], [0], [0], [0, 0, 1, 0], [], []>} : vector<16x32xbf16>, vector<16x32xbf16>, vector<16x16xf32> -> vector<16x16xf32>
    %128 = vector.broadcast %48 : vector<1x16xf32> to vector<16x16xf32>
    %129 = arith.addf %127, %128 : vector<16x16xf32>
    %cst_37 = arith.constant dense<0xFF800000> : vector<16xf32>
    %130 = vector.multi_reduction <maximumf>, %129, %cst_37 [1] : vector<16x16xf32> to vector<16xf32>
    %131 = vector.shape_cast %130 : vector<16xf32> to vector<16x1xf32>
    %132 = vector.broadcast %131 : vector<16x1xf32> to vector<16x16xf32>
    %133 = arith.subf %129, %132 : vector<16x16xf32>
    %134 = math.exp %133 : vector<16x16xf32>
    %cst_38 = arith.constant dense<0.000000e+00> : vector<16xf32>
    %135 = vector.multi_reduction <add>, %134, %cst_38 [1] : vector<16x16xf32> to vector<16xf32>
    %136 = vector.shape_cast %135 : vector<16xf32> to vector<16x1xf32>
    %137 = tpu.reciprocal %136 {approx = true} : vector<16x1xf32> -> vector<16x1xf32>
    %138 = vector.broadcast %137 : vector<16x1xf32> to vector<16x16xf32>
    %139 = arith.mulf %134, %138 : vector<16x16xf32>
    %140 = arith.truncf %139 : vector<16x16xf32> to vector<16x16xbf16>
    %cst_39 = arith.constant dense<0.000000e+00> : vector<16x32xf32>
    %141 = tpu.matmul %140, %126, %cst_39 {dimension_numbers = #tpu.dot_dimension_numbers<[1], [0], [0], [1], [0, 0, 1, 1], [], []>} : vector<16x16xbf16>, vector<16x32xbf16>, vector<16x32xf32> -> vector<16x32xf32>
    %142 = arith.truncf %141 : vector<16x32xf32> to vector<16x32xbf16>
    %143 = arith.index_cast %45 : i32 to index
    %c96_40 = arith.constant 96 : index
    %144 = vector.load %arg14[%143, %c96_40] : memref<32x128xbf16, #tpu.memory_space<vmem>>, vector<16x32xbf16>
    tpu.vector_store %arg14[%143, %c96_40], %142 {strides = array<i32>} : memref<32x128xbf16, #tpu.memory_space<vmem>>, vector<16x32xbf16>,
    %c1_i32_41 = arith.constant 1 : i32
    %c16_i32_42 = arith.constant 16 : i32
    %145 = arith.muli %c1_i32_41, %c16_i32_42 : i32
    %146 = tpu.assume_multiple %145, 16 : i32
    %147 = arith.index_cast %c1_i32_41 : i32 to index
    %c0_43 = arith.constant 0 : index
    %c0_44 = arith.constant 0 : index
    %148 = vector.load %arg4[%147, %c0_43, %c0_44] : memref<2x1x16xf32, #tpu.memory_space<vmem>>, vector<1x1x16xf32>
    %149 = vector.shape_cast %148 : vector<1x1x16xf32> to vector<1x16xf32>
    %150 = arith.index_cast %146 : i32 to index
    %c0_45 = arith.constant 0 : index
    %151 = vector.load %arg13[%150, %c0_45] : memref<32x384xbf16, #tpu.memory_space<vmem>>, vector<16x32xbf16>
    %152 = arith.index_cast %146 : i32 to index
    %c128_46 = arith.constant 128 : index
    %153 = vector.load %arg13[%152, %c128_46] : memref<32x384xbf16, #tpu.memory_space<vmem>>, vector<16x32xbf16>
    %154 = arith.index_cast %146 : i32 to index
    %c256_47 = arith.constant 256 : index
    %155 = vector.load %arg13[%154, %c256_47] : memref<32x384xbf16, #tpu.memory_space<vmem>>, vector<16x32xbf16>
    %cst_48 = arith.constant dense<0.000000e+00> : vector<16x16xf32>
    %156 = tpu.matmul %151, %153, %cst_48 {dimension_numbers = #tpu.dot_dimension_numbers<[1], [1], [0], [0], [0, 0, 1, 0], [], []>} : vector<16x32xbf16>, vector<16x32xbf16>, vector<16x16xf32> -> vector<16x16xf32>
    %157 = vector.broadcast %149 : vector<1x16xf32> to vector<16x16xf32>
    %158 = arith.addf %156, %157 : vector<16x16xf32>
    %cst_49 = arith.constant dense<0xFF800000> : vector<16xf32>
    %159 = vector.multi_reduction <maximumf>, %158, %cst_49 [1] : vector<16x16xf32> to vector<16xf32>
    %160 = vector.shape_cast %159 : vector<16xf32> to vector<16x1xf32>
    %161 = vector.broadcast %160 : vector<16x1xf32> to vector<16x16xf32>
    %162 = arith.subf %158, %161 : vector<16x16xf32>
    %163 = math.exp %162 : vector<16x16xf32>
    %cst_50 = arith.constant dense<0.000000e+00> : vector<16xf32>
    %164 = vector.multi_reduction <add>, %163, %cst_50 [1] : vector<16x16xf32> to vector<16xf32>
    %165 = vector.shape_cast %164 : vector<16xf32> to vector<16x1xf32>
    %166 = tpu.reciprocal %165 {approx = true} : vector<16x1xf32> -> vector<16x1xf32>
    %167 = vector.broadcast %166 : vector<16x1xf32> to vector<16x16xf32>
    %168 = arith.mulf %163, %167 : vector<16x16xf32>
    %169 = arith.truncf %168 : vector<16x16xf32> to vector<16x16xbf16>
    %cst_51 = arith.constant dense<0.000000e+00> : vector<16x32xf32>
    %170 = tpu.matmul %169, %155, %cst_51 {dimension_numbers = #tpu.dot_dimension_numbers<[1], [0], [0], [1], [0, 0, 1, 1], [], []>} : vector<16x16xbf16>, vector<16x32xbf16>, vector<16x32xf32> -> vector<16x32xf32>
    %171 = arith.truncf %170 : vector<16x32xf32> to vector<16x32xbf16>
    %172 = arith.index_cast %146 : i32 to index
    %c0_52 = arith.constant 0 : index
    %173 = vector.load %arg14[%172, %c0_52] : memref<32x128xbf16, #tpu.memory_space<vmem>>, vector<16x32xbf16>
    tpu.vector_store %arg14[%172, %c0_52], %171 {strides = array<i32>} : memref<32x128xbf16, #tpu.memory_space<vmem>>, vector<16x32xbf16>,
    %174 = arith.index_cast %146 : i32 to index
    %c32_53 = arith.constant 32 : index
    %175 = vector.load %arg13[%174, %c32_53] : memref<32x384xbf16, #tpu.memory_space<vmem>>, vector<16x32xbf16>
    %176 = arith.index_cast %146 : i32 to index
    %c160_54 = arith.constant 160 : index
    %177 = vector.load %arg13[%176, %c160_54] : memref<32x384xbf16, #tpu.memory_space<vmem>>, vector<16x32xbf16>
    %178 = arith.index_cast %146 : i32 to index
    %c288_55 = arith.constant 288 : index
    %179 = vector.load %arg13[%178, %c288_55] : memref<32x384xbf16, #tpu.memory_space<vmem>>, vector<16x32xbf16>
    %cst_56 = arith.constant dense<0.000000e+00> : vector<16x16xf32>
    %180 = tpu.matmul %175, %177, %cst_56 {dimension_numbers = #tpu.dot_dimension_numbers<[1], [1], [0], [0], [0, 0, 1, 0], [], []>} : vector<16x32xbf16>, vector<16x32xbf16>, vector<16x16xf32> -> vector<16x16xf32>
    %181 = vector.broadcast %149 : vector<1x16xf32> to vector<16x16xf32>
    %182 = arith.addf %180, %181 : vector<16x16xf32>
    %cst_57 = arith.constant dense<0xFF800000> : vector<16xf32>
    %183 = vector.multi_reduction <maximumf>, %182, %cst_57 [1] : vector<16x16xf32> to vector<16xf32>
    %184 = vector.shape_cast %183 : vector<16xf32> to vector<16x1xf32>
    %185 = vector.broadcast %184 : vector<16x1xf32> to vector<16x16xf32>
    %186 = arith.subf %182, %185 : vector<16x16xf32>
    %187 = math.exp %186 : vector<16x16xf32>
    %cst_58 = arith.constant dense<0.000000e+00> : vector<16xf32>
    %188 = vector.multi_reduction <add>, %187, %cst_58 [1] : vector<16x16xf32> to vector<16xf32>
    %189 = vector.shape_cast %188 : vector<16xf32> to vector<16x1xf32>
    %190 = tpu.reciprocal %189 {approx = true} : vector<16x1xf32> -> vector<16x1xf32>
    %191 = vector.broadcast %190 : vector<16x1xf32> to vector<16x16xf32>
    %192 = arith.mulf %187, %191 : vector<16x16xf32>
    %193 = arith.truncf %192 : vector<16x16xf32> to vector<16x16xbf16>
    %cst_59 = arith.constant dense<0.000000e+00> : vector<16x32xf32>
    %194 = tpu.matmul %193, %179, %cst_59 {dimension_numbers = #tpu.dot_dimension_numbers<[1], [0], [0], [1], [0, 0, 1, 1], [], []>} : vector<16x16xbf16>, vector<16x32xbf16>, vector<16x32xf32> -> vector<16x32xf32>
    %195 = arith.truncf %194 : vector<16x32xf32> to vector<16x32xbf16>
    %196 = arith.index_cast %146 : i32 to index
    %c32_60 = arith.constant 32 : index
    %197 = vector.load %arg14[%196, %c32_60] : memref<32x128xbf16, #tpu.memory_space<vmem>>, vector<16x32xbf16>
    tpu.vector_store %arg14[%196, %c32_60], %195 {strides = array<i32>} : memref<32x128xbf16, #tpu.memory_space<vmem>>, vector<16x32xbf16>,
    %198 = arith.index_cast %146 : i32 to index
    %c64_61 = arith.constant 64 : index
    %199 = vector.load %arg13[%198, %c64_61] : memref<32x384xbf16, #tpu.memory_space<vmem>>, vector<16x32xbf16>
    %200 = arith.index_cast %146 : i32 to index
    %c192_62 = arith.constant 192 : index
    %201 = vector.load %arg13[%200, %c192_62] : memref<32x384xbf16, #tpu.memory_space<vmem>>, vector<16x32xbf16>
    %202 = arith.index_cast %146 : i32 to index
    %c320_63 = arith.constant 320 : index
    %203 = vector.load %arg13[%202, %c320_63] : memref<32x384xbf16, #tpu.memory_space<vmem>>, vector<16x32xbf16>
    %cst_64 = arith.constant dense<0.000000e+00> : vector<16x16xf32>
    %204 = tpu.matmul %199, %201, %cst_64 {dimension_numbers = #tpu.dot_dimension_numbers<[1], [1], [0], [0], [0, 0, 1, 0], [], []>} : vector<16x32xbf16>, vector<16x32xbf16>, vector<16x16xf32> -> vector<16x16xf32>
    %205 = vector.broadcast %149 : vector<1x16xf32> to vector<16x16xf32>
    %206 = arith.addf %204, %205 : vector<16x16xf32>
    %cst_65 = arith.constant dense<0xFF800000> : vector<16xf32>
    %207 = vector.multi_reduction <maximumf>, %206, %cst_65 [1] : vector<16x16xf32> to vector<16xf32>
    %208 = vector.shape_cast %207 : vector<16xf32> to vector<16x1xf32>
    %209 = vector.broadcast %208 : vector<16x1xf32> to vector<16x16xf32>
    %210 = arith.subf %206, %209 : vector<16x16xf32>
    %211 = math.exp %210 : vector<16x16xf32>
    %cst_66 = arith.constant dense<0.000000e+00> : vector<16xf32>
    %212 = vector.multi_reduction <add>, %211, %cst_66 [1] : vector<16x16xf32> to vector<16xf32>
    %213 = vector.shape_cast %212 : vector<16xf32> to vector<16x1xf32>
    %214 = tpu.reciprocal %213 {approx = true} : vector<16x1xf32> -> vector<16x1xf32>
    %215 = vector.broadcast %214 : vector<16x1xf32> to vector<16x16xf32>
    %216 = arith.mulf %211, %215 : vector<16x16xf32>
    %217 = arith.truncf %216 : vector<16x16xf32> to vector<16x16xbf16>
    %cst_67 = arith.constant dense<0.000000e+00> : vector<16x32xf32>
    %218 = tpu.matmul %217, %203, %cst_67 {dimension_numbers = #tpu.dot_dimension_numbers<[1], [0], [0], [1], [0, 0, 1, 1], [], []>} : vector<16x16xbf16>, vector<16x32xbf16>, vector<16x32xf32> -> vector<16x32xf32>
    %219 = arith.truncf %218 : vector<16x32xf32> to vector<16x32xbf16>
    %220 = arith.index_cast %146 : i32 to index
    %c64_68 = arith.constant 64 : index
    %221 = vector.load %arg14[%220, %c64_68] : memref<32x128xbf16, #tpu.memory_space<vmem>>, vector<16x32xbf16>
    tpu.vector_store %arg14[%220, %c64_68], %219 {strides = array<i32>} : memref<32x128xbf16, #tpu.memory_space<vmem>>, vector<16x32xbf16>,
    %222 = arith.index_cast %146 : i32 to index
    %c96_69 = arith.constant 96 : index
    %223 = vector.load %arg13[%222, %c96_69] : memref<32x384xbf16, #tpu.memory_space<vmem>>, vector<16x32xbf16>
    %224 = arith.index_cast %146 : i32 to index
    %c224_70 = arith.constant 224 : index
    %225 = vector.load %arg13[%224, %c224_70] : memref<32x384xbf16, #tpu.memory_space<vmem>>, vector<16x32xbf16>
    %226 = arith.index_cast %146 : i32 to index
    %c352_71 = arith.constant 352 : index
    %227 = vector.load %arg13[%226, %c352_71] : memref<32x384xbf16, #tpu.memory_space<vmem>>, vector<16x32xbf16>
    %cst_72 = arith.constant dense<0.000000e+00> : vector<16x16xf32>
    %228 = tpu.matmul %223, %225, %cst_72 {dimension_numbers = #tpu.dot_dimension_numbers<[1], [1], [0], [0], [0, 0, 1, 0], [], []>} : vector<16x32xbf16>, vector<16x32xbf16>, vector<16x16xf32> -> vector<16x16xf32>
    %229 = vector.broadcast %149 : vector<1x16xf32> to vector<16x16xf32>
    %230 = arith.addf %228, %229 : vector<16x16xf32>
    %cst_73 = arith.constant dense<0xFF800000> : vector<16xf32>
    %231 = vector.multi_reduction <maximumf>, %230, %cst_73 [1] : vector<16x16xf32> to vector<16xf32>
    %232 = vector.shape_cast %231 : vector<16xf32> to vector<16x1xf32>
    %233 = vector.broadcast %232 : vector<16x1xf32> to vector<16x16xf32>
    %234 = arith.subf %230, %233 : vector<16x16xf32>
    %235 = math.exp %234 : vector<16x16xf32>
    %cst_74 = arith.constant dense<0.000000e+00> : vector<16xf32>
    %236 = vector.multi_reduction <add>, %235, %cst_74 [1] : vector<16x16xf32> to vector<16xf32>
    %237 = vector.shape_cast %236 : vector<16xf32> to vector<16x1xf32>
    %238 = tpu.reciprocal %237 {approx = true} : vector<16x1xf32> -> vector<16x1xf32>
    %239 = vector.broadcast %238 : vector<16x1xf32> to vector<16x16xf32>
    %240 = arith.mulf %235, %239 : vector<16x16xf32>
    %241 = arith.truncf %240 : vector<16x16xf32> to vector<16x16xbf16>
    %cst_75 = arith.constant dense<0.000000e+00> : vector<16x32xf32>
    %242 = tpu.matmul %241, %227, %cst_75 {dimension_numbers = #tpu.dot_dimension_numbers<[1], [0], [0], [1], [0, 0, 1, 1], [], []>} : vector<16x16xbf16>, vector<16x32xbf16>, vector<16x32xf32> -> vector<16x32xf32>
    %243 = arith.truncf %242 : vector<16x32xf32> to vector<16x32xbf16>
    %244 = arith.index_cast %146 : i32 to index
    %c96_76 = arith.constant 96 : index
    %245 = vector.load %arg14[%244, %c96_76] : memref<32x128xbf16, #tpu.memory_space<vmem>>, vector<16x32xbf16>
    tpu.vector_store %arg14[%244, %c96_76], %243 {strides = array<i32>} : memref<32x128xbf16, #tpu.memory_space<vmem>>, vector<16x32xbf16>,
    %c2_i32 = arith.constant 2 : i32
    %c0_77 = arith.constant 0 : index
    %c0_78 = arith.constant 0 : index
    %c0_79 = arith.constant 0 : index
    %246 = vector.load %arg10[%c0_77, %c0_78, %c0_79] : memref<1x1x512xf32, #tpu.memory_space<vmem>>, vector<1x1x128xf32>
    %247 = vector.shape_cast %246 : vector<1x1x128xf32> to vector<1x128xf32>
    %c0_80 = arith.constant 0 : index
    %c0_81 = arith.constant 0 : index
    %248 = vector.load %arg14[%c0_80, %c0_81] : memref<32x128xbf16, #tpu.memory_space<vmem>>, vector<32x128xbf16>
    %c0_82 = arith.constant 0 : index
    %c0_83 = arith.constant 0 : index
    %c0_84 = arith.constant 0 : index
    %249 = vector.load %arg7[%c0_82, %c0_83, %c0_84] : memref<1x128x128xbf16, #tpu.memory_space<vmem>>, vector<1x128x128xbf16>
    %250 = vector.shape_cast %249 : vector<1x128x128xbf16> to vector<128x128xbf16>
    %cst_85 = arith.constant dense<0.000000e+00> : vector<32x128xf32>
    %251 = tpu.matmul %248, %250, %cst_85 {dimension_numbers = #tpu.dot_dimension_numbers<[1], [0], [0], [1], [0, 0, 1, 1], [], []>} : vector<32x128xbf16>, vector<128x128xbf16>, vector<32x128xf32> -> vector<32x128xf32>
    %252 = arith.addf %3, %251 : vector<32x128xf32>
    %253 = vector.broadcast %247 : vector<1x128xf32> to vector<32x128xf32>
    %254 = arith.addf %252, %253 : vector<32x128xf32>
    %c4_i32_86 = arith.constant 4 : i32
    %255 = arith.muli %c4_i32_86, %arg1 : i32
    %c2_i32_87 = arith.constant 2 : i32
    %256 = arith.addi %255, %c2_i32_87 : i32
    %257 = arith.index_cast %256 : i32 to index
    %258 = memref.load %arg2[%257] : memref<10xf32, #tpu.memory_space<smem>>
    %c4_i32_88 = arith.constant 4 : i32
    %259 = arith.muli %c4_i32_88, %arg1 : i32
    %c3_i32 = arith.constant 3 : i32
    %260 = arith.addi %259, %c3_i32 : i32
    %261 = arith.index_cast %260 : i32 to index
    %262 = memref.load %arg2[%261] : memref<10xf32, #tpu.memory_space<smem>>
    %cst_89 = arith.constant dense<0.000000e+00> : vector<32xf32>
    %263 = vector.multi_reduction <add>, %254, %cst_89 [1] : vector<32x128xf32> to vector<32xf32>
    %264 = vector.shape_cast %263 : vector<32xf32> to vector<32x1xf32>
    %cst_90 = arith.constant 1.280000e+02 : f32
    %265 = vector.broadcast %cst_90 : f32 to vector<32x1xf32>
    %266 = arith.divf %264, %265 : vector<32x1xf32>
    %267 = vector.broadcast %266 : vector<32x1xf32> to vector<32x128xf32>
    %268 = arith.subf %254, %267 : vector<32x128xf32>
    %269 = arith.mulf %268, %268 : vector<32x128xf32>
    %cst_91 = arith.constant dense<0.000000e+00> : vector<32xf32>
    %270 = vector.multi_reduction <add>, %269, %cst_91 [1] : vector<32x128xf32> to vector<32xf32>
    %271 = vector.shape_cast %270 : vector<32xf32> to vector<32x1xf32>
    %cst_92 = arith.constant 1.270000e+02 : f32
    %272 = vector.broadcast %cst_92 : f32 to vector<32x1xf32>
    %273 = arith.divf %271, %272 : vector<32x1xf32>
    %274 = vector.broadcast %266 : vector<32x1xf32> to vector<32x128xf32>
    %275 = arith.subf %254, %274 : vector<32x128xf32>
    %276 = vector.broadcast %258 : f32 to vector<32x128xf32>
    %277 = arith.mulf %276, %275 : vector<32x128xf32>
    %278 = math.sqrt %273 : vector<32x1xf32>
    %cst_93 = arith.constant 9.99999997E-7 : f32
    %279 = vector.broadcast %cst_93 : f32 to vector<32x1xf32>
    %280 = arith.addf %278, %279 : vector<32x1xf32>
    %281 = vector.broadcast %280 : vector<32x1xf32> to vector<32x128xf32>
    %282 = arith.divf %277, %281 : vector<32x128xf32>
    %283 = vector.broadcast %262 : f32 to vector<32x128xf32>
    %284 = arith.addf %282, %283 : vector<32x128xf32>
    %285 = arith.truncf %284 : vector<32x128xf32> to vector<32x128xbf16>
    %c0_94 = arith.constant 0 : index
    %c0_95 = arith.constant 0 : index
    %c128_96 = arith.constant 128 : index
    %286 = vector.load %arg10[%c0_94, %c0_95, %c128_96] : memref<1x1x512xf32, #tpu.memory_space<vmem>>, vector<1x1x256xf32>
    %287 = vector.shape_cast %286 : vector<1x1x256xf32> to vector<1x256xf32>
    %c0_97 = arith.constant 0 : index
    %c0_98 = arith.constant 0 : index
    %c384 = arith.constant 384 : index
    %288 = vector.load %arg10[%c0_97, %c0_98, %c384] : memref<1x1x512xf32, #tpu.memory_space<vmem>>, vector<1x1x128xf32>
    %289 = vector.shape_cast %288 : vector<1x1x128xf32> to vector<1x128xf32>
    %c0_99 = arith.constant 0 : index
    %c0_100 = arith.constant 0 : index
    %c0_101 = arith.constant 0 : index
    %290 = vector.load %arg8[%c0_99, %c0_100, %c0_101] : memref<1x128x256xbf16, #tpu.memory_space<vmem>>, vector<1x128x256xbf16>
    %291 = vector.shape_cast %290 : vector<1x128x256xbf16> to vector<128x256xbf16>
    %cst_102 = arith.constant dense<0.000000e+00> : vector<32x256xf32>
    %292 = tpu.matmul %285, %291, %cst_102 {dimension_numbers = #tpu.dot_dimension_numbers<[1], [0], [0], [1], [0, 0, 1, 1], [], []>} : vector<32x128xbf16>, vector<128x256xbf16>, vector<32x256xf32> -> vector<32x256xf32>
    %293 = vector.broadcast %287 : vector<1x256xf32> to vector<32x256xf32>
    %294 = arith.addf %292, %293 : vector<32x256xf32>
    %cst_103 = arith.constant 0.000000e+00 : f32
    %295 = vector.broadcast %cst_103 : f32 to vector<32x256xf32>
    %296 = arith.maximumf %294, %295 : vector<32x256xf32>
    %297 = arith.truncf %296 : vector<32x256xf32> to vector<32x256xbf16>
    %c0_104 = arith.constant 0 : index
    %c0_105 = arith.constant 0 : index
    %c0_106 = arith.constant 0 : index
    %298 = vector.load %arg9[%c0_104, %c0_105, %c0_106] : memref<1x256x128xbf16, #tpu.memory_space<vmem>>, vector<1x256x128xbf16>
    %299 = vector.shape_cast %298 : vector<1x256x128xbf16> to vector<256x128xbf16>
    %cst_107 = arith.constant dense<0.000000e+00> : vector<32x128xf32>
    %300 = tpu.matmul %297, %299, %cst_107 {dimension_numbers = #tpu.dot_dimension_numbers<[1], [0], [0], [1], [0, 0, 1, 1], [], []>} : vector<32x256xbf16>, vector<256x128xbf16>, vector<32x128xf32> -> vector<32x128xf32>
    %301 = vector.broadcast %289 : vector<1x128xf32> to vector<32x128xf32>
    %302 = arith.addf %300, %301 : vector<32x128xf32>
    %303 = arith.addf %254, %302 : vector<32x128xf32>
    %c0_108 = arith.constant 0 : index
    %c0_109 = arith.constant 0 : index
    %304 = vector.load %arg12[%c0_108, %c0_109] : memref<32x128xf32, #tpu.memory_space<vmem>>, vector<32x128xf32>
    tpu.vector_store %arg12[%c0_108, %c0_109], %303 {strides = array<i32>} : memref<32x128xf32, #tpu.memory_space<vmem>>, vector<32x128xf32>,
    %c1_i32_110 = arith.constant 1 : i32
    %305 = arith.cmpi eq, %arg1, %c1_i32_110 : i32
    %306 = arith.extui %305 : i1 to i32
    %c0_i32_111 = arith.constant 0 : i32
    %307 = arith.cmpi ne, %306, %c0_i32_111 : i32
    scf.if %307 {
      %c8 = arith.constant 8 : index
      %308 = memref.load %arg2[%c8] : memref<10xf32, #tpu.memory_space<smem>>
      %c9 = arith.constant 9 : index
      %309 = memref.load %arg2[%c9] : memref<10xf32, #tpu.memory_space<smem>>
      %cst_112 = arith.constant dense<0.000000e+00> : vector<32xf32>
      %310 = vector.multi_reduction <add>, %303, %cst_112 [1] : vector<32x128xf32> to vector<32xf32>
      %311 = vector.shape_cast %310 : vector<32xf32> to vector<32x1xf32>
      %cst_113 = arith.constant 1.280000e+02 : f32
      %312 = vector.broadcast %cst_113 : f32 to vector<32x1xf32>
      %313 = arith.divf %311, %312 : vector<32x1xf32>
      %314 = vector.broadcast %313 : vector<32x1xf32> to vector<32x128xf32>
      %315 = arith.subf %303, %314 : vector<32x128xf32>
      %316 = arith.mulf %315, %315 : vector<32x128xf32>
      %cst_114 = arith.constant dense<0.000000e+00> : vector<32xf32>
      %317 = vector.multi_reduction <add>, %316, %cst_114 [1] : vector<32x128xf32> to vector<32xf32>
      %318 = vector.shape_cast %317 : vector<32xf32> to vector<32x1xf32>
      %cst_115 = arith.constant 1.270000e+02 : f32
      %319 = vector.broadcast %cst_115 : f32 to vector<32x1xf32>
      %320 = arith.divf %318, %319 : vector<32x1xf32>
      %321 = vector.broadcast %313 : vector<32x1xf32> to vector<32x128xf32>
      %322 = arith.subf %303, %321 : vector<32x128xf32>
      %323 = vector.broadcast %308 : f32 to vector<32x128xf32>
      %324 = arith.mulf %323, %322 : vector<32x128xf32>
      %325 = math.sqrt %320 : vector<32x1xf32>
      %cst_116 = arith.constant 9.99999997E-7 : f32
      %326 = vector.broadcast %cst_116 : f32 to vector<32x1xf32>
      %327 = arith.addf %325, %326 : vector<32x1xf32>
      %328 = vector.broadcast %327 : vector<32x1xf32> to vector<32x128xf32>
      %329 = arith.divf %324, %328 : vector<32x128xf32>
      %330 = vector.broadcast %309 : f32 to vector<32x128xf32>
      %331 = arith.addf %329, %330 : vector<32x128xf32>
      %c0_117 = arith.constant 0 : index
      %c0_118 = arith.constant 0 : index
      %332 = vector.load %arg11[%c0_117, %c0_118] : memref<32x128xf32, #tpu.memory_space<vmem>>, vector<32x128xf32>
      tpu.vector_store %arg11[%c0_117, %c0_118], %331 {strides = array<i32>} : memref<32x128xf32, #tpu.memory_space<vmem>>, vector<32x128xf32>,
    } else {
    }
    return
  }
  func.func @transform_0(%arg0: i32, %arg1: i32) -> i32 {
    %c0_i32 = arith.constant 0 : i32
    %c0_i32_0 = arith.constant 0 : i32
    return %c0_i32 : i32
  }
  func.func @transform_1(%arg0: i32, %arg1: i32) -> (i32, i32) {
    %c0_i32 = arith.constant 0 : i32
    %c0_i32_0 = arith.constant 0 : i32
    return %arg0, %c0_i32 : i32, i32
  }
  func.func @transform_2(%arg0: i32, %arg1: i32) -> (i32, i32, i32) {
    %c0_i32 = arith.constant 0 : i32
    %c0_i32_0 = arith.constant 0 : i32
    %c0_i32_1 = arith.constant 0 : i32
    return %arg0, %c0_i32, %c0_i32_0 : i32, i32, i32
  }
  func.func @transform_3(%arg0: i32, %arg1: i32) -> (i32, i32, i32) {
    %c0_i32 = arith.constant 0 : i32
    %c0_i32_0 = arith.constant 0 : i32
    %c0_i32_1 = arith.constant 0 : i32
    return %arg1, %c0_i32, %c0_i32_0 : i32, i32, i32
  }
  func.func @transform_4(%arg0: i32, %arg1: i32) -> (i32, i32, i32) {
    %c0_i32 = arith.constant 0 : i32
    %c0_i32_0 = arith.constant 0 : i32
    %c0_i32_1 = arith.constant 0 : i32
    return %arg1, %c0_i32, %c0_i32_0 : i32, i32, i32
  }
  func.func @transform_5(%arg0: i32, %arg1: i32) -> (i32, i32, i32) {
    %c0_i32 = arith.constant 0 : i32
    %c0_i32_0 = arith.constant 0 : i32
    %c0_i32_1 = arith.constant 0 : i32
    return %arg1, %c0_i32, %c0_i32_0 : i32, i32, i32
  }
  func.func @transform_6(%arg0: i32, %arg1: i32) -> (i32, i32, i32) {
    %c0_i32 = arith.constant 0 : i32
    %c0_i32_0 = arith.constant 0 : i32
    %c0_i32_1 = arith.constant 0 : i32
    return %arg1, %c0_i32, %c0_i32_0 : i32, i32, i32
  }
  func.func @transform_7(%arg0: i32, %arg1: i32) -> (i32, i32, i32) {
    %c0_i32 = arith.constant 0 : i32
    %c0_i32_0 = arith.constant 0 : i32
    %c0_i32_1 = arith.constant 0 : i32
    return %arg1, %c0_i32, %c0_i32_0 : i32, i32, i32
  }
  func.func @transform_8(%arg0: i32, %arg1: i32) -> (i32, i32, i32) {
    %c0_i32 = arith.constant 0 : i32
    %c0_i32_0 = arith.constant 0 : i32
    %c0_i32_1 = arith.constant 0 : i32
    return %arg1, %c0_i32, %c0_i32_0 : i32, i32, i32
  }
  func.func @transform_9(%arg0: i32, %arg1: i32) -> (i32, i32) {
    %c0_i32 = arith.constant 0 : i32
    %c0_i32_0 = arith.constant 0 : i32
    return %arg0, %c0_i32 : i32, i32
  }
}

</mosaic_0001>

<llo_original>
// kernel: tpu_custom_call.1
$region0: #{tpu_custom_call.1}
  #allocation0 [shape = 'u32[]', space=smem, size = 0x4, offset = 0x4, fixed_abs, tag = 'smem constant byte address 0x4 - core index']
  #allocation1 [shape = 'u32[144,128]{1,0:T(1,128)}', space=vmem, size = 0x12000, scoped, tag = 'internal scratch']
  #allocation2 [shape = 'f32[32,128]{1,0:T(8,128)}', space=vmem, size = 0x4000, scoped, tag = 'scratch operand']
  #allocation3 [shape = 'bf16[32,384]{1,0:T(16,128)(2,1)}', space=vmem, size = 0x6000, scoped, tag = 'scratch operand']
  #allocation4 [shape = 'bf16[32,128]{1,0:T(16,128)(2,1)}', space=vmem, size = 0x2000, scoped, tag = 'scratch operand']
  %s0 = inlined_call_operand.hbm [shape: f32[10], index: 0, kind: input, shape index: {}]
  %s1 = inlined_call_operand.hbm [shape: f32[32,128], index: 1, kind: input, shape index: {}]
  %s2 = inlined_call_operand.hbm [shape: f32[2,1,16], index: 2, kind: input, shape index: {}]
  %s3 = inlined_call_operand.hbm [shape: bf16[2,128,384], index: 3, kind: input, shape index: {}]
  %s4 = inlined_call_operand.vmem [shape: f32[2,1,384], index: 4, kind: input, shape index: {}]
  %s5 = inlined_call_operand.hbm [shape: bf16[2,128,128], index: 5, kind: input, shape index: {}]
  %s6 = inlined_call_operand.hbm [shape: bf16[2,128,256], index: 6, kind: input, shape index: {}]
  %s7 = inlined_call_operand.hbm [shape: bf16[2,256,128], index: 7, kind: input, shape index: {}]
  %s8 = inlined_call_operand.vmem [shape: f32[2,1,512], index: 8, kind: input, shape index: {}]
  %s9 = inlined_call_operand.hbm [shape: f32[32,128], index: 9, kind: output, shape index: {}]
  %s10 = sld [smem:[#allocation0]]
  $region105: #{tpu_custom_call.1} parent=0
    _
  %s12 = ssub.s32 1, %s10
  %s13 = scalar_select 0, %s12, %s10
  $region1: #{tpu_custom_call.1} parent=0
    #allocation5 [shape = 'u8[512]{0}', space=smem, size = 0x200, scoped, tag = 'input window, operand 0, single buffered']
    #allocation6 [shape = 's32[2]{0}', space=sflag, size = 0x8, scoped, tag = 'scoped memory for tpu_custom_call.1']
    #allocation7 [shape = 's32[2]{0}', space=sflag, size = 0x8, scoped, tag = 'scoped memory for tpu_custom_call.1']
    #allocation8 [shape = 's32[2]{0}', space=sflag, size = 0x8, scoped, tag = 'scoped memory for tpu_custom_call.1']
    #allocation9 [shape = 'u8[16384]{0}', space=vmem, size = 0x4000, scoped, tag = 'input window, operand 1, single buffered']
    #allocation10 [shape = 'u8[1024]{0}', space=vmem, size = 0x400, scoped, tag = 'input window, operand 2, single buffered']
    #allocation11 [shape = 's32[1]{0}', space=sflag, size = 0x4, scoped, tag = 'scoped memory for tpu_custom_call.1']
    #allocation12 [shape = 'u8[196608]{0}', space=vmem, size = 0x30000, scoped, tag = 'input window, operand 3']
    #allocation13 [shape = 'u8[65536]{0}', space=vmem, size = 0x10000, scoped, tag = 'input window, operand 5']
    #allocation14 [shape = 'u8[131072]{0}', space=vmem, size = 0x20000, scoped, tag = 'input window, operand 6']
    #allocation15 [shape = 'u8[131072]{0}', space=vmem, size = 0x20000, scoped, tag = 'input window, operand 7']
    #allocation16 [shape = 'u8[16384]{0}', space=vmem, size = 0x4000, scoped, tag = 'output window, operand 0, single buffered']
    %14 = vsyncpa [#allocation8], 0
    %15 = vsyncpa [#allocation6], 0
    %16 = vsyncpa [#allocation11], 0
    %17 = vsyncpa [#allocation7], 0
    loop: start=0, step=1, limit=4
    $region2: #{tpu_custom_call.1} parent=1 // loop_pre_header
      _
    $region3: #{tpu_custom_call.1} parent=1 // loop_header
      %s19 = sphi 0, %s23
      %p20 = scmp.ge.s32.totalorder %s19, 4
      %s26 = sphi 0, %s38
      %s27 = sphi 0, %s34
      %s28 = sphi 0, %s26
      %s29 = sphi 0, %s27
      %s30 = sphi 0, %s28
      %s31 = sphi 0, %s29
      %s39 = sphi 0, %s39
      %s41 = sphi 0, %s39
      %s42 = sphi 0, %s41
      %s56 = sphi 0, %s42
      %s62 = sphi 0, %s64
      %s65 = sphi 0, %s62
      %s66 = sphi 0, %s65
      %s82 = sphi 0, %s66
      %s88 = sphi 0, %s90
      %s91 = sphi 0, %s88
      %s92 = sphi 0, %s91
      %s108 = sphi 0, %s92
      %s114 = sphi 0, %s116
      %s117 = sphi 0, %s114
      %s118 = sphi 0, %s117
      %s134 = sphi 0, %s118
      %s140 = sphi 0, %s142
      %s143 = sphi 0, %s140
      %s144 = sphi 0, %s143
      %s160 = sphi 0, %s144
      %s166 = sphi 0, %s168
      %s169 = sphi 0, %s166
      %s170 = sphi 0, %s169
      %s186 = sphi 0, %s170
      %s192 = sphi 0, %s194
      %s195 = sphi 0, %s192
      %s196 = sphi 0, %s195
      %s212 = sphi 0, %s196
      %s218 = sphi 0, %s220
      %s221 = sphi 0, %s218
      %s222 = sphi 0, %s221
      %s238 = sphi 0, %s222
      %s244 = sphi 0, %s246
      %s247 = sphi 0, %s244
      %s248 = sphi 0, %s247
      %s264 = sphi 0, %s248
      %s270 = sphi 0, %s272
      %s273 = sphi 0, %s270
      %s274 = sphi 0, %s273
      %s290 = sphi 0, %s274
    $region4: #{tpu_custom_call.1} parent=1 // loop_header_branch
      %22 = sbr.rel (%p20) target = $region8
    $region5: #{tpu_custom_call.1} parent=1 // loop_body
      %s24 = ssub.s32 %s19, 1
      %s25 = ssub.s32 %s19, 2
      %s32 = sadd.s32 1, %s27
      %p33 = scmp.ge.s32.totalorder %s32, 2
      %s34 = scalar_select %p33, 0, %s32
      %s35 = sadd.s32 1, %s26
      %s36 = scalar_select %p33, %s35, %s26
      %p37 = scmp.ge.s32.totalorder %s36, 1
      %s38 = scalar_select %p37, 0, %s36
      %s40 = sadd.s32 %s39, 1
      %p43 = scmp.eq.s32.totalorder %s19, 1
      %p44 = scmp.ne.s32.totalorder %s39, %s41
      %p45 = scmp.eq.s32.totalorder %s19, 0
      %p46 = por %p44, %p45
      %p47 = scmp.ne.s32.totalorder %s39, %s41
      %p48 = scmp.eq.s32.totalorder %s24, 1
      %p49 = por %p47, %p48
      %p50 = scmp.ne.s32.totalorder %s41, %s42
      %p51 = scmp.eq.s32.totalorder %s24, 0
      %p52 = por %p50, %p51
      %p53 = scmp.ne.s32.totalorder %s41, %s42
      %p54 = scmp.eq.s32.totalorder %s25, 1
      %p55 = por %p53, %p54
      %p57 = scmp.ne.s32.totalorder %s42, %s56
      %p58 = scmp.eq.s32.totalorder %s25, 0
      %p59 = por %p57, %p58
      %s60 = ssub.s32 %s26, %s38
      %p61 = scmp.eq.s32.totalorder %s60, 0
      %s63 = sadd.s32 %s62, 1
      %s64 = scalar_select %p61, %s62, %s63
      %p67 = pneg %p61
      %p68 = scmp.eq.s32.totalorder %s19, 1
      %p69 = por %p67, %p68
      %p70 = scmp.ne.s32.totalorder %s62, %s65
      %p71 = scmp.eq.s32.totalorder %s19, 0
      %p72 = por %p70, %p71
      %p73 = scmp.ne.s32.totalorder %s62, %s65
      %p74 = scmp.eq.s32.totalorder %s24, 1
      %p75 = por %p73, %p74
      %p76 = scmp.ne.s32.totalorder %s65, %s66
      %p77 = scmp.eq.s32.totalorder %s24, 0
      %p78 = por %p76, %p77
      %p79 = scmp.ne.s32.totalorder %s65, %s66
      %p80 = scmp.eq.s32.totalorder %s25, 1
      %p81 = por %p79, %p80
      %p83 = scmp.ne.s32.totalorder %s66, %s82
      %p84 = scmp.eq.s32.totalorder %s25, 0
      %p85 = por %p83, %p84
      %s86 = ssub.s32 %s26, %s38
      %p87 = scmp.eq.s32.totalorder %s86, 0
      %s89 = sadd.s32 %s88, 1
      %s90 = scalar_select %p87, %s88, %s89
      %p93 = pneg %p87
      %p94 = scmp.eq.s32.totalorder %s19, 1
      %p95 = por %p93, %p94
      %p96 = scmp.ne.s32.totalorder %s88, %s91
      %p97 = scmp.eq.s32.totalorder %s19, 0
      %p98 = por %p96, %p97
      %p99 = scmp.ne.s32.totalorder %s88, %s91
      %p100 = scmp.eq.s32.totalorder %s24, 1
      %p101 = por %p99, %p100
      %p102 = scmp.ne.s32.totalorder %s91, %s92
      %p103 = scmp.eq.s32.totalorder %s24, 0
      %p104 = por %p102, %p103
      %p105 = scmp.ne.s32.totalorder %s91, %s92
      %p106 = scmp.eq.s32.totalorder %s25, 1
      %p107 = por %p105, %p106
      %p109 = scmp.ne.s32.totalorder %s92, %s108
      %p110 = scmp.eq.s32.totalorder %s25, 0
      %p111 = por %p109, %p110
      %s112 = ssub.s32 %s27, %s34
      %p113 = scmp.eq.s32.totalorder %s112, 0
      %s115 = sadd.s32 %s114, 1
      %s116 = scalar_select %p113, %s114, %s115
      %p119 = pneg %p113
      %p120 = scmp.eq.s32.totalorder %s19, 1
      %p121 = por %p119, %p120
      %p122 = scmp.ne.s32.totalorder %s114, %s117
      %p123 = scmp.eq.s32.totalorder %s19, 0
      %p124 = por %p122, %p123
      %p125 = scmp.ne.s32.totalorder %s114, %s117
      %p126 = scmp.eq.s32.totalorder %s24, 1
      %p127 = por %p125, %p126
      %p128 = scmp.ne.s32.totalorder %s117, %s118
      %p129 = scmp.eq.s32.totalorder %s24, 0
      %p130 = por %p128, %p129
      %p131 = scmp.ne.s32.totalorder %s117, %s118
      %p132 = scmp.eq.s32.totalorder %s25, 1
      %p133 = por %p131, %p132
      %p135 = scmp.ne.s32.totalorder %s118, %s134
      %p136 = scmp.eq.s32.totalorder %s25, 0
      %p137 = por %p135, %p136
      %s138 = ssub.s32 %s27, %s34
      %p139 = scmp.eq.s32.totalorder %s138, 0
      %s141 = sadd.s32 %s140, 1
      %s142 = scalar_select %p139, %s140, %s141
      %p145 = pneg %p139
      %p146 = scmp.eq.s32.totalorder %s19, 1
      %p147 = por %p145, %p146
      %p148 = scmp.ne.s32.totalorder %s140, %s143
      %p149 = scmp.eq.s32.totalorder %s19, 0
      %p150 = por %p148, %p149
      %p151 = scmp.ne.s32.totalorder %s140, %s143
      %p152 = scmp.eq.s32.totalorder %s24, 1
      %p153 = por %p151, %p152
      %p154 = scmp.ne.s32.totalorder %s143, %s144
      %p155 = scmp.eq.s32.totalorder %s24, 0
      %p156 = por %p154, %p155
      %p157 = scmp.ne.s32.totalorder %s143, %s144
      %p158 = scmp.eq.s32.totalorder %s25, 1
      %p159 = por %p157, %p158
      %p161 = scmp.ne.s32.totalorder %s144, %s160
      %p162 = scmp.eq.s32.totalorder %s25, 0
      %p163 = por %p161, %p162
      %s164 = ssub.s32 %s27, %s34
      %p165 = scmp.eq.s32.totalorder %s164, 0
      %s167 = sadd.s32 %s166, 1
      %s168 = scalar_select %p165, %s166, %s167
      %p171 = pneg %p165
      %p172 = scmp.eq.s32.totalorder %s19, 1
      %p173 = por %p171, %p172
      %p174 = scmp.ne.s32.totalorder %s166, %s169
      %p175 = scmp.eq.s32.totalorder %s19, 0
      %p176 = por %p174, %p175
      %p177 = scmp.ne.s32.totalorder %s166, %s169
      %p178 = scmp.eq.s32.totalorder %s24, 1
      %p179 = por %p177, %p178
      %p180 = scmp.ne.s32.totalorder %s169, %s170
      %p181 = scmp.eq.s32.totalorder %s24, 0
      %p182 = por %p180, %p181
      %p183 = scmp.ne.s32.totalorder %s169, %s170
      %p184 = scmp.eq.s32.totalorder %s25, 1
      %p185 = por %p183, %p184
      %p187 = scmp.ne.s32.totalorder %s170, %s186
      %p188 = scmp.eq.s32.totalorder %s25, 0
      %p189 = por %p187, %p188
      %s190 = ssub.s32 %s27, %s34
      %p191 = scmp.eq.s32.totalorder %s190, 0
      %s193 = sadd.s32 %s192, 1
      %s194 = scalar_select %p191, %s192, %s193
      %p197 = pneg %p191
      %p198 = scmp.eq.s32.totalorder %s19, 1
      %p199 = por %p197, %p198
      %p200 = scmp.ne.s32.totalorder %s192, %s195
      %p201 = scmp.eq.s32.totalorder %s19, 0
      %p202 = por %p200, %p201
      %p203 = scmp.ne.s32.totalorder %s192, %s195
      %p204 = scmp.eq.s32.totalorder %s24, 1
      %p205 = por %p203, %p204
      %p206 = scmp.ne.s32.totalorder %s195, %s196
      %p207 = scmp.eq.s32.totalorder %s24, 0
      %p208 = por %p206, %p207
      %p209 = scmp.ne.s32.totalorder %s195, %s196
      %p210 = scmp.eq.s32.totalorder %s25, 1
      %p211 = por %p209, %p210
      %p213 = scmp.ne.s32.totalorder %s196, %s212
      %p214 = scmp.eq.s32.totalorder %s25, 0
      %p215 = por %p213, %p214
      %s216 = ssub.s32 %s27, %s34
      %p217 = scmp.eq.s32.totalorder %s216, 0
      %s219 = sadd.s32 %s218, 1
      %s220 = scalar_select %p217, %s218, %s219
      %p223 = pneg %p217
      %p224 = scmp.eq.s32.totalorder %s19, 1
      %p225 = por %p223, %p224
      %p226 = scmp.ne.s32.totalorder %s218, %s221
      %p227 = scmp.eq.s32.totalorder %s19, 0
      %p228 = por %p226, %p227
      %p229 = scmp.ne.s32.totalorder %s218, %s221
      %p230 = scmp.eq.s32.totalorder %s24, 1
      %p231 = por %p229, %p230
      %p232 = scmp.ne.s32.totalorder %s221, %s222
      %p233 = scmp.eq.s32.totalorder %s24, 0
      %p234 = por %p232, %p233
      %p235 = scmp.ne.s32.totalorder %s221, %s222
      %p236 = scmp.eq.s32.totalorder %s25, 1
      %p237 = por %p235, %p236
      %p239 = scmp.ne.s32.totalorder %s222, %s238
      %p240 = scmp.eq.s32.totalorder %s25, 0
      %p241 = por %p239, %p240
      %s242 = ssub.s32 %s27, %s34
      %p243 = scmp.eq.s32.totalorder %s242, 0
      %s245 = sadd.s32 %s244, 1
      %s246 = scalar_select %p243, %s244, %s245
      %p249 = pneg %p243
      %p250 = scmp.eq.s32.totalorder %s19, 1
      %p251 = por %p249, %p250
      %p252 = scmp.ne.s32.totalorder %s244, %s247
      %p253 = scmp.eq.s32.totalorder %s19, 0
      %p254 = por %p252, %p253
      %p255 = scmp.ne.s32.totalorder %s244, %s247
      %p256 = scmp.eq.s32.totalorder %s24, 1
      %p257 = por %p255, %p256
      %p258 = scmp.ne.s32.totalorder %s247, %s248
      %p259 = scmp.eq.s32.totalorder %s24, 0
      %p260 = por %p258, %p259
      %p261 = scmp.ne.s32.totalorder %s247, %s248
      %p262 = scmp.eq.s32.totalorder %s25, 1
      %p263 = por %p261, %p262
      %p265 = scmp.ne.s32.totalorder %s248, %s264
      %p266 = scmp.eq.s32.totalorder %s25, 0
      %p267 = por %p265, %p266
      %s268 = ssub.s32 %s26, %s38
      %p269 = scmp.eq.s32.totalorder %s268, 0
      %s271 = sadd.s32 %s270, 1
      %s272 = scalar_select %p269, %s270, %s271
      %p275 = pneg %p269
      %p276 = scmp.eq.s32.totalorder %s19, 1
      %p277 = por %p275, %p276
      %p278 = scmp.ne.s32.totalorder %s270, %s273
      %p279 = scmp.eq.s32.totalorder %s19, 0
      %p280 = por %p278, %p279
      %p281 = scmp.ne.s32.totalorder %s270, %s273
      %p282 = scmp.eq.s32.totalorder %s24, 1
      %p283 = por %p281, %p282
      %p284 = scmp.ne.s32.totalorder %s273, %s274
      %p285 = scmp.eq.s32.totalorder %s24, 0
      %p286 = por %p284, %p285
      %p287 = scmp.ne.s32.totalorder %s273, %s274
      %p288 = scmp.eq.s32.totalorder %s25, 1
      %p289 = por %p287, %p288
      %p291 = scmp.ne.s32.totalorder %s274, %s290
      %p292 = scmp.eq.s32.totalorder %s25, 0
      %p293 = por %p291, %p292
      %p294 = scmp.le.s32.totalorder 1, %s19
      %p295 = scmp.lt.s32.totalorder %s19, 3
      %p296 = pnand %p294, %p295
      %p297 = pneg %p296
      // Predicated region
      $region9: #{tpu_custom_call.1} parent=5 // pred_check
        _
      $region10: #{tpu_custom_call.1} parent=5 // pred_check_branch
        %299 = sbr.rel (%p296) target = $region12
      $region11: #{tpu_custom_call.1} parent=5 // pred_region
        %s300 = ssub.s32 %s19, 1
        // Predicated region
        $region13: #{tpu_custom_call.1} parent=11 // pred_check
          %p301 = pneg %p52
        $region14: #{tpu_custom_call.1} parent=11 // pred_check_branch
          %303 = sbr.rel (%p301) target = $region16
        $region15: #{tpu_custom_call.1} parent=11 // pred_region
          %s305 = ssub.s32 16, 16
          %306 = vsyncadd [#allocation8], %s305
          %309 = dma.hbm_to_smem %s0, 16, [#allocation5], [#allocation8]
        $region16: #{tpu_custom_call.1} parent=11 // pred_fallthru
          _
        // Predicated region
        $region17: #{tpu_custom_call.1} parent=11 // pred_check
          %p310 = pneg %p78
        $region18: #{tpu_custom_call.1} parent=11 // pred_check_branch
          %312 = sbr.rel (%p310) target = $region20
        $region19: #{tpu_custom_call.1} parent=11 // pred_region
          %s313 = smul.u32 4, %s28
          %s315 = ssub.s32 512, 512
          %316 = vsyncadd [#allocation6], %s315
          %s317 = smul.addr %s313, 128
          %s318 = scalar_lea.hbm %s1, %s317
          %s319 = sshll.u32 [#allocation9], 4
          %s320 = int_to_ptr.vmem [resolvable:$true] %s319
          %325 = dma.hbm_to_vmem [thread:$0]  %s318, 512, %s320, [#allocation6], 128, 128, 8
        $region20: #{tpu_custom_call.1} parent=11 // pred_fallthru
          _
        // Predicated region
        $region21: #{tpu_custom_call.1} parent=11 // pred_check
          %p326 = pneg %p104
        $region22: #{tpu_custom_call.1} parent=11 // pred_check_branch
          %328 = sbr.rel (%p326) target = $region24
        $region23: #{tpu_custom_call.1} parent=11 // pred_region
          %s329 = smul.u32 2, %s28
          %s331 = ssub.s32 32, 32
          %332 = vsyncadd [#allocation11], %s331
          %s333 = smul.addr %s329, 16
          %s334 = scalar_lea.hbm %s2, %s333
          %s335 = sshll.u32 [#allocation10], 4
          %s336 = int_to_ptr.vmem [resolvable:$true] %s335
          %341 = dma.hbm_to_vmem [thread:$0]  %s334, 32, %s336, [#allocation11], 16, 16, 1
        $region24: #{tpu_custom_call.1} parent=11 // pred_fallthru
          _
      $region12: #{tpu_custom_call.1} parent=5 // pred_fallthru
        _
      %p342 = scmp.lt.s32.totalorder %s19, 2
      // Predicated region
      $region25: #{tpu_custom_call.1} parent=5 // pred_check
        %p343 = pneg %p342
      $region26: #{tpu_custom_call.1} parent=5 // pred_check_branch
        %345 = sbr.rel (%p343) target = $region28
      $region27: #{tpu_custom_call.1} parent=5 // pred_region
        // Predicated region
        $region29: #{tpu_custom_call.1} parent=27 // pred_check
          %p346 = pneg %p124
        $region30: #{tpu_custom_call.1} parent=27 // pred_check_branch
          %348 = sbr.rel (%p346) target = $region32
        $region31: #{tpu_custom_call.1} parent=27 // pred_region
          %s349 = sand.u32 %s19, 1
          %s350 = scalar_lea.sflag [#allocation6], %s349
          %s351 = sand.u32 %s114, 1
          %s352 = smul.addr %s351, 192
          %s353 = scalar_lea.vmem [#allocation12], %s352
          %s355 = ssub.s32 3072, 3072
          %356 = vsyncadd %s350, %s355
          %s357 = smul.addr %s27, 48
          %s358 = smul.addr %s357, 64
          %s359 = scalar_lea.hbm %s3, %s358
          %s360 = sshll.u32 %s353, 4
          %s361 = int_to_ptr.vmem [resolvable:$true] %s360
          %366 = dma.hbm_to_vmem [thread:$0]  %s359, 3072, %s361, %s350, 192, 192, 12
        $region32: #{tpu_custom_call.1} parent=27 // pred_fallthru
          _
        // Predicated region
        $region33: #{tpu_custom_call.1} parent=27 // pred_check
          %p367 = pneg %p150
        $region34: #{tpu_custom_call.1} parent=27 // pred_check_branch
          %369 = sbr.rel (%p367) target = $region36
        $region35: #{tpu_custom_call.1} parent=27 // pred_region
          %p370 = scmp.lt.s32.totalorder %s27, 1
          %s371 = scalar_select %p370, %s27, 1
          %s372 = smul.addr %s371, 3
          %s373 = scalar_lea.vmem %s4, %s372
        $region36: #{tpu_custom_call.1} parent=27 // pred_fallthru
          _
        // Predicated region
        $region37: #{tpu_custom_call.1} parent=27 // pred_check
          %p374 = pneg %p176
        $region38: #{tpu_custom_call.1} parent=27 // pred_check_branch
          %376 = sbr.rel (%p374) target = $region40
        $region39: #{tpu_custom_call.1} parent=27 // pred_region
          %s377 = sand.u32 %s19, 1
          %s378 = scalar_lea.sflag [#allocation6], %s377
          %s379 = sand.u32 %s166, 1
          %s380 = smul.addr %s379, 64
          %s381 = scalar_lea.vmem [#allocation13], %s380
          %s383 = ssub.s32 1024, 1024
          %384 = vsyncadd %s378, %s383
          %s385 = smul.addr %s27, 16
          %s386 = smul.addr %s385, 64
          %s387 = scalar_lea.hbm %s5, %s386
          %s388 = sshll.u32 %s381, 4
          %s389 = int_to_ptr.vmem [resolvable:$true] %s388
          %394 = dma.hbm_to_vmem [thread:$0]  %s387, 1024, %s389, %s378, 64, 64, 4
        $region40: #{tpu_custom_call.1} parent=27 // pred_fallthru
          _
        // Predicated region
        $region41: #{tpu_custom_call.1} parent=27 // pred_check
          %p395 = pneg %p202
        $region42: #{tpu_custom_call.1} parent=27 // pred_check_branch
          %397 = sbr.rel (%p395) target = $region44
        $region43: #{tpu_custom_call.1} parent=27 // pred_region
          %s398 = sand.u32 %s19, 1
          %s399 = scalar_lea.sflag [#allocation6], %s398
          %s400 = sand.u32 %s192, 1
          %s401 = smul.addr %s400, 128
          %s402 = scalar_lea.vmem [#allocation14], %s401
          %s404 = ssub.s32 2048, 2048
          %405 = vsyncadd %s399, %s404
          %s406 = smul.addr %s27, 32
          %s407 = smul.addr %s406, 64
          %s408 = scalar_lea.hbm %s6, %s407
          %s409 = sshll.u32 %s402, 4
          %s410 = int_to_ptr.vmem [resolvable:$true] %s409
          %415 = dma.hbm_to_vmem [thread:$0]  %s408, 2048, %s410, %s399, 128, 128, 8
        $region44: #{tpu_custom_call.1} parent=27 // pred_fallthru
          _
        // Predicated region
        $region45: #{tpu_custom_call.1} parent=27 // pred_check
          %p416 = pneg %p228
        $region46: #{tpu_custom_call.1} parent=27 // pred_check_branch
          %418 = sbr.rel (%p416) target = $region48
        $region47: #{tpu_custom_call.1} parent=27 // pred_region
          %s419 = sand.u32 %s19, 1
          %s420 = scalar_lea.sflag [#allocation6], %s419
          %s421 = sand.u32 %s218, 1
          %s422 = smul.addr %s421, 128
          %s423 = scalar_lea.vmem [#allocation15], %s422
          %s425 = ssub.s32 2048, 2048
          %426 = vsyncadd %s420, %s425
          %s427 = smul.addr %s27, 32
          %s428 = smul.addr %s427, 64
          %s429 = scalar_lea.hbm %s7, %s428
          %s430 = sshll.u32 %s423, 4
          %s431 = int_to_ptr.vmem [resolvable:$true] %s430
          %436 = dma.hbm_to_vmem [thread:$0]  %s429, 2048, %s431, %s420, 64, 64, 4
        $region48: #{tpu_custom_call.1} parent=27 // pred_fallthru
          _
        // Predicated region
        $region49: #{tpu_custom_call.1} parent=27 // pred_check
          %p437 = pneg %p254
        $region50: #{tpu_custom_call.1} parent=27 // pred_check_branch
          %439 = sbr.rel (%p437) target = $region52
        $region51: #{tpu_custom_call.1} parent=27 // pred_region
          %p440 = scmp.lt.s32.totalorder %s27, 1
          %s441 = scalar_select %p440, %s27, 1
          %s442 = smul.addr %s441, 4
          %s443 = scalar_lea.vmem %s8, %s442
        $region52: #{tpu_custom_call.1} parent=27 // pred_fallthru
          _
      $region28: #{tpu_custom_call.1} parent=5 // pred_fallthru
        _
      %p444 = scmp.le.s32.totalorder 1, %s19
      %p445 = scmp.lt.s32.totalorder %s19, 3
      %p446 = pnand %p444, %p445
      %p447 = pneg %p446
      // Predicated region
      $region53: #{tpu_custom_call.1} parent=5 // pred_check
        _
      $region54: #{tpu_custom_call.1} parent=5 // pred_check_branch
        %449 = sbr.rel (%p446) target = $region56
      $region55: #{tpu_custom_call.1} parent=5 // pred_region
        %s450 = ssub.s32 %s19, 1
        // Predicated region
        $region57: #{tpu_custom_call.1} parent=55 // pred_check
          %p451 = pneg %p52
        $region58: #{tpu_custom_call.1} parent=55 // pred_check_branch
          %453 = sbr.rel (%p451) target = $region60
        $region59: #{tpu_custom_call.1} parent=55 // pred_region
          %454 = dma.done [#allocation8], 16
        $region60: #{tpu_custom_call.1} parent=55 // pred_fallthru
          _
        // Predicated region
        $region61: #{tpu_custom_call.1} parent=55 // pred_check
          %p455 = pneg %p78
        $region62: #{tpu_custom_call.1} parent=55 // pred_check_branch
          %457 = sbr.rel (%p455) target = $region64
        $region63: #{tpu_custom_call.1} parent=55 // pred_region
          %458 = dma.done [#allocation6], 512
        $region64: #{tpu_custom_call.1} parent=55 // pred_fallthru
          _
        // Predicated region
        $region65: #{tpu_custom_call.1} parent=55 // pred_check
          %p459 = pneg %p104
        $region66: #{tpu_custom_call.1} parent=55 // pred_check_branch
          %461 = sbr.rel (%p459) target = $region68
        $region67: #{tpu_custom_call.1} parent=55 // pred_region
          %462 = dma.done [#allocation11], 32
        $region68: #{tpu_custom_call.1} parent=55 // pred_fallthru
          _
        %s463 = sand.u32 %s24, 1
        %s464 = scalar_lea.sflag [#allocation6], %s463
        %s465 = sand.u32 %s117, 1
        %s466 = smul.addr %s465, 192
        %s467 = scalar_lea.vmem [#allocation12], %s466
        // Predicated region
        $region69: #{tpu_custom_call.1} parent=55 // pred_check
          %p468 = pneg %p130
        $region70: #{tpu_custom_call.1} parent=55 // pred_check_branch
          %470 = sbr.rel (%p468) target = $region72
        $region71: #{tpu_custom_call.1} parent=55 // pred_region
          %471 = dma.done %s464, 3072
        $region72: #{tpu_custom_call.1} parent=55 // pred_fallthru
          _
        %s472 = sand.u32 %s24, 1
        %s473 = scalar_lea.sflag [#allocation6], %s472
        %s474 = sand.u32 %s169, 1
        %s475 = smul.addr %s474, 64
        %s476 = scalar_lea.vmem [#allocation13], %s475
        // Predicated region
        $region73: #{tpu_custom_call.1} parent=55 // pred_check
          %p477 = pneg %p182
        $region74: #{tpu_custom_call.1} parent=55 // pred_check_branch
          %479 = sbr.rel (%p477) target = $region76
        $region75: #{tpu_custom_call.1} parent=55 // pred_region
          %480 = dma.done %s473, 1024
        $region76: #{tpu_custom_call.1} parent=55 // pred_fallthru
          _
        %s481 = sand.u32 %s24, 1
        %s482 = scalar_lea.sflag [#allocation6], %s481
        %s483 = sand.u32 %s195, 1
        %s484 = smul.addr %s483, 128
        %s485 = scalar_lea.vmem [#allocation14], %s484
        // Predicated region
        $region77: #{tpu_custom_call.1} parent=55 // pred_check
          %p486 = pneg %p208
        $region78: #{tpu_custom_call.1} parent=55 // pred_check_branch
          %488 = sbr.rel (%p486) target = $region80
        $region79: #{tpu_custom_call.1} parent=55 // pred_region
          %489 = dma.done %s482, 2048
        $region80: #{tpu_custom_call.1} parent=55 // pred_fallthru
          _
        %s490 = sand.u32 %s24, 1
        %s491 = scalar_lea.sflag [#allocation6], %s490
        %s492 = sand.u32 %s221, 1
        %s493 = smul.addr %s492, 128
        %s494 = scalar_lea.vmem [#allocation15], %s493
        // Predicated region
        $region81: #{tpu_custom_call.1} parent=55 // pred_check
          %p495 = pneg %p234
        $region82: #{tpu_custom_call.1} parent=55 // pred_check_branch
          %497 = sbr.rel (%p495) target = $region84
        $region83: #{tpu_custom_call.1} parent=55 // pred_region
          %498 = dma.done %s491, 2048
        $region84: #{tpu_custom_call.1} parent=55 // pred_fallthru
          _
        %499 = sfence
        %p500 = pneg %p52
        %p501 = pneg %p49
        %p502 = pneg %p78
        %p503 = pneg %p75
        %p504 = pneg %p104
        %p505 = pneg %p101
        %s506 = sand.u32 %s24, 1
        %s507 = scalar_lea.sflag [#allocation6], %s506
        %s508 = sand.u32 %s117, 1
        %s509 = smul.addr %s508, 192
        %s510 = scalar_lea.vmem [#allocation12], %s509
        %p511 = pneg %p130
        %p512 = pneg %p127
        %p513 = scmp.lt.s32.totalorder %s29, 1
        %s514 = scalar_select %p513, %s29, 1
        %s515 = smul.addr %s514, 3
        %s516 = scalar_lea.vmem %s4, %s515
        %p517 = pneg %p156
        %p518 = pneg %p153
        %s519 = sand.u32 %s24, 1
        %s520 = scalar_lea.sflag [#allocation6], %s519
        %s521 = sand.u32 %s169, 1
        %s522 = smul.addr %s521, 64
        %s523 = scalar_lea.vmem [#allocation13], %s522
        %p524 = pneg %p182
        %p525 = pneg %p179
        %s526 = sand.u32 %s24, 1
        %s527 = scalar_lea.sflag [#allocation6], %s526
        %s528 = sand.u32 %s195, 1
        %s529 = smul.addr %s528, 128
        %s530 = scalar_lea.vmem [#allocation14], %s529
        %p531 = pneg %p208
        %p532 = pneg %p205
        %s533 = sand.u32 %s24, 1
        %s534 = scalar_lea.sflag [#allocation6], %s533
        %s535 = sand.u32 %s221, 1
        %s536 = smul.addr %s535, 128
        %s537 = scalar_lea.vmem [#allocation15], %s536
        %p538 = pneg %p234
        %p539 = pneg %p231
        %p540 = scmp.lt.s32.totalorder %s29, 1
        %s541 = scalar_select %p540, %s29, 1
        %s542 = smul.addr %s541, 4
        %s543 = scalar_lea.vmem %s8, %s542
        %p544 = pneg %p260
        %p545 = pneg %p257
        %p546 = pneg %p286
        %p547 = pneg %p283
        %s548 = smul.u32 4, %s28
        %s549 = smul.u32 2, %s28
        %p550 = scmp.lt.s32.totalorder %s29, 1
        %s551 = scalar_select %p550, %s29, 1
        %s552 = smul.addr %s551, 3
        %s553 = scalar_lea.vmem %s4, %s552
        %p554 = scmp.lt.s32.totalorder %s29, 1
        %s555 = scalar_select %p554, %s29, 1
        %s556 = smul.addr %s555, 4
        %s557 = scalar_lea.vmem %s8, %s556
        %s558 = smul.u32 4, %s28
        %p560 = scmp.eq.s32.totalorder %s29, 0
        // Predicated region
        $region85: #{tpu_custom_call.1} parent=55 // pred_check
          %p561 = pneg %p560
        $region86: #{tpu_custom_call.1} parent=55 // pred_check_branch
          %563 = sbr.rel (%p561) target = $region88
        $region87: #{tpu_custom_call.1} parent=55 // pred_region
          %v564 = vld [vmem:[#allocation9] sm:$0xff]
          %v565 = vld [vmem:[#allocation9 + $0x8] sm:$0xff]
          %v566 = vld [vmem:[#allocation9 + $0x10] sm:$0xff]
          %v567 = vld [vmem:[#allocation9 + $0x18] sm:$0xff]
          %568 = vst [vmem:[#allocation2] sm:$0xff] %v564
          %569 = vst [vmem:[#allocation2 + $0x8] sm:$0xff] %v565
          %570 = vst [vmem:[#allocation2 + $0x10] sm:$0xff] %v566
          %571 = vst [vmem:[#allocation2 + $0x18] sm:$0xff] %v567
        $region88: #{tpu_custom_call.1} parent=55 // pred_fallthru
          _
        %v572 = vld [vmem:[#allocation2] sm:$0xff]
        %v573 = vld [vmem:[#allocation2 + $0x8] sm:$0xff]
        %v574 = vld [vmem:[#allocation2 + $0x10] sm:$0xff]
        %v575 = vld [vmem:[#allocation2 + $0x18] sm:$0xff]
        %s576 = smul.u32 %s29, 4
        %s577 = sld [smem:[#allocation5 + %s576]]
        %s578 = sadd.s32 %s576, 1
        %s579 = sld [smem:[#allocation5 + %s578]]
        %580 = vadd.xlane.f32.xlu0 %v572
        %v581 = vpop.xlane.xlu0 %580
        %582 = vadd.xlane.f32.xlu0 %v573
        %v583 = vpop.xlane.xlu0 %582
        %584 = vadd.xlane.f32.xlu0 %v574
        %v585 = vpop.xlane.xlu0 %584
        %586 = vadd.xlane.f32.xlu0 %v575
        %v587 = vpop.xlane.xlu0 %586
        %v588 = vrcp.pop 128.0
        %v589 = vmul.f32 %v581, %v588
        %v590 = vmul.f32 %v583, %v588
        %v591 = vmul.f32 %v585, %v588
        %v592 = vmul.f32 %v587, %v588
        %v593 = vsub.f32 %v572, %v589
        %v594 = vsub.f32 %v573, %v590
        %v595 = vsub.f32 %v574, %v591
        %v596 = vsub.f32 %v575, %v592
        %v597 = vmul.f32 %v593, %v593
        %v598 = vmul.f32 %v594, %v594
        %v599 = vmul.f32 %v595, %v595
        %v600 = vmul.f32 %v596, %v596
        %601 = vadd.xlane.f32.xlu0 %v597
        %v602 = vpop.xlane.xlu0 %601
        %603 = vadd.xlane.f32.xlu0 %v598
        %v604 = vpop.xlane.xlu0 %603
        %605 = vadd.xlane.f32.xlu0 %v599
        %v606 = vpop.xlane.xlu0 %605
        %607 = vadd.xlane.f32.xlu0 %v600
        %v608 = vpop.xlane.xlu0 %607
        %v609 = vrcp.pop 127.0
        %v610 = vmul.f32 %v602, %v609
        %v611 = vmul.f32 %v604, %v609
        %v612 = vmul.f32 %v606, %v609
        %v613 = vmul.f32 %v608, %v609
        %v614 = vstv %s577
        %v615 = vmul.f32 %v614, %v593
        %v616 = vmul.f32 %v614, %v594
        %v617 = vmul.f32 %v614, %v595
        %v618 = vmul.f32 %v614, %v596
        %v619 = vrsqrt.pop %v610
        %v620 = vmul.f32 %v610, %v619
        %vm621 = vcmp.eq.f32.partialorder %v610, inf
        %v622 = vsel %vm621, %v610, %v620
        %vm623 = vcmp.eq.f32.partialorder %v610, 0.0
        %v624 = vand.u32 %v610, 2147483648
        %v625 = vsel %vm623, %v624, %v622
        %v626 = vrsqrt.pop %v611
        %v627 = vmul.f32 %v611, %v626
        %vm628 = vcmp.eq.f32.partialorder %v611, inf
        %v629 = vsel %vm628, %v611, %v627
        %vm630 = vcmp.eq.f32.partialorder %v611, 0.0
        %v631 = vand.u32 %v611, 2147483648
        %v632 = vsel %vm630, %v631, %v629
        %v633 = vrsqrt.pop %v612
        %v634 = vmul.f32 %v612, %v633
        %vm635 = vcmp.eq.f32.partialorder %v612, inf
        %v636 = vsel %vm635, %v612, %v634
        %vm637 = vcmp.eq.f32.partialorder %v612, 0.0
        %v638 = vand.u32 %v612, 2147483648
        %v639 = vsel %vm637, %v638, %v636
        %v640 = vrsqrt.pop %v613
        %v641 = vmul.f32 %v613, %v640
        %vm642 = vcmp.eq.f32.partialorder %v613, inf
        %v643 = vsel %vm642, %v613, %v641
        %vm644 = vcmp.eq.f32.partialorder %v613, 0.0
        %v645 = vand.u32 %v613, 2147483648
        %v646 = vsel %vm644, %v645, %v643
        %v647 = vadd.f32 %v625, 1e-06
        %v648 = vadd.f32 %v632, 1e-06
        %v649 = vadd.f32 %v639, 1e-06
        %v650 = vadd.f32 %v646, 1e-06
        %v651 = vrcp.pop %v647
        %v652 = vmul.f32 %v615, %v651
        %v653 = vrcp.pop %v648
        %v654 = vmul.f32 %v616, %v653
        %v655 = vrcp.pop %v649
        %v656 = vmul.f32 %v617, %v655
        %v657 = vrcp.pop %v650
        %v658 = vmul.f32 %v618, %v657
        %v659 = vstv %s579
        %v660 = vadd.f32 %v652, %v659
        %v661 = vadd.f32 %v654, %v659
        %v662 = vadd.f32 %v656, %v659
        %v663 = vadd.f32 %v658, %v659
        %v664 = vpack.c.bf16 %v661, %v660
        %v665 = vpack.c.bf16 %v663, %v662
        %v666 = vld [vmem:[%s467] sm:$0xff]
        %v667 = vld [vmem:[%s467 + $0x8] sm:$0xf]
        %v668 = vld [vmem:[%s467 + $0xc] sm:$0xff]
        %v669 = vld [vmem:[%s467 + $0x14] sm:$0xf]
        %v670 = vld [vmem:[%s467 + $0x18] sm:$0xff]
        %v671 = vld [vmem:[%s467 + $0x20] sm:$0xf]
        %v672 = vld [vmem:[%s467 + $0x24] sm:$0xff]
        %v673 = vld [vmem:[%s467 + $0x2c] sm:$0xf]
        %v674 = vld [vmem:[%s467 + $0x30] sm:$0xff]
        %v675 = vld [vmem:[%s467 + $0x38] sm:$0xf]
        %v676 = vld [vmem:[%s467 + $0x3c] sm:$0xff]
        %v677 = vld [vmem:[%s467 + $0x44] sm:$0xf]
        %v678 = vld [vmem:[%s467 + $0x48] sm:$0xff]
        %v679 = vld [vmem:[%s467 + $0x50] sm:$0xf]
        %v680 = vld [vmem:[%s467 + $0x54] sm:$0xff]
        %v681 = vld [vmem:[%s467 + $0x5c] sm:$0xf]
        %v682 = vld [vmem:[%s467 + $0x60] sm:$0xff]
        %v683 = vld [vmem:[%s467 + $0x68] sm:$0xf]
        %v684 = vld [vmem:[%s467 + $0x6c] sm:$0xff]
        %v685 = vld [vmem:[%s467 + $0x74] sm:$0xf]
        %v686 = vld [vmem:[%s467 + $0x78] sm:$0xff]
        %v687 = vld [vmem:[%s467 + $0x80] sm:$0xf]
        %v688 = vld [vmem:[%s467 + $0x84] sm:$0xff]
        %v689 = vld [vmem:[%s467 + $0x8c] sm:$0xf]
        %v690 = vld [vmem:[%s467 + $0x90] sm:$0xff]
        %v691 = vld [vmem:[%s467 + $0x98] sm:$0xf]
        %v692 = vld [vmem:[%s467 + $0x9c] sm:$0xff]
        %v693 = vld [vmem:[%s467 + $0xa4] sm:$0xf]
        %v694 = vld [vmem:[%s467 + $0xa8] sm:$0xff]
        %v695 = vld [vmem:[%s467 + $0xb0] sm:$0xf]
        %v696 = vld [vmem:[%s467 + $0xb4] sm:$0xff]
        %v697 = vld [vmem:[%s467 + $0xbc] sm:$0xf]
        %v698 = vld [vmem:[%s553] sm:$0x7]
        %v700 = vlaneseq
        %v701 = vshrl.u32 %v700, 7
        %v702 = vsub.s32 0, %v701
        %v703 = vrot.slane %v698, %v702
        %v704 = vlaneseq
        %v705 = vshrl.u32 %v704, 7
        %v706 = vsub.s32 1, %v705
        %v707 = vrot.slane %v698, %v706
        %v708 = vlaneseq
        %v709 = vshrl.u32 %v708, 7
        %v710 = vsub.s32 2, %v709
        %v711 = vrot.slane %v698, %v710
        %v747 = vunpack.c.l.b16 %v666
        %v748 = vunpack.c.h.b16 %v666
        %v749 = vunpack.c.l.b16 %v667
        %v750 = vunpack.c.l.b16 %v668
        %v751 = vunpack.c.h.b16 %v668
        %v752 = vunpack.c.l.b16 %v669
        %v753 = vunpack.c.l.b16 %v670
        %v754 = vunpack.c.h.b16 %v670
        %v755 = vunpack.c.l.b16 %v671
        %v756 = vunpack.c.l.b16 %v672
        %v757 = vunpack.c.h.b16 %v672
        %v758 = vunpack.c.l.b16 %v673
        %v759 = vunpack.c.l.b16 %v674
        %v760 = vunpack.c.h.b16 %v674
        %v761 = vunpack.c.l.b16 %v675
        %v762 = vunpack.c.l.b16 %v676
        %v763 = vunpack.c.h.b16 %v676
        %v764 = vunpack.c.l.b16 %v677
        %v765 = vunpack.c.l.b16 %v678
        %v766 = vunpack.c.h.b16 %v678
        %v767 = vunpack.c.l.b16 %v679
        %v768 = vunpack.c.l.b16 %v680
        %v769 = vunpack.c.h.b16 %v680
        %v770 = vunpack.c.l.b16 %v681
        %v771 = vunpack.c.l.b16 %v682
        %v772 = vunpack.c.h.b16 %v682
        %v773 = vunpack.c.l.b16 %v683
        %v774 = vunpack.c.l.b16 %v684
        %v775 = vunpack.c.h.b16 %v684
        %v776 = vunpack.c.l.b16 %v685
        %v777 = vunpack.c.l.b16 %v686
        %v778 = vunpack.c.h.b16 %v686
        %v779 = vunpack.c.l.b16 %v687
        %v780 = vunpack.c.l.b16 %v688
        %v781 = vunpack.c.h.b16 %v688
        %v782 = vunpack.c.l.b16 %v689
        %v783 = vunpack.c.l.b16 %v690
        %v784 = vunpack.c.h.b16 %v690
        %v785 = vunpack.c.l.b16 %v691
        %v786 = vunpack.c.l.b16 %v692
        %v787 = vunpack.c.h.b16 %v692
        %v788 = vunpack.c.l.b16 %v693
        %v789 = vunpack.c.l.b16 %v694
        %v790 = vunpack.c.h.b16 %v694
        %v791 = vunpack.c.l.b16 %v695
        %v792 = vunpack.c.l.b16 %v696
        %v793 = vunpack.c.h.b16 %v696
        %v794 = vunpack.c.l.b16 %v697
        %v795 = vpack.c.b16 %v750, %v747
        %v796 = vpack.c.b16 %v751, %v748
        %v797 = vpack.c.b16 %v752, %v749
        %v798 = vpack.c.b16 %v756, %v753
        %v799 = vpack.c.b16 %v757, %v754
        %v800 = vpack.c.b16 %v758, %v755
        %v801 = vpack.c.b16 %v762, %v759
        %v802 = vpack.c.b16 %v763, %v760
        %v803 = vpack.c.b16 %v764, %v761
        %v804 = vpack.c.b16 %v768, %v765
        %v805 = vpack.c.b16 %v769, %v766
        %v806 = vpack.c.b16 %v770, %v767
        %v807 = vpack.c.b16 %v774, %v771
        %v808 = vpack.c.b16 %v775, %v772
        %v809 = vpack.c.b16 %v776, %v773
        %v810 = vpack.c.b16 %v780, %v777
        %v811 = vpack.c.b16 %v781, %v778
        %v812 = vpack.c.b16 %v782, %v779
        %v813 = vpack.c.b16 %v786, %v783
        %v814 = vpack.c.b16 %v787, %v784
        %v815 = vpack.c.b16 %v788, %v785
        %v816 = vpack.c.b16 %v792, %v789
        %v817 = vpack.c.b16 %v793, %v790
        %v818 = vpack.c.b16 %v794, %v791
        %843 = vmatprep.subr.bf16.mxu0 %v796
        %844 = vmatpush1.bf16.msra.mxu0 %v795
        %845 = vmatprep.subr.bf16.mxu0 %v799
        %846 = vmatpush1.bf16.msra.mxu0 %v798
        %847 = vmatprep.subr.bf16.mxu0 %v802
        %848 = vmatpush1.bf16.msra.mxu0 %v801
        %849 = vmatprep.subr.bf16.mxu0 %v805
        %850 = vmatpush1.bf16.msra.mxu0 %v804
        %851 = vmatprep.subr.bf16.mxu0 %v808
        %852 = vmatpush1.bf16.msra.mxu0 %v807
        %853 = vmatprep.subr.bf16.mxu0 %v811
        %854 = vmatpush1.bf16.msra.mxu0 %v810
        %855 = vmatprep.subr.bf16.mxu0 %v814
        %856 = vmatpush1.bf16.msra.mxu0 %v813
        %857 = vmatprep.subr.bf16.mxu0 %v817
        %858 = vmatpush1.bf16.msra.mxu0 %v816
        %859 = vmatprep.subr.bf16.mxu0 0
        %860 = vmatpush1.bf16.msra.mxu0 0
        %861 = vmatprep.subr.bf16.mxu0 0
        %862 = vmatpush1.bf16.msra.mxu0 0
        %863 = vmatprep.subr.bf16.mxu0 0
        %864 = vmatpush1.bf16.msra.mxu0 0
        %865 = vmatprep.subr.bf16.mxu0 0
        %866 = vmatpush1.bf16.msra.mxu0 0
        %867 = vmatprep.subr.bf16.mxu0 0
        %868 = vmatpush1.bf16.msra.mxu0 0
        %869 = vmatprep.subr.bf16.mxu0 0
        %870 = vmatpush1.bf16.msra.mxu0 0
        %871 = vmatprep.subr.bf16.mxu0 0
        %872 = vmatpush1.bf16.msra.mxu0 0
        %873 = vmatprep.subr.bf16.mxu0 0
        %874 = vmatpush1.bf16.msra.mxu0 0
        %875 = vmatprep.mubr.bf16.mxu0 0
        %876 = vmatmul.mubr.bf16.gmra.mrb[0].mxu0 %v664
        %v877 = vpop.f32.mrb[0].mxu0
        %v878 = vadd.f32 %v703, %v877
        %v879 = vpop.f32.mrb[0].mxu0
        %v880 = vadd.f32 %v707, %v879
        %v881 = vpop.f32.mrb[0].mxu0
        %v882 = vadd.f32 %v703, %v881
        %v883 = vpop.f32.mrb[0].mxu0
        %v884 = vadd.f32 %v707, %v883
        %885 = vmatprep.mubr.bf16.mxu0 0
        %886 = vmatmul.mubr.bf16.gmra.mrb[0].mxu0 %v665
        %v887 = vpop.f32.mrb[0].mxu0
        %v888 = vadd.f32 %v703, %v887
        %v889 = vpop.f32.mrb[0].mxu0
        %v890 = vadd.f32 %v707, %v889
        %v891 = vpop.f32.mrb[0].mxu0
        %v892 = vadd.f32 %v703, %v891
        %v893 = vpop.f32.mrb[0].mxu0
        %v894 = vadd.f32 %v707, %v893
        %895 = vdwg.mxu0
        %896 = vmatprep.subr.bf16.mxu0 0
        %897 = vmatpush1.bf16.msra.mxu0 %v797
        %898 = vmatprep.subr.bf16.mxu0 0
        %899 = vmatpush1.bf16.msra.mxu0 %v800
        %900 = vmatprep.subr.bf16.mxu0 0
        %901 = vmatpush1.bf16.msra.mxu0 %v803
        %902 = vmatprep.subr.bf16.mxu0 0
        %903 = vmatpush1.bf16.msra.mxu0 %v806
        %904 = vmatprep.subr.bf16.mxu0 0
        %905 = vmatpush1.bf16.msra.mxu0 %v809
        %906 = vmatprep.subr.bf16.mxu0 0
        %907 = vmatpush1.bf16.msra.mxu0 %v812
        %908 = vmatprep.subr.bf16.mxu0 0
        %909 = vmatpush1.bf16.msra.mxu0 %v815
        %910 = vmatprep.subr.bf16.mxu0 0
        %911 = vmatpush1.bf16.msra.mxu0 %v818
        %912 = vmatprep.subr.bf16.mxu0 0
        %913 = vmatpush1.bf16.msra.mxu0 0
        %914 = vmatprep.subr.bf16.mxu0 0
        %915 = vmatpush1.bf16.msra.mxu0 0
        %916 = vmatprep.subr.bf16.mxu0 0
        %917 = vmatpush1.bf16.msra.mxu0 0
        %918 = vmatprep.subr.bf16.mxu0 0
        %919 = vmatpush1.bf16.msra.mxu0 0
        %920 = vmatprep.subr.bf16.mxu0 0
        %921 = vmatpush1.bf16.msra.mxu0 0
        %922 = vmatprep.subr.bf16.mxu0 0
        %923 = vmatpush1.bf16.msra.mxu0 0
        %924 = vmatprep.subr.bf16.mxu0 0
        %925 = vmatpush1.bf16.msra.mxu0 0
        %926 = vmatprep.subr.bf16.mxu0 0
        %927 = vmatpush1.bf16.msra.mxu0 0
        %928 = vmatprep.mubr.bf16.mxu0 0
        %929 = vmatmul.mubr.bf16.gmra.mrb[0].mxu0 %v664
        %v930 = vpop.f32.mrb[0].mxu0
        %v931 = vadd.f32 %v711, %v930
        %v932 = vpop.f32.mrb[0].mxu0
        %v933 = vpop.f32.mrb[0].mxu0
        %v934 = vadd.f32 %v711, %v933
        %v935 = vpop.f32.mrb[0].mxu0
        %936 = vmatprep.mubr.bf16.mxu0 0
        %937 = vmatmul.mubr.bf16.gmra.mrb[0].mxu0 %v665
        %v938 = vpop.f32.mrb[0].mxu0
        %v939 = vadd.f32 %v711, %v938
        %v940 = vpop.f32.mrb[0].mxu0
        %v941 = vpop.f32.mrb[0].mxu0
        %v942 = vadd.f32 %v711, %v941
        %v943 = vpop.f32.mrb[0].mxu0
        %944 = vdwg.mxu0
        %v945 = vpack.c.bf16 %v882, %v878
        %v946 = vpack.c.bf16 %v884, %v880
        %v947 = vpack.c.bf16 %v934, %v931
        %v948 = vpack.c.bf16 %v892, %v888
        %v949 = vpack.c.bf16 %v894, %v890
        %v950 = vpack.c.bf16 %v942, %v939
        %951 = vst [vmem:[#allocation3] sm:$0xff] %v945
        %952 = vst [vmem:[#allocation3 + $0x8] sm:$0xff] %v946
        %953 = vst [vmem:[#allocation3 + $0x10] sm:$0xff] %v947
        %954 = vst [vmem:[#allocation3 + $0x18] sm:$0xff] %v948
        %955 = vst [vmem:[#allocation3 + $0x20] sm:$0xff] %v949
        %956 = vst [vmem:[#allocation3 + $0x28] sm:$0xff] %v950
        %v957 = vld [vmem:[#allocation10] sm:$0x1]
        %s958 = smul.u32 0, 3
        %s959 = smul.addr %s958, 8
        %s960 = scalar_lea.vmem [#allocation3], %s959
        %v961 = vld [vmem:[%s960] sm:$0xff]
        %v962 = vld [vmem:[%s960 + $0x8] sm:$0xff]
        %v963 = vld [vmem:[%s960 + $0x10] sm:$0xff]
        %v965 = vlaneseq
        %v966 = vshrl.u32 %v965, 7
        %v967 = vsub.s32 0, %v966
        %v968 = vrot.slane %v957, %v967
        %vm970 = vcmask 261120
        %v972 = vsel %vm970, %v961, 0
        %v975 = vsel %vm970, %v962, 0
        %977 = vmatprep.subr.bf16.mxu0 0
        %978 = vmatpush1.bf16.xpose.msra.mxu0 %v975
        %979 = vmatprep.subr.bf16.mxu0 0
        %980 = vmatpush1.bf16.xpose.msra.mxu0 0
        %981 = vmatprep.subr.bf16.mxu0 0
        %982 = vmatpush1.bf16.xpose.msra.mxu0 0
        %983 = vmatprep.subr.bf16.mxu0 0
        %984 = vmatpush1.bf16.xpose.msra.mxu0 0
        %985 = vmatprep.subr.bf16.mxu0 0
        %986 = vmatpush1.bf16.xpose.msra.mxu0 0
        %987 = vmatprep.subr.bf16.mxu0 0
        %988 = vmatpush1.bf16.xpose.msra.mxu0 0
        %989 = vmatprep.subr.bf16.mxu0 0
        %990 = vmatpush1.bf16.xpose.msra.mxu0 0
        %991 = vmatprep.subr.bf16.mxu0 0
        %992 = vmatpush1.bf16.xpose.msra.mxu0 0
        %993 = vmatprep.subr.bf16.mxu0 0
        %994 = vmatpush1.bf16.xpose.msra.mxu0 0
        %995 = vmatprep.subr.bf16.mxu0 0
        %996 = vmatpush1.bf16.xpose.msra.mxu0 0
        %997 = vmatprep.subr.bf16.mxu0 0
        %998 = vmatpush1.bf16.xpose.msra.mxu0 0
        %999 = vmatprep.subr.bf16.mxu0 0
        %1000 = vmatpush1.bf16.xpose.msra.mxu0 0
        %1001 = vmatprep.subr.bf16.mxu0 0
        %1002 = vmatpush1.bf16.xpose.msra.mxu0 0
        %1003 = vmatprep.subr.bf16.mxu0 0
        %1004 = vmatpush1.bf16.xpose.msra.mxu0 0
        %1005 = vmatprep.subr.bf16.mxu0 0
        %1006 = vmatpush1.bf16.xpose.msra.mxu0 0
        %1007 = vmatprep.subr.bf16.mxu0 0
        %1008 = vmatpush1.bf16.xpose.msra.mxu0 0
        %1009 = vmatprep.mubr.bf16.mxu0 0
        %1010 = vmatmul.mubr.bf16.gmra.mrb[0].mxu0 %v972
        %v1011 = vpop.f32.mrb[0].mxu0
        %v1012 = vadd.f32 %v968, %v1011
        %v1013 = vpop.f32.mrb[0].mxu0
        %v1014 = vpop.f32.mrb[0].mxu0
        %v1015 = vadd.f32 %v968, %v1014
        %v1016 = vpop.f32.mrb[0].mxu0
        %1017 = vdwg.mxu0
        %vm1018 = vcmask 130048
        %v1019 = vsel %vm1018, %v1012, -inf
        %1020 = vmax.xlane.f32.xlu0 %v1019
        %v1021 = vpop.xlane.xlu0 %1020
        %v1022 = vsel %vm1018, %v1015, -inf
        %1023 = vmax.xlane.f32.xlu0 %v1022
        %v1024 = vpop.xlane.xlu0 %1023
        %v1025 = vsub.f32 %v1012, %v1021
        %v1026 = vsub.f32 %v1015, %v1024
        %v1027 = vmul.f32 %v1025, 1.442695
        %v1028 = vpow.pop %v1027
        %v1029 = vmul.f32 %v1026, 1.442695
        %v1030 = vpow.pop %v1029
        %v1031 = vsel %vm1018, %v1028, 0.0
        %1032 = vadd.xlane.f32.xlu0 %v1031
        %v1033 = vpop.xlane.xlu0 %1032
        %v1034 = vsel %vm1018, %v1030, 0.0
        %1035 = vadd.xlane.f32.xlu0 %v1034
        %v1036 = vpop.xlane.xlu0 %1035
        %v1037 = vrcp.pop %v1033
        %v1038 = vrcp.pop %v1036
        %v1039 = vmul.f32 %v1028, %v1037
        %v1040 = vmul.f32 %v1030, %v1038
        %v1041 = vpack.c.bf16 %v1040, %v1039
        %v1043 = vsel %vm1018, %v1041, 0
        %1045 = vmatprep.subr.bf16.mxu0 0
        %1046 = vmatpush1.bf16.msra.mxu0 %v963
        %1047 = vmatprep.subr.bf16.mxu0 0
        %1048 = vmatpush1.bf16.msra.mxu0 0
        %1049 = vmatprep.subr.bf16.mxu0 0
        %1050 = vmatpush1.bf16.msra.mxu0 0
        %1051 = vmatprep.subr.bf16.mxu0 0
        %1052 = vmatpush1.bf16.msra.mxu0 0
        %1053 = vmatprep.subr.bf16.mxu0 0
        %1054 = vmatpush1.bf16.msra.mxu0 0
        %1055 = vmatprep.subr.bf16.mxu0 0
        %1056 = vmatpush1.bf16.msra.mxu0 0
        %1057 = vmatprep.subr.bf16.mxu0 0
        %1058 = vmatpush1.bf16.msra.mxu0 0
        %1059 = vmatprep.subr.bf16.mxu0 0
        %1060 = vmatpush1.bf16.msra.mxu0 0
        %1061 = vmatprep.subr.bf16.mxu0 0
        %1062 = vmatpush1.bf16.msra.mxu0 0
        %1063 = vmatprep.subr.bf16.mxu0 0
        %1064 = vmatpush1.bf16.msra.mxu0 0
        %1065 = vmatprep.subr.bf16.mxu0 0
        %1066 = vmatpush1.bf16.msra.mxu0 0
        %1067 = vmatprep.subr.bf16.mxu0 0
        %1068 = vmatpush1.bf16.msra.mxu0 0
        %1069 = vmatprep.subr.bf16.mxu0 0
        %1070 = vmatpush1.bf16.msra.mxu0 0
        %1071 = vmatprep.subr.bf16.mxu0 0
        %1072 = vmatpush1.bf16.msra.mxu0 0
        %1073 = vmatprep.subr.bf16.mxu0 0
        %1074 = vmatpush1.bf16.msra.mxu0 0
        %1075 = vmatprep.subr.bf16.mxu0 0
        %1076 = vmatpush1.bf16.msra.mxu0 0
        %1077 = vmatprep.mubr.bf16.mxu0 0
        %1078 = vmatmul.mubr.bf16.gmra.mrb[0].mxu0 %v1043
        %v1079 = vpop.f32.mrb[0].mxu0
        %v1080 = vadd.f32 0.0, %v1079
        %v1081 = vpop.f32.mrb[0].mxu0
        %v1082 = vpop.f32.mrb[0].mxu0
        %v1083 = vadd.f32 0.0, %v1082
        %v1084 = vpop.f32.mrb[0].mxu0
        %1085 = vdwg.mxu0
        %v1086 = vpack.c.bf16 %v1083, %v1080
        %1087 = vst.msk [vmem:[#allocation4] sm:$0xff] %vm970, %v1086
        %v1088 = vld [vmem:[%s960] sm:$0xff]
        %v1089 = vld [vmem:[%s960 + $0x8] sm:$0xff]
        %v1090 = vld [vmem:[%s960 + $0x10] sm:$0xff]
        %1092 = vrot.lane.b32.xlu0 %v1088, 96
        %v1093 = vpop.permute.xlu0 %1092
        %1095 = vrot.lane.b32.xlu0 %v1089, 96
        %v1096 = vpop.permute.xlu0 %1095
        %v1098 = vsel %vm970, %v1093, 0
        %v1101 = vsel %vm970, %v1096, 0
        %1103 = vmatprep.subr.bf16.mxu0 0
        %1104 = vmatpush1.bf16.xpose.msra.mxu0 %v1101
        %1105 = vmatprep.subr.bf16.mxu0 0
        %1106 = vmatpush1.bf16.xpose.msra.mxu0 0
        %1107 = vmatprep.subr.bf16.mxu0 0
        %1108 = vmatpush1.bf16.xpose.msra.mxu0 0
        %1109 = vmatprep.subr.bf16.mxu0 0
        %1110 = vmatpush1.bf16.xpose.msra.mxu0 0
        %1111 = vmatprep.subr.bf16.mxu0 0
        %1112 = vmatpush1.bf16.xpose.msra.mxu0 0
        %1113 = vmatprep.subr.bf16.mxu0 0
        %1114 = vmatpush1.bf16.xpose.msra.mxu0 0
        %1115 = vmatprep.subr.bf16.mxu0 0
        %1116 = vmatpush1.bf16.xpose.msra.mxu0 0
        %1117 = vmatprep.subr.bf16.mxu0 0
        %1118 = vmatpush1.bf16.xpose.msra.mxu0 0
        %1119 = vmatprep.subr.bf16.mxu0 0
        %1120 = vmatpush1.bf16.xpose.msra.mxu0 0
        %1121 = vmatprep.subr.bf16.mxu0 0
        %1122 = vmatpush1.bf16.xpose.msra.mxu0 0
        %1123 = vmatprep.subr.bf16.mxu0 0
        %1124 = vmatpush1.bf16.xpose.msra.mxu0 0
        %1125 = vmatprep.subr.bf16.mxu0 0
        %1126 = vmatpush1.bf16.xpose.msra.mxu0 0
        %1127 = vmatprep.subr.bf16.mxu0 0
        %1128 = vmatpush1.bf16.xpose.msra.mxu0 0
        %1129 = vmatprep.subr.bf16.mxu0 0
        %1130 = vmatpush1.bf16.xpose.msra.mxu0 0
        %1131 = vmatprep.subr.bf16.mxu0 0
        %1132 = vmatpush1.bf16.xpose.msra.mxu0 0
        %1133 = vmatprep.subr.bf16.mxu0 0
        %1134 = vmatpush1.bf16.xpose.msra.mxu0 0
        %1135 = vmatprep.mubr.bf16.mxu0 0
        %1136 = vmatmul.mubr.bf16.gmra.mrb[0].mxu0 %v1098
        %v1137 = vpop.f32.mrb[0].mxu0
        %v1138 = vadd.f32 %v968, %v1137
        %v1139 = vpop.f32.mrb[0].mxu0
        %v1140 = vpop.f32.mrb[0].mxu0
        %v1141 = vadd.f32 %v968, %v1140
        %v1142 = vpop.f32.mrb[0].mxu0
        %1143 = vdwg.mxu0
        %v1144 = vsel %vm1018, %v1138, -inf
        %1145 = vmax.xlane.f32.xlu0 %v1144
        %v1146 = vpop.xlane.xlu0 %1145
        %v1147 = vsel %vm1018, %v1141, -inf
        %1148 = vmax.xlane.f32.xlu0 %v1147
        %v1149 = vpop.xlane.xlu0 %1148
        %v1150 = vsub.f32 %v1138, %v1146
        %v1151 = vsub.f32 %v1141, %v1149
        %v1152 = vmul.f32 %v1150, 1.442695
        %v1153 = vpow.pop %v1152
        %v1154 = vmul.f32 %v1151, 1.442695
        %v1155 = vpow.pop %v1154
        %v1156 = vsel %vm1018, %v1153, 0.0
        %1157 = vadd.xlane.f32.xlu0 %v1156
        %v1158 = vpop.xlane.xlu0 %1157
        %v1159 = vsel %vm1018, %v1155, 0.0
        %1160 = vadd.xlane.f32.xlu0 %v1159
        %v1161 = vpop.xlane.xlu0 %1160
        %v1162 = vrcp.pop %v1158
        %v1163 = vrcp.pop %v1161
        %v1164 = vmul.f32 %v1153, %v1162
        %v1165 = vmul.f32 %v1155, %v1163
        %v1166 = vpack.c.bf16 %v1165, %v1164
        %1168 = vrot.lane.b32.xlu0 %v1090, 96
        %v1169 = vpop.permute.xlu0 %1168
        %v1172 = vsel %vm1018, %v1166, 0
        %1174 = vmatprep.subr.bf16.mxu0 0
        %1175 = vmatpush1.bf16.msra.mxu0 %v1169
        %1176 = vmatprep.subr.bf16.mxu0 0
        %1177 = vmatpush1.bf16.msra.mxu0 0
        %1178 = vmatprep.subr.bf16.mxu0 0
        %1179 = vmatpush1.bf16.msra.mxu0 0
        %1180 = vmatprep.subr.bf16.mxu0 0
        %1181 = vmatpush1.bf16.msra.mxu0 0
        %1182 = vmatprep.subr.bf16.mxu0 0
        %1183 = vmatpush1.bf16.msra.mxu0 0
        %1184 = vmatprep.subr.bf16.mxu0 0
        %1185 = vmatpush1.bf16.msra.mxu0 0
        %1186 = vmatprep.subr.bf16.mxu0 0
        %1187 = vmatpush1.bf16.msra.mxu0 0
        %1188 = vmatprep.subr.bf16.mxu0 0
        %1189 = vmatpush1.bf16.msra.mxu0 0
        %1190 = vmatprep.subr.bf16.mxu0 0
        %1191 = vmatpush1.bf16.msra.mxu0 0
        %1192 = vmatprep.subr.bf16.mxu0 0
        %1193 = vmatpush1.bf16.msra.mxu0 0
        %1194 = vmatprep.subr.bf16.mxu0 0
        %1195 = vmatpush1.bf16.msra.mxu0 0
        %1196 = vmatprep.subr.bf16.mxu0 0
        %1197 = vmatpush1.bf16.msra.mxu0 0
        %1198 = vmatprep.subr.bf16.mxu0 0
        %1199 = vmatpush1.bf16.msra.mxu0 0
        %1200 = vmatprep.subr.bf16.mxu0 0
        %1201 = vmatpush1.bf16.msra.mxu0 0
        %1202 = vmatprep.subr.bf16.mxu0 0
        %1203 = vmatpush1.bf16.msra.mxu0 0
        %1204 = vmatprep.subr.bf16.mxu0 0
        %1205 = vmatpush1.bf16.msra.mxu0 0
        %1206 = vmatprep.mubr.bf16.mxu0 0
        %1207 = vmatmul.mubr.bf16.gmra.mrb[0].mxu0 %v1172
        %v1208 = vpop.f32.mrb[0].mxu0
        %v1209 = vadd.f32 0.0, %v1208
        %v1210 = vpop.f32.mrb[0].mxu0
        %v1211 = vpop.f32.mrb[0].mxu0
        %v1212 = vadd.f32 0.0, %v1211
        %v1213 = vpop.f32.mrb[0].mxu0
        %1214 = vdwg.mxu0
        %v1215 = vpack.c.bf16 %v1212, %v1209
        %1217 = vrot.lane.b32.xlu0 %v1215, 32
        %v1218 = vpop.permute.xlu0 %1217
        %vm1220 = vcmask 523520
        %1221 = vst.msk [vmem:[#allocation4] sm:$0xff] %vm1220, %v1218
        %v1222 = vld [vmem:[%s960] sm:$0xff]
        %v1223 = vld [vmem:[%s960 + $0x8] sm:$0xff]
        %v1224 = vld [vmem:[%s960 + $0x10] sm:$0xff]
        %1226 = vrot.lane.b32.xlu0 %v1222, 64
        %v1227 = vpop.permute.xlu0 %1226
        %1229 = vrot.lane.b32.xlu0 %v1223, 64
        %v1230 = vpop.permute.xlu0 %1229
        %v1232 = vsel %vm970, %v1227, 0
        %v1235 = vsel %vm970, %v1230, 0
        %1237 = vmatprep.subr.bf16.mxu0 0
        %1238 = vmatpush1.bf16.xpose.msra.mxu0 %v1235
        %1239 = vmatprep.subr.bf16.mxu0 0
        %1240 = vmatpush1.bf16.xpose.msra.mxu0 0
        %1241 = vmatprep.subr.bf16.mxu0 0
        %1242 = vmatpush1.bf16.xpose.msra.mxu0 0
        %1243 = vmatprep.subr.bf16.mxu0 0
        %1244 = vmatpush1.bf16.xpose.msra.mxu0 0
        %1245 = vmatprep.subr.bf16.mxu0 0
        %1246 = vmatpush1.bf16.xpose.msra.mxu0 0
        %1247 = vmatprep.subr.bf16.mxu0 0
        %1248 = vmatpush1.bf16.xpose.msra.mxu0 0
        %1249 = vmatprep.subr.bf16.mxu0 0
        %1250 = vmatpush1.bf16.xpose.msra.mxu0 0
        %1251 = vmatprep.subr.bf16.mxu0 0
        %1252 = vmatpush1.bf16.xpose.msra.mxu0 0
        %1253 = vmatprep.subr.bf16.mxu0 0
        %1254 = vmatpush1.bf16.xpose.msra.mxu0 0
        %1255 = vmatprep.subr.bf16.mxu0 0
        %1256 = vmatpush1.bf16.xpose.msra.mxu0 0
        %1257 = vmatprep.subr.bf16.mxu0 0
        %1258 = vmatpush1.bf16.xpose.msra.mxu0 0
        %1259 = vmatprep.subr.bf16.mxu0 0
        %1260 = vmatpush1.bf16.xpose.msra.mxu0 0
        %1261 = vmatprep.subr.bf16.mxu0 0
        %1262 = vmatpush1.bf16.xpose.msra.mxu0 0
        %1263 = vmatprep.subr.bf16.mxu0 0
        %1264 = vmatpush1.bf16.xpose.msra.mxu0 0
        %1265 = vmatprep.subr.bf16.mxu0 0
        %1266 = vmatpush1.bf16.xpose.msra.mxu0 0
        %1267 = vmatprep.subr.bf16.mxu0 0
        %1268 = vmatpush1.bf16.xpose.msra.mxu0 0
        %1269 = vmatprep.mubr.bf16.mxu0 0
        %1270 = vmatmul.mubr.bf16.gmra.mrb[0].mxu0 %v1232
        %v1271 = vpop.f32.mrb[0].mxu0
        %v1272 = vadd.f32 %v968, %v1271
        %v1273 = vpop.f32.mrb[0].mxu0
        %v1274 = vpop.f32.mrb[0].mxu0
        %v1275 = vadd.f32 %v968, %v1274
        %v1276 = vpop.f32.mrb[0].mxu0
        %1277 = vdwg.mxu0
        %v1278 = vsel %vm1018, %v1272, -inf
        %1279 = vmax.xlane.f32.xlu0 %v1278
        %v1280 = vpop.xlane.xlu0 %1279
        %v1281 = vsel %vm1018, %v1275, -inf
        %1282 = vmax.xlane.f32.xlu0 %v1281
        %v1283 = vpop.xlane.xlu0 %1282
        %v1284 = vsub.f32 %v1272, %v1280
        %v1285 = vsub.f32 %v1275, %v1283
        %v1286 = vmul.f32 %v1284, 1.442695
        %v1287 = vpow.pop %v1286
        %v1288 = vmul.f32 %v1285, 1.442695
        %v1289 = vpow.pop %v1288
        %v1290 = vsel %vm1018, %v1287, 0.0
        %1291 = vadd.xlane.f32.xlu0 %v1290
        %v1292 = vpop.xlane.xlu0 %1291
        %v1293 = vsel %vm1018, %v1289, 0.0
        %1294 = vadd.xlane.f32.xlu0 %v1293
        %v1295 = vpop.xlane.xlu0 %1294
        %v1296 = vrcp.pop %v1292
        %v1297 = vrcp.pop %v1295
        %v1298 = vmul.f32 %v1287, %v1296
        %v1299 = vmul.f32 %v1289, %v1297
        %v1300 = vpack.c.bf16 %v1299, %v1298
        %1302 = vrot.lane.b32.xlu0 %v1224, 64
        %v1303 = vpop.permute.xlu0 %1302
        %v1306 = vsel %vm1018, %v1300, 0
        %1308 = vmatprep.subr.bf16.mxu0 0
        %1309 = vmatpush1.bf16.msra.mxu0 %v1303
        %1310 = vmatprep.subr.bf16.mxu0 0
        %1311 = vmatpush1.bf16.msra.mxu0 0
        %1312 = vmatprep.subr.bf16.mxu0 0
        %1313 = vmatpush1.bf16.msra.mxu0 0
        %1314 = vmatprep.subr.bf16.mxu0 0
        %1315 = vmatpush1.bf16.msra.mxu0 0
        %1316 = vmatprep.subr.bf16.mxu0 0
        %1317 = vmatpush1.bf16.msra.mxu0 0
        %1318 = vmatprep.subr.bf16.mxu0 0
        %1319 = vmatpush1.bf16.msra.mxu0 0
        %1320 = vmatprep.subr.bf16.mxu0 0
        %1321 = vmatpush1.bf16.msra.mxu0 0
        %1322 = vmatprep.subr.bf16.mxu0 0
        %1323 = vmatpush1.bf16.msra.mxu0 0
        %1324 = vmatprep.subr.bf16.mxu0 0
        %1325 = vmatpush1.bf16.msra.mxu0 0
        %1326 = vmatprep.subr.bf16.mxu0 0
        %1327 = vmatpush1.bf16.msra.mxu0 0
        %1328 = vmatprep.subr.bf16.mxu0 0
        %1329 = vmatpush1.bf16.msra.mxu0 0
        %1330 = vmatprep.subr.bf16.mxu0 0
        %1331 = vmatpush1.bf16.msra.mxu0 0
        %1332 = vmatprep.subr.bf16.mxu0 0
        %1333 = vmatpush1.bf16.msra.mxu0 0
        %1334 = vmatprep.subr.bf16.mxu0 0
        %1335 = vmatpush1.bf16.msra.mxu0 0
        %1336 = vmatprep.subr.bf16.mxu0 0
        %1337 = vmatpush1.bf16.msra.mxu0 0
        %1338 = vmatprep.subr.bf16.mxu0 0
        %1339 = vmatpush1.bf16.msra.mxu0 0
        %1340 = vmatprep.mubr.bf16.mxu0 0
        %1341 = vmatmul.mubr.bf16.gmra.mrb[0].mxu0 %v1306
        %v1342 = vpop.f32.mrb[0].mxu0
        %v1343 = vadd.f32 0.0, %v1342
        %v1344 = vpop.f32.mrb[0].mxu0
        %v1345 = vpop.f32.mrb[0].mxu0
        %v1346 = vadd.f32 0.0, %v1345
        %v1347 = vpop.f32.mrb[0].mxu0
        %1348 = vdwg.mxu0
        %v1349 = vpack.c.bf16 %v1346, %v1343
        %1351 = vrot.lane.b32.xlu0 %v1349, 64
        %v1352 = vpop.permute.xlu0 %1351
        %vm1354 = vcmask 785920
        %1355 = vst.msk [vmem:[#allocation4] sm:$0xff] %vm1354, %v1352
        %v1356 = vld [vmem:[%s960] sm:$0xff]
        %v1357 = vld [vmem:[%s960 + $0x8] sm:$0xff]
        %v1358 = vld [vmem:[%s960 + $0x10] sm:$0xff]
        %1360 = vrot.lane.b32.xlu0 %v1356, 32
        %v1361 = vpop.permute.xlu0 %1360
        %1363 = vrot.lane.b32.xlu0 %v1357, 32
        %v1364 = vpop.permute.xlu0 %1363
        %v1366 = vsel %vm970, %v1361, 0
        %v1369 = vsel %vm970, %v1364, 0
        %1371 = vmatprep.subr.bf16.mxu0 0
        %1372 = vmatpush1.bf16.xpose.msra.mxu0 %v1369
        %1373 = vmatprep.subr.bf16.mxu0 0
        %1374 = vmatpush1.bf16.xpose.msra.mxu0 0
        %1375 = vmatprep.subr.bf16.mxu0 0
        %1376 = vmatpush1.bf16.xpose.msra.mxu0 0
        %1377 = vmatprep.subr.bf16.mxu0 0
        %1378 = vmatpush1.bf16.xpose.msra.mxu0 0
        %1379 = vmatprep.subr.bf16.mxu0 0
        %1380 = vmatpush1.bf16.xpose.msra.mxu0 0
        %1381 = vmatprep.subr.bf16.mxu0 0
        %1382 = vmatpush1.bf16.xpose.msra.mxu0 0
        %1383 = vmatprep.subr.bf16.mxu0 0
        %1384 = vmatpush1.bf16.xpose.msra.mxu0 0
        %1385 = vmatprep.subr.bf16.mxu0 0
        %1386 = vmatpush1.bf16.xpose.msra.mxu0 0
        %1387 = vmatprep.subr.bf16.mxu0 0
        %1388 = vmatpush1.bf16.xpose.msra.mxu0 0
        %1389 = vmatprep.subr.bf16.mxu0 0
        %1390 = vmatpush1.bf16.xpose.msra.mxu0 0
        %1391 = vmatprep.subr.bf16.mxu0 0
        %1392 = vmatpush1.bf16.xpose.msra.mxu0 0
        %1393 = vmatprep.subr.bf16.mxu0 0
        %1394 = vmatpush1.bf16.xpose.msra.mxu0 0
        %1395 = vmatprep.subr.bf16.mxu0 0
        %1396 = vmatpush1.bf16.xpose.msra.mxu0 0
        %1397 = vmatprep.subr.bf16.mxu0 0
        %1398 = vmatpush1.bf16.xpose.msra.mxu0 0
        %1399 = vmatprep.subr.bf16.mxu0 0
        %1400 = vmatpush1.bf16.xpose.msra.mxu0 0
        %1401 = vmatprep.subr.bf16.mxu0 0
        %1402 = vmatpush1.bf16.xpose.msra.mxu0 0
        %1403 = vmatprep.mubr.bf16.mxu0 0
        %1404 = vmatmul.mubr.bf16.gmra.mrb[0].mxu0 %v1366
        %v1405 = vpop.f32.mrb[0].mxu0
        %v1406 = vadd.f32 %v968, %v1405
        %v1407 = vpop.f32.mrb[0].mxu0
        %v1408 = vpop.f32.mrb[0].mxu0
        %v1409 = vadd.f32 %v968, %v1408
        %v1410 = vpop.f32.mrb[0].mxu0
        %1411 = vdwg.mxu0
        %v1412 = vsel %vm1018, %v1406, -inf
        %1413 = vmax.xlane.f32.xlu0 %v1412
        %v1414 = vpop.xlane.xlu0 %1413
        %v1415 = vsel %vm1018, %v1409, -inf
        %1416 = vmax.xlane.f32.xlu0 %v1415
        %v1417 = vpop.xlane.xlu0 %1416
        %v1418 = vsub.f32 %v1406, %v1414
        %v1419 = vsub.f32 %v1409, %v1417
        %v1420 = vmul.f32 %v1418, 1.442695
        %v1421 = vpow.pop %v1420
        %v1422 = vmul.f32 %v1419, 1.442695
        %v1423 = vpow.pop %v1422
        %v1424 = vsel %vm1018, %v1421, 0.0
        %1425 = vadd.xlane.f32.xlu0 %v1424
        %v1426 = vpop.xlane.xlu0 %1425
        %v1427 = vsel %vm1018, %v1423, 0.0
        %1428 = vadd.xlane.f32.xlu0 %v1427
        %v1429 = vpop.xlane.xlu0 %1428
        %v1430 = vrcp.pop %v1426
        %v1431 = vrcp.pop %v1429
        %v1432 = vmul.f32 %v1421, %v1430
        %v1433 = vmul.f32 %v1423, %v1431
        %v1434 = vpack.c.bf16 %v1433, %v1432
        %1436 = vrot.lane.b32.xlu0 %v1358, 32
        %v1437 = vpop.permute.xlu0 %1436
        %v1440 = vsel %vm1018, %v1434, 0
        %1442 = vmatprep.subr.bf16.mxu0 0
        %1443 = vmatpush1.bf16.msra.mxu0 %v1437
        %1444 = vmatprep.subr.bf16.mxu0 0
        %1445 = vmatpush1.bf16.msra.mxu0 0
        %1446 = vmatprep.subr.bf16.mxu0 0
        %1447 = vmatpush1.bf16.msra.mxu0 0
        %1448 = vmatprep.subr.bf16.mxu0 0
        %1449 = vmatpush1.bf16.msra.mxu0 0
        %1450 = vmatprep.subr.bf16.mxu0 0
        %1451 = vmatpush1.bf16.msra.mxu0 0
        %1452 = vmatprep.subr.bf16.mxu0 0
        %1453 = vmatpush1.bf16.msra.mxu0 0
        %1454 = vmatprep.subr.bf16.mxu0 0
        %1455 = vmatpush1.bf16.msra.mxu0 0
        %1456 = vmatprep.subr.bf16.mxu0 0
        %1457 = vmatpush1.bf16.msra.mxu0 0
        %1458 = vmatprep.subr.bf16.mxu0 0
        %1459 = vmatpush1.bf16.msra.mxu0 0
        %1460 = vmatprep.subr.bf16.mxu0 0
        %1461 = vmatpush1.bf16.msra.mxu0 0
        %1462 = vmatprep.subr.bf16.mxu0 0
        %1463 = vmatpush1.bf16.msra.mxu0 0
        %1464 = vmatprep.subr.bf16.mxu0 0
        %1465 = vmatpush1.bf16.msra.mxu0 0
        %1466 = vmatprep.subr.bf16.mxu0 0
        %1467 = vmatpush1.bf16.msra.mxu0 0
        %1468 = vmatprep.subr.bf16.mxu0 0
        %1469 = vmatpush1.bf16.msra.mxu0 0
        %1470 = vmatprep.subr.bf16.mxu0 0
        %1471 = vmatpush1.bf16.msra.mxu0 0
        %1472 = vmatprep.subr.bf16.mxu0 0
        %1473 = vmatpush1.bf16.msra.mxu0 0
        %1474 = vmatprep.mubr.bf16.mxu0 0
        %1475 = vmatmul.mubr.bf16.gmra.mrb[0].mxu0 %v1440
        %v1476 = vpop.f32.mrb[0].mxu0
        %v1477 = vadd.f32 0.0, %v1476
        %v1478 = vpop.f32.mrb[0].mxu0
        %v1479 = vpop.f32.mrb[0].mxu0
        %v1480 = vadd.f32 0.0, %v1479
        %v1481 = vpop.f32.mrb[0].mxu0
        %1482 = vdwg.mxu0
        %v1483 = vpack.c.bf16 %v1480, %v1477
        %1485 = vrot.lane.b32.xlu0 %v1483, 96
        %v1486 = vpop.permute.xlu0 %1485
        %vm1488 = vcmask 1048320
        %1489 = vst.msk [vmem:[#allocation4] sm:$0xff] %vm1488, %v1486
        %s1490 = scalar_lea.vmem [#allocation10], 1
        %v1491 = vld [vmem:[%s1490] sm:$0x1]
        %s1492 = smul.u32 1, 3
        %s1493 = smul.addr %s1492, 8
        %s1494 = scalar_lea.vmem [#allocation3], %s1493
        %v1495 = vld [vmem:[%s1494] sm:$0xff]
        %v1496 = vld [vmem:[%s1494 + $0x8] sm:$0xff]
        %v1497 = vld [vmem:[%s1494 + $0x10] sm:$0xff]
        %v1499 = vlaneseq
        %v1500 = vshrl.u32 %v1499, 7
        %v1501 = vsub.s32 0, %v1500
        %v1502 = vrot.slane %v1491, %v1501
        %v1505 = vsel %vm970, %v1495, 0
        %v1508 = vsel %vm970, %v1496, 0
        %1510 = vmatprep.subr.bf16.mxu0 0
        %1511 = vmatpush1.bf16.xpose.msra.mxu0 %v1508
        %1512 = vmatprep.subr.bf16.mxu0 0
        %1513 = vmatpush1.bf16.xpose.msra.mxu0 0
        %1514 = vmatprep.subr.bf16.mxu0 0
        %1515 = vmatpush1.bf16.xpose.msra.mxu0 0
        %1516 = vmatprep.subr.bf16.mxu0 0
        %1517 = vmatpush1.bf16.xpose.msra.mxu0 0
        %1518 = vmatprep.subr.bf16.mxu0 0
        %1519 = vmatpush1.bf16.xpose.msra.mxu0 0
        %1520 = vmatprep.subr.bf16.mxu0 0
        %1521 = vmatpush1.bf16.xpose.msra.mxu0 0
        %1522 = vmatprep.subr.bf16.mxu0 0
        %1523 = vmatpush1.bf16.xpose.msra.mxu0 0
        %1524 = vmatprep.subr.bf16.mxu0 0
        %1525 = vmatpush1.bf16.xpose.msra.mxu0 0
        %1526 = vmatprep.subr.bf16.mxu0 0
        %1527 = vmatpush1.bf16.xpose.msra.mxu0 0
        %1528 = vmatprep.subr.bf16.mxu0 0
        %1529 = vmatpush1.bf16.xpose.msra.mxu0 0
        %1530 = vmatprep.subr.bf16.mxu0 0
        %1531 = vmatpush1.bf16.xpose.msra.mxu0 0
        %1532 = vmatprep.subr.bf16.mxu0 0
        %1533 = vmatpush1.bf16.xpose.msra.mxu0 0
        %1534 = vmatprep.subr.bf16.mxu0 0
        %1535 = vmatpush1.bf16.xpose.msra.mxu0 0
        %1536 = vmatprep.subr.bf16.mxu0 0
        %1537 = vmatpush1.bf16.xpose.msra.mxu0 0
        %1538 = vmatprep.subr.bf16.mxu0 0
        %1539 = vmatpush1.bf16.xpose.msra.mxu0 0
        %1540 = vmatprep.subr.bf16.mxu0 0
        %1541 = vmatpush1.bf16.xpose.msra.mxu0 0
        %1542 = vmatprep.mubr.bf16.mxu0 0
        %1543 = vmatmul.mubr.bf16.gmra.mrb[0].mxu0 %v1505
        %v1544 = vpop.f32.mrb[0].mxu0
        %v1545 = vadd.f32 %v1502, %v1544
        %v1546 = vpop.f32.mrb[0].mxu0
        %v1547 = vpop.f32.mrb[0].mxu0
        %v1548 = vadd.f32 %v1502, %v1547
        %v1549 = vpop.f32.mrb[0].mxu0
        %1550 = vdwg.mxu0
        %v1551 = vsel %vm1018, %v1545, -inf
        %1552 = vmax.xlane.f32.xlu0 %v1551
        %v1553 = vpop.xlane.xlu0 %1552
        %v1554 = vsel %vm1018, %v1548, -inf
        %1555 = vmax.xlane.f32.xlu0 %v1554
        %v1556 = vpop.xlane.xlu0 %1555
        %v1557 = vsub.f32 %v1545, %v1553
        %v1558 = vsub.f32 %v1548, %v1556
        %v1559 = vmul.f32 %v1557, 1.442695
        %v1560 = vpow.pop %v1559
        %v1561 = vmul.f32 %v1558, 1.442695
        %v1562 = vpow.pop %v1561
        %v1563 = vsel %vm1018, %v1560, 0.0
        %1564 = vadd.xlane.f32.xlu0 %v1563
        %v1565 = vpop.xlane.xlu0 %1564
        %v1566 = vsel %vm1018, %v1562, 0.0
        %1567 = vadd.xlane.f32.xlu0 %v1566
        %v1568 = vpop.xlane.xlu0 %1567
        %v1569 = vrcp.pop %v1565
        %v1570 = vrcp.pop %v1568
        %v1571 = vmul.f32 %v1560, %v1569
        %v1572 = vmul.f32 %v1562, %v1570
        %v1573 = vpack.c.bf16 %v1572, %v1571
        %v1575 = vsel %vm1018, %v1573, 0
        %1577 = vmatprep.subr.bf16.mxu0 0
        %1578 = vmatpush1.bf16.msra.mxu0 %v1497
        %1579 = vmatprep.subr.bf16.mxu0 0
        %1580 = vmatpush1.bf16.msra.mxu0 0
        %1581 = vmatprep.subr.bf16.mxu0 0
        %1582 = vmatpush1.bf16.msra.mxu0 0
        %1583 = vmatprep.subr.bf16.mxu0 0
        %1584 = vmatpush1.bf16.msra.mxu0 0
        %1585 = vmatprep.subr.bf16.mxu0 0
        %1586 = vmatpush1.bf16.msra.mxu0 0
        %1587 = vmatprep.subr.bf16.mxu0 0
        %1588 = vmatpush1.bf16.msra.mxu0 0
        %1589 = vmatprep.subr.bf16.mxu0 0
        %1590 = vmatpush1.bf16.msra.mxu0 0
        %1591 = vmatprep.subr.bf16.mxu0 0
        %1592 = vmatpush1.bf16.msra.mxu0 0
        %1593 = vmatprep.subr.bf16.mxu0 0
        %1594 = vmatpush1.bf16.msra.mxu0 0
        %1595 = vmatprep.subr.bf16.mxu0 0
        %1596 = vmatpush1.bf16.msra.mxu0 0
        %1597 = vmatprep.subr.bf16.mxu0 0
        %1598 = vmatpush1.bf16.msra.mxu0 0
        %1599 = vmatprep.subr.bf16.mxu0 0
        %1600 = vmatpush1.bf16.msra.mxu0 0
        %1601 = vmatprep.subr.bf16.mxu0 0
        %1602 = vmatpush1.bf16.msra.mxu0 0
        %1603 = vmatprep.subr.bf16.mxu0 0
        %1604 = vmatpush1.bf16.msra.mxu0 0
        %1605 = vmatprep.subr.bf16.mxu0 0
        %1606 = vmatpush1.bf16.msra.mxu0 0
        %1607 = vmatprep.subr.bf16.mxu0 0
        %1608 = vmatpush1.bf16.msra.mxu0 0
        %1609 = vmatprep.mubr.bf16.mxu0 0
        %1610 = vmatmul.mubr.bf16.gmra.mrb[0].mxu0 %v1575
        %v1611 = vpop.f32.mrb[0].mxu0
        %v1612 = vadd.f32 0.0, %v1611
        %v1613 = vpop.f32.mrb[0].mxu0
        %v1614 = vpop.f32.mrb[0].mxu0
        %v1615 = vadd.f32 0.0, %v1614
        %v1616 = vpop.f32.mrb[0].mxu0
        %1617 = vdwg.mxu0
        %v1618 = vpack.c.bf16 %v1615, %v1612
        %s1619 = scalar_lea.vmem [#allocation4], 8
        %1620 = vst.msk [vmem:[%s1619] sm:$0xff] %vm970, %v1618
        %v1621 = vld [vmem:[%s1494] sm:$0xff]
        %v1622 = vld [vmem:[%s1494 + $0x8] sm:$0xff]
        %v1623 = vld [vmem:[%s1494 + $0x10] sm:$0xff]
        %1625 = vrot.lane.b32.xlu0 %v1621, 96
        %v1626 = vpop.permute.xlu0 %1625
        %1628 = vrot.lane.b32.xlu0 %v1622, 96
        %v1629 = vpop.permute.xlu0 %1628
        %v1631 = vsel %vm970, %v1626, 0
        %v1634 = vsel %vm970, %v1629, 0
        %1636 = vmatprep.subr.bf16.mxu0 0
        %1637 = vmatpush1.bf16.xpose.msra.mxu0 %v1634
        %1638 = vmatprep.subr.bf16.mxu0 0
        %1639 = vmatpush1.bf16.xpose.msra.mxu0 0
        %1640 = vmatprep.subr.bf16.mxu0 0
        %1641 = vmatpush1.bf16.xpose.msra.mxu0 0
        %1642 = vmatprep.subr.bf16.mxu0 0
        %1643 = vmatpush1.bf16.xpose.msra.mxu0 0
        %1644 = vmatprep.subr.bf16.mxu0 0
        %1645 = vmatpush1.bf16.xpose.msra.mxu0 0
        %1646 = vmatprep.subr.bf16.mxu0 0
        %1647 = vmatpush1.bf16.xpose.msra.mxu0 0
        %1648 = vmatprep.subr.bf16.mxu0 0
        %1649 = vmatpush1.bf16.xpose.msra.mxu0 0
        %1650 = vmatprep.subr.bf16.mxu0 0
        %1651 = vmatpush1.bf16.xpose.msra.mxu0 0
        %1652 = vmatprep.subr.bf16.mxu0 0
        %1653 = vmatpush1.bf16.xpose.msra.mxu0 0
        %1654 = vmatprep.subr.bf16.mxu0 0
        %1655 = vmatpush1.bf16.xpose.msra.mxu0 0
        %1656 = vmatprep.subr.bf16.mxu0 0
        %1657 = vmatpush1.bf16.xpose.msra.mxu0 0
        %1658 = vmatprep.subr.bf16.mxu0 0
        %1659 = vmatpush1.bf16.xpose.msra.mxu0 0
        %1660 = vmatprep.subr.bf16.mxu0 0
        %1661 = vmatpush1.bf16.xpose.msra.mxu0 0
        %1662 = vmatprep.subr.bf16.mxu0 0
        %1663 = vmatpush1.bf16.xpose.msra.mxu0 0
        %1664 = vmatprep.subr.bf16.mxu0 0
        %1665 = vmatpush1.bf16.xpose.msra.mxu0 0
        %1666 = vmatprep.subr.bf16.mxu0 0
        %1667 = vmatpush1.bf16.xpose.msra.mxu0 0
        %1668 = vmatprep.mubr.bf16.mxu0 0
        %1669 = vmatmul.mubr.bf16.gmra.mrb[0].mxu0 %v1631
        %v1670 = vpop.f32.mrb[0].mxu0
        %v1671 = vadd.f32 %v1502, %v1670
        %v1672 = vpop.f32.mrb[0].mxu0
        %v1673 = vpop.f32.mrb[0].mxu0
        %v1674 = vadd.f32 %v1502, %v1673
        %v1675 = vpop.f32.mrb[0].mxu0
        %1676 = vdwg.mxu0
        %v1677 = vsel %vm1018, %v1671, -inf
        %1678 = vmax.xlane.f32.xlu0 %v1677
        %v1679 = vpop.xlane.xlu0 %1678
        %v1680 = vsel %vm1018, %v1674, -inf
        %1681 = vmax.xlane.f32.xlu0 %v1680
        %v1682 = vpop.xlane.xlu0 %1681
        %v1683 = vsub.f32 %v1671, %v1679
        %v1684 = vsub.f32 %v1674, %v1682
        %v1685 = vmul.f32 %v1683, 1.442695
        %v1686 = vpow.pop %v1685
        %v1687 = vmul.f32 %v1684, 1.442695
        %v1688 = vpow.pop %v1687
        %v1689 = vsel %vm1018, %v1686, 0.0
        %1690 = vadd.xlane.f32.xlu0 %v1689
        %v1691 = vpop.xlane.xlu0 %1690
        %v1692 = vsel %vm1018, %v1688, 0.0
        %1693 = vadd.xlane.f32.xlu0 %v1692
        %v1694 = vpop.xlane.xlu0 %1693
        %v1695 = vrcp.pop %v1691
        %v1696 = vrcp.pop %v1694
        %v1697 = vmul.f32 %v1686, %v1695
        %v1698 = vmul.f32 %v1688, %v1696
        %v1699 = vpack.c.bf16 %v1698, %v1697
        %1701 = vrot.lane.b32.xlu0 %v1623, 96
        %v1702 = vpop.permute.xlu0 %1701
        %v1705 = vsel %vm1018, %v1699, 0
        %1707 = vmatprep.subr.bf16.mxu0 0
        %1708 = vmatpush1.bf16.msra.mxu0 %v1702
        %1709 = vmatprep.subr.bf16.mxu0 0
        %1710 = vmatpush1.bf16.msra.mxu0 0
        %1711 = vmatprep.subr.bf16.mxu0 0
        %1712 = vmatpush1.bf16.msra.mxu0 0
        %1713 = vmatprep.subr.bf16.mxu0 0
        %1714 = vmatpush1.bf16.msra.mxu0 0
        %1715 = vmatprep.subr.bf16.mxu0 0
        %1716 = vmatpush1.bf16.msra.mxu0 0
        %1717 = vmatprep.subr.bf16.mxu0 0
        %1718 = vmatpush1.bf16.msra.mxu0 0
        %1719 = vmatprep.subr.bf16.mxu0 0
        %1720 = vmatpush1.bf16.msra.mxu0 0
        %1721 = vmatprep.subr.bf16.mxu0 0
        %1722 = vmatpush1.bf16.msra.mxu0 0
        %1723 = vmatprep.subr.bf16.mxu0 0
        %1724 = vmatpush1.bf16.msra.mxu0 0
        %1725 = vmatprep.subr.bf16.mxu0 0
        %1726 = vmatpush1.bf16.msra.mxu0 0
        %1727 = vmatprep.subr.bf16.mxu0 0
        %1728 = vmatpush1.bf16.msra.mxu0 0
        %1729 = vmatprep.subr.bf16.mxu0 0
        %1730 = vmatpush1.bf16.msra.mxu0 0
        %1731 = vmatprep.subr.bf16.mxu0 0
        %1732 = vmatpush1.bf16.msra.mxu0 0
        %1733 = vmatprep.subr.bf16.mxu0 0
        %1734 = vmatpush1.bf16.msra.mxu0 0
        %1735 = vmatprep.subr.bf16.mxu0 0
        %1736 = vmatpush1.bf16.msra.mxu0 0
        %1737 = vmatprep.subr.bf16.mxu0 0
        %1738 = vmatpush1.bf16.msra.mxu0 0
        %1739 = vmatprep.mubr.bf16.mxu0 0
        %1740 = vmatmul.mubr.bf16.gmra.mrb[0].mxu0 %v1705
        %v1741 = vpop.f32.mrb[0].mxu0
        %v1742 = vadd.f32 0.0, %v1741
        %v1743 = vpop.f32.mrb[0].mxu0
        %v1744 = vpop.f32.mrb[0].mxu0
        %v1745 = vadd.f32 0.0, %v1744
        %v1746 = vpop.f32.mrb[0].mxu0
        %1747 = vdwg.mxu0
        %v1748 = vpack.c.bf16 %v1745, %v1742
        %1750 = vrot.lane.b32.xlu0 %v1748, 32
        %v1751 = vpop.permute.xlu0 %1750
        %1753 = vst.msk [vmem:[%s1619] sm:$0xff] %vm1220, %v1751
        %v1754 = vld [vmem:[%s1494] sm:$0xff]
        %v1755 = vld [vmem:[%s1494 + $0x8] sm:$0xff]
        %v1756 = vld [vmem:[%s1494 + $0x10] sm:$0xff]
        %1758 = vrot.lane.b32.xlu0 %v1754, 64
        %v1759 = vpop.permute.xlu0 %1758
        %1761 = vrot.lane.b32.xlu0 %v1755, 64
        %v1762 = vpop.permute.xlu0 %1761
        %v1764 = vsel %vm970, %v1759, 0
        %v1767 = vsel %vm970, %v1762, 0
        %1769 = vmatprep.subr.bf16.mxu0 0
        %1770 = vmatpush1.bf16.xpose.msra.mxu0 %v1767
        %1771 = vmatprep.subr.bf16.mxu0 0
        %1772 = vmatpush1.bf16.xpose.msra.mxu0 0
        %1773 = vmatprep.subr.bf16.mxu0 0
        %1774 = vmatpush1.bf16.xpose.msra.mxu0 0
        %1775 = vmatprep.subr.bf16.mxu0 0
        %1776 = vmatpush1.bf16.xpose.msra.mxu0 0
        %1777 = vmatprep.subr.bf16.mxu0 0
        %1778 = vmatpush1.bf16.xpose.msra.mxu0 0
        %1779 = vmatprep.subr.bf16.mxu0 0
        %1780 = vmatpush1.bf16.xpose.msra.mxu0 0
        %1781 = vmatprep.subr.bf16.mxu0 0
        %1782 = vmatpush1.bf16.xpose.msra.mxu0 0
        %1783 = vmatprep.subr.bf16.mxu0 0
        %1784 = vmatpush1.bf16.xpose.msra.mxu0 0
        %1785 = vmatprep.subr.bf16.mxu0 0
        %1786 = vmatpush1.bf16.xpose.msra.mxu0 0
        %1787 = vmatprep.subr.bf16.mxu0 0
        %1788 = vmatpush1.bf16.xpose.msra.mxu0 0
        %1789 = vmatprep.subr.bf16.mxu0 0
        %1790 = vmatpush1.bf16.xpose.msra.mxu0 0
        %1791 = vmatprep.subr.bf16.mxu0 0
        %1792 = vmatpush1.bf16.xpose.msra.mxu0 0
        %1793 = vmatprep.subr.bf16.mxu0 0
        %1794 = vmatpush1.bf16.xpose.msra.mxu0 0
        %1795 = vmatprep.subr.bf16.mxu0 0
        %1796 = vmatpush1.bf16.xpose.msra.mxu0 0
        %1797 = vmatprep.subr.bf16.mxu0 0
        %1798 = vmatpush1.bf16.xpose.msra.mxu0 0
        %1799 = vmatprep.subr.bf16.mxu0 0
        %1800 = vmatpush1.bf16.xpose.msra.mxu0 0
        %1801 = vmatprep.mubr.bf16.mxu0 0
        %1802 = vmatmul.mubr.bf16.gmra.mrb[0].mxu0 %v1764
        %v1803 = vpop.f32.mrb[0].mxu0
        %v1804 = vadd.f32 %v1502, %v1803
        %v1805 = vpop.f32.mrb[0].mxu0
        %v1806 = vpop.f32.mrb[0].mxu0
        %v1807 = vadd.f32 %v1502, %v1806
        %v1808 = vpop.f32.mrb[0].mxu0
        %1809 = vdwg.mxu0
        %v1810 = vsel %vm1018, %v1804, -inf
        %1811 = vmax.xlane.f32.xlu0 %v1810
        %v1812 = vpop.xlane.xlu0 %1811
        %v1813 = vsel %vm1018, %v1807, -inf
        %1814 = vmax.xlane.f32.xlu0 %v1813
        %v1815 = vpop.xlane.xlu0 %1814
        %v1816 = vsub.f32 %v1804, %v1812
        %v1817 = vsub.f32 %v1807, %v1815
        %v1818 = vmul.f32 %v1816, 1.442695
        %v1819 = vpow.pop %v1818
        %v1820 = vmul.f32 %v1817, 1.442695
        %v1821 = vpow.pop %v1820
        %v1822 = vsel %vm1018, %v1819, 0.0
        %1823 = vadd.xlane.f32.xlu0 %v1822
        %v1824 = vpop.xlane.xlu0 %1823
        %v1825 = vsel %vm1018, %v1821, 0.0
        %1826 = vadd.xlane.f32.xlu0 %v1825
        %v1827 = vpop.xlane.xlu0 %1826
        %v1828 = vrcp.pop %v1824
        %v1829 = vrcp.pop %v1827
        %v1830 = vmul.f32 %v1819, %v1828
        %v1831 = vmul.f32 %v1821, %v1829
        %v1832 = vpack.c.bf16 %v1831, %v1830
        %1834 = vrot.lane.b32.xlu0 %v1756, 64
        %v1835 = vpop.permute.xlu0 %1834
        %v1838 = vsel %vm1018, %v1832, 0
        %1840 = vmatprep.subr.bf16.mxu0 0
        %1841 = vmatpush1.bf16.msra.mxu0 %v1835
        %1842 = vmatprep.subr.bf16.mxu0 0
        %1843 = vmatpush1.bf16.msra.mxu0 0
        %1844 = vmatprep.subr.bf16.mxu0 0
        %1845 = vmatpush1.bf16.msra.mxu0 0
        %1846 = vmatprep.subr.bf16.mxu0 0
        %1847 = vmatpush1.bf16.msra.mxu0 0
        %1848 = vmatprep.subr.bf16.mxu0 0
        %1849 = vmatpush1.bf16.msra.mxu0 0
        %1850 = vmatprep.subr.bf16.mxu0 0
        %1851 = vmatpush1.bf16.msra.mxu0 0
        %1852 = vmatprep.subr.bf16.mxu0 0
        %1853 = vmatpush1.bf16.msra.mxu0 0
        %1854 = vmatprep.subr.bf16.mxu0 0
        %1855 = vmatpush1.bf16.msra.mxu0 0
        %1856 = vmatprep.subr.bf16.mxu0 0
        %1857 = vmatpush1.bf16.msra.mxu0 0
        %1858 = vmatprep.subr.bf16.mxu0 0
        %1859 = vmatpush1.bf16.msra.mxu0 0
        %1860 = vmatprep.subr.bf16.mxu0 0
        %1861 = vmatpush1.bf16.msra.mxu0 0
        %1862 = vmatprep.subr.bf16.mxu0 0
        %1863 = vmatpush1.bf16.msra.mxu0 0
        %1864 = vmatprep.subr.bf16.mxu0 0
        %1865 = vmatpush1.bf16.msra.mxu0 0
        %1866 = vmatprep.subr.bf16.mxu0 0
        %1867 = vmatpush1.bf16.msra.mxu0 0
        %1868 = vmatprep.subr.bf16.mxu0 0
        %1869 = vmatpush1.bf16.msra.mxu0 0
        %1870 = vmatprep.subr.bf16.mxu0 0
        %1871 = vmatpush1.bf16.msra.mxu0 0
        %1872 = vmatprep.mubr.bf16.mxu0 0
        %1873 = vmatmul.mubr.bf16.gmra.mrb[0].mxu0 %v1838
        %v1874 = vpop.f32.mrb[0].mxu0
        %v1875 = vadd.f32 0.0, %v1874
        %v1876 = vpop.f32.mrb[0].mxu0
        %v1877 = vpop.f32.mrb[0].mxu0
        %v1878 = vadd.f32 0.0, %v1877
        %v1879 = vpop.f32.mrb[0].mxu0
        %1880 = vdwg.mxu0
        %v1881 = vpack.c.bf16 %v1878, %v1875
        %1883 = vrot.lane.b32.xlu0 %v1881, 64
        %v1884 = vpop.permute.xlu0 %1883
        %1886 = vst.msk [vmem:[%s1619] sm:$0xff] %vm1354, %v1884
        %v1887 = vld [vmem:[%s1494] sm:$0xff]
        %v1888 = vld [vmem:[%s1494 + $0x8] sm:$0xff]
        %v1889 = vld [vmem:[%s1494 + $0x10] sm:$0xff]
        %1891 = vrot.lane.b32.xlu0 %v1887, 32
        %v1892 = vpop.permute.xlu0 %1891
        %1894 = vrot.lane.b32.xlu0 %v1888, 32
        %v1895 = vpop.permute.xlu0 %1894
        %v1897 = vsel %vm970, %v1892, 0
        %v1900 = vsel %vm970, %v1895, 0
        %1902 = vmatprep.subr.bf16.mxu0 0
        %1903 = vmatpush1.bf16.xpose.msra.mxu0 %v1900
        %1904 = vmatprep.subr.bf16.mxu0 0
        %1905 = vmatpush1.bf16.xpose.msra.mxu0 0
        %1906 = vmatprep.subr.bf16.mxu0 0
        %1907 = vmatpush1.bf16.xpose.msra.mxu0 0
        %1908 = vmatprep.subr.bf16.mxu0 0
        %1909 = vmatpush1.bf16.xpose.msra.mxu0 0
        %1910 = vmatprep.subr.bf16.mxu0 0
        %1911 = vmatpush1.bf16.xpose.msra.mxu0 0
        %1912 = vmatprep.subr.bf16.mxu0 0
        %1913 = vmatpush1.bf16.xpose.msra.mxu0 0
        %1914 = vmatprep.subr.bf16.mxu0 0
        %1915 = vmatpush1.bf16.xpose.msra.mxu0 0
        %1916 = vmatprep.subr.bf16.mxu0 0
        %1917 = vmatpush1.bf16.xpose.msra.mxu0 0
        %1918 = vmatprep.subr.bf16.mxu0 0
        %1919 = vmatpush1.bf16.xpose.msra.mxu0 0
        %1920 = vmatprep.subr.bf16.mxu0 0
        %1921 = vmatpush1.bf16.xpose.msra.mxu0 0
        %1922 = vmatprep.subr.bf16.mxu0 0
        %1923 = vmatpush1.bf16.xpose.msra.mxu0 0
        %1924 = vmatprep.subr.bf16.mxu0 0
        %1925 = vmatpush1.bf16.xpose.msra.mxu0 0
        %1926 = vmatprep.subr.bf16.mxu0 0
        %1927 = vmatpush1.bf16.xpose.msra.mxu0 0
        %1928 = vmatprep.subr.bf16.mxu0 0
        %1929 = vmatpush1.bf16.xpose.msra.mxu0 0
        %1930 = vmatprep.subr.bf16.mxu0 0
        %1931 = vmatpush1.bf16.xpose.msra.mxu0 0
        %1932 = vmatprep.subr.bf16.mxu0 0
        %1933 = vmatpush1.bf16.xpose.msra.mxu0 0
        %1934 = vmatprep.mubr.bf16.mxu0 0
        %1935 = vmatmul.mubr.bf16.gmra.mrb[0].mxu0 %v1897
        %v1936 = vpop.f32.mrb[0].mxu0
        %v1937 = vadd.f32 %v1502, %v1936
        %v1938 = vpop.f32.mrb[0].mxu0
        %v1939 = vpop.f32.mrb[0].mxu0
        %v1940 = vadd.f32 %v1502, %v1939
        %v1941 = vpop.f32.mrb[0].mxu0
        %1942 = vdwg.mxu0
        %v1943 = vsel %vm1018, %v1937, -inf
        %1944 = vmax.xlane.f32.xlu0 %v1943
        %v1945 = vpop.xlane.xlu0 %1944
        %v1946 = vsel %vm1018, %v1940, -inf
        %1947 = vmax.xlane.f32.xlu0 %v1946
        %v1948 = vpop.xlane.xlu0 %1947
        %v1949 = vsub.f32 %v1937, %v1945
        %v1950 = vsub.f32 %v1940, %v1948
        %v1951 = vmul.f32 %v1949, 1.442695
        %v1952 = vpow.pop %v1951
        %v1953 = vmul.f32 %v1950, 1.442695
        %v1954 = vpow.pop %v1953
        %v1955 = vsel %vm1018, %v1952, 0.0
        %1956 = vadd.xlane.f32.xlu0 %v1955
        %v1957 = vpop.xlane.xlu0 %1956
        %v1958 = vsel %vm1018, %v1954, 0.0
        %1959 = vadd.xlane.f32.xlu0 %v1958
        %v1960 = vpop.xlane.xlu0 %1959
        %v1961 = vrcp.pop %v1957
        %v1962 = vrcp.pop %v1960
        %v1963 = vmul.f32 %v1952, %v1961
        %v1964 = vmul.f32 %v1954, %v1962
        %v1965 = vpack.c.bf16 %v1964, %v1963
        %1967 = vrot.lane.b32.xlu0 %v1889, 32
        %v1968 = vpop.permute.xlu0 %1967
        %v1971 = vsel %vm1018, %v1965, 0
        %1973 = vmatprep.subr.bf16.mxu0 0
        %1974 = vmatpush1.bf16.msra.mxu0 %v1968
        %1975 = vmatprep.subr.bf16.mxu0 0
        %1976 = vmatpush1.bf16.msra.mxu0 0
        %1977 = vmatprep.subr.bf16.mxu0 0
        %1978 = vmatpush1.bf16.msra.mxu0 0
        %1979 = vmatprep.subr.bf16.mxu0 0
        %1980 = vmatpush1.bf16.msra.mxu0 0
        %1981 = vmatprep.subr.bf16.mxu0 0
        %1982 = vmatpush1.bf16.msra.mxu0 0
        %1983 = vmatprep.subr.bf16.mxu0 0
        %1984 = vmatpush1.bf16.msra.mxu0 0
        %1985 = vmatprep.subr.bf16.mxu0 0
        %1986 = vmatpush1.bf16.msra.mxu0 0
        %1987 = vmatprep.subr.bf16.mxu0 0
        %1988 = vmatpush1.bf16.msra.mxu0 0
        %1989 = vmatprep.subr.bf16.mxu0 0
        %1990 = vmatpush1.bf16.msra.mxu0 0
        %1991 = vmatprep.subr.bf16.mxu0 0
        %1992 = vmatpush1.bf16.msra.mxu0 0
        %1993 = vmatprep.subr.bf16.mxu0 0
        %1994 = vmatpush1.bf16.msra.mxu0 0
        %1995 = vmatprep.subr.bf16.mxu0 0
        %1996 = vmatpush1.bf16.msra.mxu0 0
        %1997 = vmatprep.subr.bf16.mxu0 0
        %1998 = vmatpush1.bf16.msra.mxu0 0
        %1999 = vmatprep.subr.bf16.mxu0 0
        %2000 = vmatpush1.bf16.msra.mxu0 0
        %2001 = vmatprep.subr.bf16.mxu0 0
        %2002 = vmatpush1.bf16.msra.mxu0 0
        %2003 = vmatprep.subr.bf16.mxu0 0
        %2004 = vmatpush1.bf16.msra.mxu0 0
        %2005 = vmatprep.mubr.bf16.mxu0 0
        %2006 = vmatmul.mubr.bf16.gmra.mrb[0].mxu0 %v1971
        %v2007 = vpop.f32.mrb[0].mxu0
        %v2008 = vadd.f32 0.0, %v2007
        %v2009 = vpop.f32.mrb[0].mxu0
        %v2010 = vpop.f32.mrb[0].mxu0
        %v2011 = vadd.f32 0.0, %v2010
        %v2012 = vpop.f32.mrb[0].mxu0
        %2013 = vdwg.mxu0
        %v2014 = vpack.c.bf16 %v2011, %v2008
        %2016 = vrot.lane.b32.xlu0 %v2014, 96
        %v2017 = vpop.permute.xlu0 %2016
        %2019 = vst.msk [vmem:[%s1619] sm:$0xff] %vm1488, %v2017
        %v2020 = vld [vmem:[%s557] sm:$0x1]
        %v2021 = vld [vmem:[#allocation4] sm:$0xff]
        %v2022 = vld [vmem:[#allocation4 + $0x8] sm:$0xff]
        %v2023 = vld [vmem:[%s476] sm:$0xf]
        %v2024 = vld [vmem:[%s476 + $0x4] sm:$0xf]
        %v2025 = vld [vmem:[%s476 + $0x8] sm:$0xf]
        %v2026 = vld [vmem:[%s476 + $0xc] sm:$0xf]
        %v2027 = vld [vmem:[%s476 + $0x10] sm:$0xf]
        %v2028 = vld [vmem:[%s476 + $0x14] sm:$0xf]
        %v2029 = vld [vmem:[%s476 + $0x18] sm:$0xf]
        %v2030 = vld [vmem:[%s476 + $0x1c] sm:$0xf]
        %v2031 = vld [vmem:[%s476 + $0x20] sm:$0xf]
        %v2032 = vld [vmem:[%s476 + $0x24] sm:$0xf]
        %v2033 = vld [vmem:[%s476 + $0x28] sm:$0xf]
        %v2034 = vld [vmem:[%s476 + $0x2c] sm:$0xf]
        %v2035 = vld [vmem:[%s476 + $0x30] sm:$0xf]
        %v2036 = vld [vmem:[%s476 + $0x34] sm:$0xf]
        %v2037 = vld [vmem:[%s476 + $0x38] sm:$0xf]
        %v2038 = vld [vmem:[%s476 + $0x3c] sm:$0xf]
        %v2055 = vunpack.c.l.b16 %v2023
        %v2056 = vunpack.c.l.b16 %v2024
        %v2057 = vunpack.c.l.b16 %v2025
        %v2058 = vunpack.c.l.b16 %v2026
        %v2059 = vunpack.c.l.b16 %v2027
        %v2060 = vunpack.c.l.b16 %v2028
        %v2061 = vunpack.c.l.b16 %v2029
        %v2062 = vunpack.c.l.b16 %v2030
        %v2063 = vunpack.c.l.b16 %v2031
        %v2064 = vunpack.c.l.b16 %v2032
        %v2065 = vunpack.c.l.b16 %v2033
        %v2066 = vunpack.c.l.b16 %v2034
        %v2067 = vunpack.c.l.b16 %v2035
        %v2068 = vunpack.c.l.b16 %v2036
        %v2069 = vunpack.c.l.b16 %v2037
        %v2070 = vunpack.c.l.b16 %v2038
        %v2071 = vpack.c.b16 %v2056, %v2055
        %v2072 = vpack.c.b16 %v2058, %v2057
        %v2073 = vpack.c.b16 %v2060, %v2059
        %v2074 = vpack.c.b16 %v2062, %v2061
        %v2075 = vpack.c.b16 %v2064, %v2063
        %v2076 = vpack.c.b16 %v2066, %v2065
        %v2077 = vpack.c.b16 %v2068, %v2067
        %v2078 = vpack.c.b16 %v2070, %v2069
        %2087 = vmatprep.subr.bf16.mxu0 0
        %2088 = vmatpush1.bf16.msra.mxu0 %v2071
        %2089 = vmatprep.subr.bf16.mxu0 0
        %2090 = vmatpush1.bf16.msra.mxu0 %v2072
        %2091 = vmatprep.subr.bf16.mxu0 0
        %2092 = vmatpush1.bf16.msra.mxu0 %v2073
        %2093 = vmatprep.subr.bf16.mxu0 0
        %2094 = vmatpush1.bf16.msra.mxu0 %v2074
        %2095 = vmatprep.subr.bf16.mxu0 0
        %2096 = vmatpush1.bf16.msra.mxu0 %v2075
        %2097 = vmatprep.subr.bf16.mxu0 0
        %2098 = vmatpush1.bf16.msra.mxu0 %v2076
        %2099 = vmatprep.subr.bf16.mxu0 0
        %2100 = vmatpush1.bf16.msra.mxu0 %v2077
        %2101 = vmatprep.subr.bf16.mxu0 0
        %2102 = vmatpush1.bf16.msra.mxu0 %v2078
        %2103 = vmatprep.subr.bf16.mxu0 0
        %2104 = vmatpush1.bf16.msra.mxu0 0
        %2105 = vmatprep.subr.bf16.mxu0 0
        %2106 = vmatpush1.bf16.msra.mxu0 0
        %2107 = vmatprep.subr.bf16.mxu0 0
        %2108 = vmatpush1.bf16.msra.mxu0 0
        %2109 = vmatprep.subr.bf16.mxu0 0
        %2110 = vmatpush1.bf16.msra.mxu0 0
        %2111 = vmatprep.subr.bf16.mxu0 0
        %2112 = vmatpush1.bf16.msra.mxu0 0
        %2113 = vmatprep.subr.bf16.mxu0 0
        %2114 = vmatpush1.bf16.msra.mxu0 0
        %2115 = vmatprep.subr.bf16.mxu0 0
        %2116 = vmatpush1.bf16.msra.mxu0 0
        %2117 = vmatprep.subr.bf16.mxu0 0
        %2118 = vmatpush1.bf16.msra.mxu0 0
        %2119 = vmatprep.mubr.bf16.mxu0 0
        %2120 = vmatmul.mubr.bf16.gmra.mrb[0].mxu0 %v2021
        %v2121 = vpop.f32.mrb[0].mxu0
        %v2122 = vadd.f32 0.0, %v2121
        %v2123 = vpop.f32.mrb[0].mxu0
        %v2124 = vpop.f32.mrb[0].mxu0
        %v2125 = vadd.f32 0.0, %v2124
        %v2126 = vpop.f32.mrb[0].mxu0
        %2127 = vmatprep.mubr.bf16.mxu0 0
        %2128 = vmatmul.mubr.bf16.gmra.mrb[0].mxu0 %v2022
        %v2129 = vpop.f32.mrb[0].mxu0
        %v2130 = vadd.f32 0.0, %v2129
        %v2131 = vpop.f32.mrb[0].mxu0
        %v2132 = vpop.f32.mrb[0].mxu0
        %v2133 = vadd.f32 0.0, %v2132
        %v2134 = vpop.f32.mrb[0].mxu0
        %2135 = vdwg.mxu0
        %v2136 = vadd.f32 %v572, %v2122
        %v2137 = vadd.f32 %v573, %v2125
        %v2138 = vadd.f32 %v574, %v2130
        %v2139 = vadd.f32 %v575, %v2133
        %v2141 = vlaneseq
        %v2142 = vshrl.u32 %v2141, 7
        %v2143 = vsub.s32 0, %v2142
        %v2144 = vrot.slane %v2020, %v2143
        %v2146 = vadd.f32 %v2136, %v2144
        %v2147 = vadd.f32 %v2137, %v2144
        %v2148 = vadd.f32 %v2138, %v2144
        %v2149 = vadd.f32 %v2139, %v2144
        %s2150 = sadd.s32 %s576, 2
        %s2151 = sld [smem:[#allocation5 + %s2150]]
        %s2152 = sadd.s32 %s576, 3
        %s2153 = sld [smem:[#allocation5 + %s2152]]
        %2154 = vadd.xlane.f32.xlu0 %v2146
        %v2155 = vpop.xlane.xlu0 %2154
        %2156 = vadd.xlane.f32.xlu0 %v2147
        %v2157 = vpop.xlane.xlu0 %2156
        %2158 = vadd.xlane.f32.xlu0 %v2148
        %v2159 = vpop.xlane.xlu0 %2158
        %2160 = vadd.xlane.f32.xlu0 %v2149
        %v2161 = vpop.xlane.xlu0 %2160
        %v2162 = vmul.f32 %v2155, %v588
        %v2163 = vmul.f32 %v2157, %v588
        %v2164 = vmul.f32 %v2159, %v588
        %v2165 = vmul.f32 %v2161, %v588
        %v2166 = vsub.f32 %v2146, %v2162
        %v2167 = vsub.f32 %v2147, %v2163
        %v2168 = vsub.f32 %v2148, %v2164
        %v2169 = vsub.f32 %v2149, %v2165
        %v2170 = vmul.f32 %v2166, %v2166
        %v2171 = vmul.f32 %v2167, %v2167
        %v2172 = vmul.f32 %v2168, %v2168
        %v2173 = vmul.f32 %v2169, %v2169
        %2174 = vadd.xlane.f32.xlu0 %v2170
        %v2175 = vpop.xlane.xlu0 %2174
        %2176 = vadd.xlane.f32.xlu0 %v2171
        %v2177 = vpop.xlane.xlu0 %2176
        %2178 = vadd.xlane.f32.xlu0 %v2172
        %v2179 = vpop.xlane.xlu0 %2178
        %2180 = vadd.xlane.f32.xlu0 %v2173
        %v2181 = vpop.xlane.xlu0 %2180
        %v2182 = vmul.f32 %v2175, %v609
        %v2183 = vmul.f32 %v2177, %v609
        %v2184 = vmul.f32 %v2179, %v609
        %v2185 = vmul.f32 %v2181, %v609
        %v2186 = vstv %s2151
        %v2187 = vmul.f32 %v2186, %v2166
        %v2188 = vmul.f32 %v2186, %v2167
        %v2189 = vmul.f32 %v2186, %v2168
        %v2190 = vmul.f32 %v2186, %v2169
        %v2191 = vrsqrt.pop %v2182
        %v2192 = vmul.f32 %v2182, %v2191
        %vm2193 = vcmp.eq.f32.partialorder %v2182, inf
        %v2194 = vsel %vm2193, %v2182, %v2192
        %vm2195 = vcmp.eq.f32.partialorder %v2182, 0.0
        %v2196 = vand.u32 %v2182, 2147483648
        %v2197 = vsel %vm2195, %v2196, %v2194
        %v2198 = vrsqrt.pop %v2183
        %v2199 = vmul.f32 %v2183, %v2198
        %vm2200 = vcmp.eq.f32.partialorder %v2183, inf
        %v2201 = vsel %vm2200, %v2183, %v2199
        %vm2202 = vcmp.eq.f32.partialorder %v2183, 0.0
        %v2203 = vand.u32 %v2183, 2147483648
        %v2204 = vsel %vm2202, %v2203, %v2201
        %v2205 = vrsqrt.pop %v2184
        %v2206 = vmul.f32 %v2184, %v2205
        %vm2207 = vcmp.eq.f32.partialorder %v2184, inf
        %v2208 = vsel %vm2207, %v2184, %v2206
        %vm2209 = vcmp.eq.f32.partialorder %v2184, 0.0
        %v2210 = vand.u32 %v2184, 2147483648
        %v2211 = vsel %vm2209, %v2210, %v2208
        %v2212 = vrsqrt.pop %v2185
        %v2213 = vmul.f32 %v2185, %v2212
        %vm2214 = vcmp.eq.f32.partialorder %v2185, inf
        %v2215 = vsel %vm2214, %v2185, %v2213
        %vm2216 = vcmp.eq.f32.partialorder %v2185, 0.0
        %v2217 = vand.u32 %v2185, 2147483648
        %v2218 = vsel %vm2216, %v2217, %v2215
        %v2219 = vadd.f32 %v2197, 1e-06
        %v2220 = vadd.f32 %v2204, 1e-06
        %v2221 = vadd.f32 %v2211, 1e-06
        %v2222 = vadd.f32 %v2218, 1e-06
        %v2223 = vrcp.pop %v2219
        %v2224 = vmul.f32 %v2187, %v2223
        %v2225 = vrcp.pop %v2220
        %v2226 = vmul.f32 %v2188, %v2225
        %v2227 = vrcp.pop %v2221
        %v2228 = vmul.f32 %v2189, %v2227
        %v2229 = vrcp.pop %v2222
        %v2230 = vmul.f32 %v2190, %v2229
        %v2231 = vstv %s2153
        %v2232 = vadd.f32 %v2224, %v2231
        %v2233 = vadd.f32 %v2226, %v2231
        %v2234 = vadd.f32 %v2228, %v2231
        %v2235 = vadd.f32 %v2230, %v2231
        %v2236 = vpack.c.bf16 %v2233, %v2232
        %v2237 = vpack.c.bf16 %v2235, %v2234
        %v2238 = vld [vmem:[%s557 + $0x1] sm:$0x3]
        %v2239 = vld [vmem:[%s557 + $0x3] sm:$0x1]
        %v2240 = vld [vmem:[%s485] sm:$0xff]
        %v2241 = vld [vmem:[%s485 + $0x8] sm:$0xff]
        %v2242 = vld [vmem:[%s485 + $0x10] sm:$0xff]
        %v2243 = vld [vmem:[%s485 + $0x18] sm:$0xff]
        %v2244 = vld [vmem:[%s485 + $0x20] sm:$0xff]
        %v2245 = vld [vmem:[%s485 + $0x28] sm:$0xff]
        %v2246 = vld [vmem:[%s485 + $0x30] sm:$0xff]
        %v2247 = vld [vmem:[%s485 + $0x38] sm:$0xff]
        %v2248 = vld [vmem:[%s485 + $0x40] sm:$0xff]
        %v2249 = vld [vmem:[%s485 + $0x48] sm:$0xff]
        %v2250 = vld [vmem:[%s485 + $0x50] sm:$0xff]
        %v2251 = vld [vmem:[%s485 + $0x58] sm:$0xff]
        %v2252 = vld [vmem:[%s485 + $0x60] sm:$0xff]
        %v2253 = vld [vmem:[%s485 + $0x68] sm:$0xff]
        %v2254 = vld [vmem:[%s485 + $0x70] sm:$0xff]
        %v2255 = vld [vmem:[%s485 + $0x78] sm:$0xff]
        %v2257 = vlaneseq
        %v2258 = vshrl.u32 %v2257, 7
        %v2259 = vsub.s32 0, %v2258
        %v2260 = vrot.slane %v2238, %v2259
        %v2261 = vlaneseq
        %v2262 = vshrl.u32 %v2261, 7
        %v2263 = vsub.s32 1, %v2262
        %v2264 = vrot.slane %v2238, %v2263
        %v2283 = vunpack.c.l.b16 %v2240
        %v2284 = vunpack.c.h.b16 %v2240
        %v2285 = vunpack.c.l.b16 %v2241
        %v2286 = vunpack.c.h.b16 %v2241
        %v2287 = vunpack.c.l.b16 %v2242
        %v2288 = vunpack.c.h.b16 %v2242
        %v2289 = vunpack.c.l.b16 %v2243
        %v2290 = vunpack.c.h.b16 %v2243
        %v2291 = vunpack.c.l.b16 %v2244
        %v2292 = vunpack.c.h.b16 %v2244
        %v2293 = vunpack.c.l.b16 %v2245
        %v2294 = vunpack.c.h.b16 %v2245
        %v2295 = vunpack.c.l.b16 %v2246
        %v2296 = vunpack.c.h.b16 %v2246
        %v2297 = vunpack.c.l.b16 %v2247
        %v2298 = vunpack.c.h.b16 %v2247
        %v2299 = vunpack.c.l.b16 %v2248
        %v2300 = vunpack.c.h.b16 %v2248
        %v2301 = vunpack.c.l.b16 %v2249
        %v2302 = vunpack.c.h.b16 %v2249
        %v2303 = vunpack.c.l.b16 %v2250
        %v2304 = vunpack.c.h.b16 %v2250
        %v2305 = vunpack.c.l.b16 %v2251
        %v2306 = vunpack.c.h.b16 %v2251
        %v2307 = vunpack.c.l.b16 %v2252
        %v2308 = vunpack.c.h.b16 %v2252
        %v2309 = vunpack.c.l.b16 %v2253
        %v2310 = vunpack.c.h.b16 %v2253
        %v2311 = vunpack.c.l.b16 %v2254
        %v2312 = vunpack.c.h.b16 %v2254
        %v2313 = vunpack.c.l.b16 %v2255
        %v2314 = vunpack.c.h.b16 %v2255
        %v2315 = vpack.c.b16 %v2285, %v2283
        %v2316 = vpack.c.b16 %v2286, %v2284
        %v2317 = vpack.c.b16 %v2289, %v2287
        %v2318 = vpack.c.b16 %v2290, %v2288
        %v2319 = vpack.c.b16 %v2293, %v2291
        %v2320 = vpack.c.b16 %v2294, %v2292
        %v2321 = vpack.c.b16 %v2297, %v2295
        %v2322 = vpack.c.b16 %v2298, %v2296
        %v2323 = vpack.c.b16 %v2301, %v2299
        %v2324 = vpack.c.b16 %v2302, %v2300
        %v2325 = vpack.c.b16 %v2305, %v2303
        %v2326 = vpack.c.b16 %v2306, %v2304
        %v2327 = vpack.c.b16 %v2309, %v2307
        %v2328 = vpack.c.b16 %v2310, %v2308
        %v2329 = vpack.c.b16 %v2313, %v2311
        %v2330 = vpack.c.b16 %v2314, %v2312
        %2347 = vmatprep.subr.bf16.mxu0 %v2316
        %2348 = vmatpush1.bf16.msra.mxu0 %v2315
        %2349 = vmatprep.subr.bf16.mxu0 %v2318
        %2350 = vmatpush1.bf16.msra.mxu0 %v2317
        %2351 = vmatprep.subr.bf16.mxu0 %v2320
        %2352 = vmatpush1.bf16.msra.mxu0 %v2319
        %2353 = vmatprep.subr.bf16.mxu0 %v2322
        %2354 = vmatpush1.bf16.msra.mxu0 %v2321
        %2355 = vmatprep.subr.bf16.mxu0 %v2324
        %2356 = vmatpush1.bf16.msra.mxu0 %v2323
        %2357 = vmatprep.subr.bf16.mxu0 %v2326
        %2358 = vmatpush1.bf16.msra.mxu0 %v2325
        %2359 = vmatprep.subr.bf16.mxu0 %v2328
        %2360 = vmatpush1.bf16.msra.mxu0 %v2327
        %2361 = vmatprep.subr.bf16.mxu0 %v2330
        %2362 = vmatpush1.bf16.msra.mxu0 %v2329
        %2363 = vmatprep.subr.bf16.mxu0 0
        %2364 = vmatpush1.bf16.msra.mxu0 0
        %2365 = vmatprep.subr.bf16.mxu0 0
        %2366 = vmatpush1.bf16.msra.mxu0 0
        %2367 = vmatprep.subr.bf16.mxu0 0
        %2368 = vmatpush1.bf16.msra.mxu0 0
        %2369 = vmatprep.subr.bf16.mxu0 0
        %2370 = vmatpush1.bf16.msra.mxu0 0
        %2371 = vmatprep.subr.bf16.mxu0 0
        %2372 = vmatpush1.bf16.msra.mxu0 0
        %2373 = vmatprep.subr.bf16.mxu0 0
        %2374 = vmatpush1.bf16.msra.mxu0 0
        %2375 = vmatprep.subr.bf16.mxu0 0
        %2376 = vmatpush1.bf16.msra.mxu0 0
        %2377 = vmatprep.subr.bf16.mxu0 0
        %2378 = vmatpush1.bf16.msra.mxu0 0
        %2379 = vmatprep.mubr.bf16.mxu0 0
        %2380 = vmatmul.mubr.bf16.gmra.mrb[0].mxu0 %v2236
        %v2381 = vpop.f32.mrb[0].mxu0
        %v2382 = vadd.f32 %v2260, %v2381
        %v2383 = vpop.f32.mrb[0].mxu0
        %v2384 = vadd.f32 %v2264, %v2383
        %v2385 = vpop.f32.mrb[0].mxu0
        %v2386 = vadd.f32 %v2260, %v2385
        %v2387 = vpop.f32.mrb[0].mxu0
        %v2388 = vadd.f32 %v2264, %v2387
        %2389 = vmatprep.mubr.bf16.mxu0 0
        %2390 = vmatmul.mubr.bf16.gmra.mrb[0].mxu0 %v2237
        %v2391 = vpop.f32.mrb[0].mxu0
        %v2392 = vadd.f32 %v2260, %v2391
        %v2393 = vpop.f32.mrb[0].mxu0
        %v2394 = vadd.f32 %v2264, %v2393
        %v2395 = vpop.f32.mrb[0].mxu0
        %v2396 = vadd.f32 %v2260, %v2395
        %v2397 = vpop.f32.mrb[0].mxu0
        %v2398 = vadd.f32 %v2264, %v2397
        %2399 = vdwg.mxu0
        %v2400 = vmax.f32 %v2382, 0.0
        %v2401 = vmax.f32 %v2384, 0.0
        %v2402 = vmax.f32 %v2386, 0.0
        %v2403 = vmax.f32 %v2388, 0.0
        %v2404 = vmax.f32 %v2392, 0.0
        %v2405 = vmax.f32 %v2394, 0.0
        %v2406 = vmax.f32 %v2396, 0.0
        %v2407 = vmax.f32 %v2398, 0.0
        %v2408 = vpack.c.bf16 %v2402, %v2400
        %v2409 = vpack.c.bf16 %v2403, %v2401
        %v2410 = vpack.c.bf16 %v2406, %v2404
        %v2411 = vpack.c.bf16 %v2407, %v2405
        %v2412 = vld [vmem:[%s494] sm:$0xf]
        %v2413 = vld [vmem:[%s494 + $0x4] sm:$0xf]
        %v2414 = vld [vmem:[%s494 + $0x8] sm:$0xf]
        %v2415 = vld [vmem:[%s494 + $0xc] sm:$0xf]
        %v2416 = vld [vmem:[%s494 + $0x10] sm:$0xf]
        %v2417 = vld [vmem:[%s494 + $0x14] sm:$0xf]
        %v2418 = vld [vmem:[%s494 + $0x18] sm:$0xf]
        %v2419 = vld [vmem:[%s494 + $0x1c] sm:$0xf]
        %v2420 = vld [vmem:[%s494 + $0x20] sm:$0xf]
        %v2421 = vld [vmem:[%s494 + $0x24] sm:$0xf]
        %v2422 = vld [vmem:[%s494 + $0x28] sm:$0xf]
        %v2423 = vld [vmem:[%s494 + $0x2c] sm:$0xf]
        %v2424 = vld [vmem:[%s494 + $0x30] sm:$0xf]
        %v2425 = vld [vmem:[%s494 + $0x34] sm:$0xf]
        %v2426 = vld [vmem:[%s494 + $0x38] sm:$0xf]
        %v2427 = vld [vmem:[%s494 + $0x3c] sm:$0xf]
        %v2428 = vld [vmem:[%s494 + $0x40] sm:$0xf]
        %v2429 = vld [vmem:[%s494 + $0x44] sm:$0xf]
        %v2430 = vld [vmem:[%s494 + $0x48] sm:$0xf]
        %v2431 = vld [vmem:[%s494 + $0x4c] sm:$0xf]
        %v2432 = vld [vmem:[%s494 + $0x50] sm:$0xf]
        %v2433 = vld [vmem:[%s494 + $0x54] sm:$0xf]
        %v2434 = vld [vmem:[%s494 + $0x58] sm:$0xf]
        %v2435 = vld [vmem:[%s494 + $0x5c] sm:$0xf]
        %v2436 = vld [vmem:[%s494 + $0x60] sm:$0xf]
        %v2437 = vld [vmem:[%s494 + $0x64] sm:$0xf]
        %v2438 = vld [vmem:[%s494 + $0x68] sm:$0xf]
        %v2439 = vld [vmem:[%s494 + $0x6c] sm:$0xf]
        %v2440 = vld [vmem:[%s494 + $0x70] sm:$0xf]
        %v2441 = vld [vmem:[%s494 + $0x74] sm:$0xf]
        %v2442 = vld [vmem:[%s494 + $0x78] sm:$0xf]
        %v2443 = vld [vmem:[%s494 + $0x7c] sm:$0xf]
        %v2445 = vlaneseq
        %v2446 = vshrl.u32 %v2445, 7
        %v2447 = vsub.s32 0, %v2446
        %v2448 = vrot.slane %v2239, %v2447
        %v2482 = vunpack.c.l.b16 %v2412
        %v2483 = vunpack.c.l.b16 %v2413
        %v2484 = vunpack.c.l.b16 %v2414
        %v2485 = vunpack.c.l.b16 %v2415
        %v2486 = vunpack.c.l.b16 %v2416
        %v2487 = vunpack.c.l.b16 %v2417
        %v2488 = vunpack.c.l.b16 %v2418
        %v2489 = vunpack.c.l.b16 %v2419
        %v2490 = vunpack.c.l.b16 %v2420
        %v2491 = vunpack.c.l.b16 %v2421
        %v2492 = vunpack.c.l.b16 %v2422
        %v2493 = vunpack.c.l.b16 %v2423
        %v2494 = vunpack.c.l.b16 %v2424
        %v2495 = vunpack.c.l.b16 %v2425
        %v2496 = vunpack.c.l.b16 %v2426
        %v2497 = vunpack.c.l.b16 %v2427
        %v2498 = vunpack.c.l.b16 %v2428
        %v2499 = vunpack.c.l.b16 %v2429
        %v2500 = vunpack.c.l.b16 %v2430
        %v2501 = vunpack.c.l.b16 %v2431
        %v2502 = vunpack.c.l.b16 %v2432
        %v2503 = vunpack.c.l.b16 %v2433
        %v2504 = vunpack.c.l.b16 %v2434
        %v2505 = vunpack.c.l.b16 %v2435
        %v2506 = vunpack.c.l.b16 %v2436
        %v2507 = vunpack.c.l.b16 %v2437
        %v2508 = vunpack.c.l.b16 %v2438
        %v2509 = vunpack.c.l.b16 %v2439
        %v2510 = vunpack.c.l.b16 %v2440
        %v2511 = vunpack.c.l.b16 %v2441
        %v2512 = vunpack.c.l.b16 %v2442
        %v2513 = vunpack.c.l.b16 %v2443
        %v2514 = vpack.c.b16 %v2483, %v2482
        %v2515 = vpack.c.b16 %v2485, %v2484
        %v2516 = vpack.c.b16 %v2487, %v2486
        %v2517 = vpack.c.b16 %v2489, %v2488
        %v2518 = vpack.c.b16 %v2491, %v2490
        %v2519 = vpack.c.b16 %v2493, %v2492
        %v2520 = vpack.c.b16 %v2495, %v2494
        %v2521 = vpack.c.b16 %v2497, %v2496
        %v2522 = vpack.c.b16 %v2499, %v2498
        %v2523 = vpack.c.b16 %v2501, %v2500
        %v2524 = vpack.c.b16 %v2503, %v2502
        %v2525 = vpack.c.b16 %v2505, %v2504
        %v2526 = vpack.c.b16 %v2507, %v2506
        %v2527 = vpack.c.b16 %v2509, %v2508
        %v2528 = vpack.c.b16 %v2511, %v2510
        %v2529 = vpack.c.b16 %v2513, %v2512
        %2546 = vmatprep.subr.bf16.mxu0 0
        %2547 = vmatpush1.bf16.msra.mxu0 %v2514
        %2548 = vmatprep.subr.bf16.mxu0 0
        %2549 = vmatpush1.bf16.msra.mxu0 %v2515
        %2550 = vmatprep.subr.bf16.mxu0 0
        %2551 = vmatpush1.bf16.msra.mxu0 %v2516
        %2552 = vmatprep.subr.bf16.mxu0 0
        %2553 = vmatpush1.bf16.msra.mxu0 %v2517
        %2554 = vmatprep.subr.bf16.mxu0 0
        %2555 = vmatpush1.bf16.msra.mxu0 %v2518
        %2556 = vmatprep.subr.bf16.mxu0 0
        %2557 = vmatpush1.bf16.msra.mxu0 %v2519
        %2558 = vmatprep.subr.bf16.mxu0 0
        %2559 = vmatpush1.bf16.msra.mxu0 %v2520
        %2560 = vmatprep.subr.bf16.mxu0 0
        %2561 = vmatpush1.bf16.msra.mxu0 %v2521
        %2562 = vmatprep.subr.bf16.mxu0 0
        %2563 = vmatpush1.bf16.msra.mxu0 %v2522
        %2564 = vmatprep.subr.bf16.mxu0 0
        %2565 = vmatpush1.bf16.msra.mxu0 %v2523
        %2566 = vmatprep.subr.bf16.mxu0 0
        %2567 = vmatpush1.bf16.msra.mxu0 %v2524
        %2568 = vmatprep.subr.bf16.mxu0 0
        %2569 = vmatpush1.bf16.msra.mxu0 %v2525
        %2570 = vmatprep.subr.bf16.mxu0 0
        %2571 = vmatpush1.bf16.msra.mxu0 %v2526
        %2572 = vmatprep.subr.bf16.mxu0 0
        %2573 = vmatpush1.bf16.msra.mxu0 %v2527
        %2574 = vmatprep.subr.bf16.mxu0 0
        %2575 = vmatpush1.bf16.msra.mxu0 %v2528
        %2576 = vmatprep.subr.bf16.mxu0 0
        %2577 = vmatpush1.bf16.msra.mxu0 %v2529
        %2578 = vmatprep.mubr.bf16.mxu0 %v2409
        %2579 = vmatmul.mubr.bf16.gmra.mrb[0].mxu0 %v2408
        %v2580 = vpop.f32.mrb[0].mxu0
        %v2581 = vadd.f32 %v2448, %v2580
        %v2582 = vpop.f32.mrb[0].mxu0
        %v2583 = vpop.f32.mrb[0].mxu0
        %v2584 = vadd.f32 %v2448, %v2583
        %v2585 = vpop.f32.mrb[0].mxu0
        %2586 = vmatprep.mubr.bf16.mxu0 %v2411
        %2587 = vmatmul.mubr.bf16.gmra.mrb[0].mxu0 %v2410
        %v2588 = vpop.f32.mrb[0].mxu0
        %v2589 = vadd.f32 %v2448, %v2588
        %v2590 = vpop.f32.mrb[0].mxu0
        %v2591 = vpop.f32.mrb[0].mxu0
        %v2592 = vadd.f32 %v2448, %v2591
        %v2593 = vpop.f32.mrb[0].mxu0
        %2594 = vdwg.mxu0
        %v2595 = vadd.f32 %v2146, %v2581
        %v2596 = vadd.f32 %v2147, %v2584
        %v2597 = vadd.f32 %v2148, %v2589
        %v2598 = vadd.f32 %v2149, %v2592
        %2599 = vst [vmem:[#allocation2] sm:$0xff] %v2595
        %2600 = vst [vmem:[#allocation2 + $0x8] sm:$0xff] %v2596
        %2601 = vst [vmem:[#allocation2 + $0x10] sm:$0xff] %v2597
        %2602 = vst [vmem:[#allocation2 + $0x18] sm:$0xff] %v2598
        %p2603 = scmp.eq.s32.totalorder %s29, 1
        // Predicated region
        $region89: #{tpu_custom_call.1} parent=55 // pred_check
          %p2604 = pneg %p2603
        $region90: #{tpu_custom_call.1} parent=55 // pred_check_branch
          %2606 = sbr.rel (%p2604) target = $region92
        $region91: #{tpu_custom_call.1} parent=55 // pred_region
          %s2607 = sld [smem:[#allocation5 + $0x8]]
          %s2608 = sld [smem:[#allocation5 + $0x9]]
          %2609 = vadd.xlane.f32.xlu0 %v2595
          %v2610 = vpop.xlane.xlu0 %2609
          %2611 = vadd.xlane.f32.xlu0 %v2596
          %v2612 = vpop.xlane.xlu0 %2611
          %2613 = vadd.xlane.f32.xlu0 %v2597
          %v2614 = vpop.xlane.xlu0 %2613
          %2615 = vadd.xlane.f32.xlu0 %v2598
          %v2616 = vpop.xlane.xlu0 %2615
          %v2617 = vmul.f32 %v2610, %v588
          %v2618 = vmul.f32 %v2612, %v588
          %v2619 = vmul.f32 %v2614, %v588
          %v2620 = vmul.f32 %v2616, %v588
          %v2621 = vsub.f32 %v2595, %v2617
          %v2622 = vsub.f32 %v2596, %v2618
          %v2623 = vsub.f32 %v2597, %v2619
          %v2624 = vsub.f32 %v2598, %v2620
          %v2625 = vmul.f32 %v2621, %v2621
          %v2626 = vmul.f32 %v2622, %v2622
          %v2627 = vmul.f32 %v2623, %v2623
          %v2628 = vmul.f32 %v2624, %v2624
          %2629 = vadd.xlane.f32.xlu0 %v2625
          %v2630 = vpop.xlane.xlu0 %2629
          %2631 = vadd.xlane.f32.xlu0 %v2626
          %v2632 = vpop.xlane.xlu0 %2631
          %2633 = vadd.xlane.f32.xlu0 %v2627
          %v2634 = vpop.xlane.xlu0 %2633
          %2635 = vadd.xlane.f32.xlu0 %v2628
          %v2636 = vpop.xlane.xlu0 %2635
          %v2637 = vmul.f32 %v2630, %v609
          %v2638 = vmul.f32 %v2632, %v609
          %v2639 = vmul.f32 %v2634, %v609
          %v2640 = vmul.f32 %v2636, %v609
          %v2641 = vstv %s2607
          %v2642 = vmul.f32 %v2641, %v2621
          %v2643 = vmul.f32 %v2641, %v2622
          %v2644 = vmul.f32 %v2641, %v2623
          %v2645 = vmul.f32 %v2641, %v2624
          %v2646 = vrsqrt.pop %v2637
          %v2647 = vmul.f32 %v2637, %v2646
          %vm2648 = vcmp.eq.f32.partialorder %v2637, inf
          %v2649 = vsel %vm2648, %v2637, %v2647
          %vm2650 = vcmp.eq.f32.partialorder %v2637, 0.0
          %v2651 = vand.u32 %v2637, 2147483648
          %v2652 = vsel %vm2650, %v2651, %v2649
          %v2653 = vrsqrt.pop %v2638
          %v2654 = vmul.f32 %v2638, %v2653
          %vm2655 = vcmp.eq.f32.partialorder %v2638, inf
          %v2656 = vsel %vm2655, %v2638, %v2654
          %vm2657 = vcmp.eq.f32.partialorder %v2638, 0.0
          %v2658 = vand.u32 %v2638, 2147483648
          %v2659 = vsel %vm2657, %v2658, %v2656
          %v2660 = vrsqrt.pop %v2639
          %v2661 = vmul.f32 %v2639, %v2660
          %vm2662 = vcmp.eq.f32.partialorder %v2639, inf
          %v2663 = vsel %vm2662, %v2639, %v2661
          %vm2664 = vcmp.eq.f32.partialorder %v2639, 0.0
          %v2665 = vand.u32 %v2639, 2147483648
          %v2666 = vsel %vm2664, %v2665, %v2663
          %v2667 = vrsqrt.pop %v2640
          %v2668 = vmul.f32 %v2640, %v2667
          %vm2669 = vcmp.eq.f32.partialorder %v2640, inf
          %v2670 = vsel %vm2669, %v2640, %v2668
          %vm2671 = vcmp.eq.f32.partialorder %v2640, 0.0
          %v2672 = vand.u32 %v2640, 2147483648
          %v2673 = vsel %vm2671, %v2672, %v2670
          %v2674 = vadd.f32 %v2652, 1e-06
          %v2675 = vadd.f32 %v2659, 1e-06
          %v2676 = vadd.f32 %v2666, 1e-06
          %v2677 = vadd.f32 %v2673, 1e-06
          %v2678 = vrcp.pop %v2674
          %v2679 = vmul.f32 %v2642, %v2678
          %v2680 = vrcp.pop %v2675
          %v2681 = vmul.f32 %v2643, %v2680
          %v2682 = vrcp.pop %v2676
          %v2683 = vmul.f32 %v2644, %v2682
          %v2684 = vrcp.pop %v2677
          %v2685 = vmul.f32 %v2645, %v2684
          %v2686 = vstv %s2608
          %v2687 = vadd.f32 %v2679, %v2686
          %v2688 = vadd.f32 %v2681, %v2686
          %v2689 = vadd.f32 %v2683, %v2686
          %v2690 = vadd.f32 %v2685, %v2686
          %2691 = vst [vmem:[#allocation16] sm:$0xff] %v2687
          %2692 = vst [vmem:[#allocation16 + $0x8] sm:$0xff] %v2688
          %2693 = vst [vmem:[#allocation16 + $0x10] sm:$0xff] %v2689
          %2694 = vst [vmem:[#allocation16 + $0x18] sm:$0xff] %v2690
        $region92: #{tpu_custom_call.1} parent=55 // pred_fallthru
          _
        // Predicated region
        $region93: #{tpu_custom_call.1} parent=55 // pred_check
          %p2695 = pneg %p283
        $region94: #{tpu_custom_call.1} parent=55 // pred_check_branch
          %2697 = sbr.rel (%p2695) target = $region96
        $region95: #{tpu_custom_call.1} parent=55 // pred_region
          %s2698 = smul.u32 4, %s28
          %s2700 = ssub.s32 512, 512
          %2701 = vsyncadd [#allocation7], %s2700
          %s2702 = smul.addr %s2698, 128
          %s2703 = scalar_lea.hbm %s9, %s2702
          %s2704 = sshll.u32 [#allocation16], 4
          %s2705 = int_to_ptr.vmem [resolvable:$true] %s2704
          %2710 = dma.vmem_to_hbm [thread:$0]  %s2705, 512, %s2703, [#allocation7], 128, 128, 8
        $region96: #{tpu_custom_call.1} parent=55 // pred_fallthru
          _
        // Predicated region
        $region97: #{tpu_custom_call.1} parent=55 // pred_check
          %p2711 = pneg %p283
        $region98: #{tpu_custom_call.1} parent=55 // pred_check_branch
          %2713 = sbr.rel (%p2711) target = $region100
        $region99: #{tpu_custom_call.1} parent=55 // pred_region
          %2714 = dma.done [#allocation7], 512
        $region100: #{tpu_custom_call.1} parent=55 // pred_fallthru
          _
      $region56: #{tpu_custom_call.1} parent=5 // pred_fallthru
        _
      %p2715 = scmp.le.s32.totalorder 2, %s19
      // Predicated region
      $region101: #{tpu_custom_call.1} parent=5 // pred_check
        %p2716 = pneg %p2715
      $region102: #{tpu_custom_call.1} parent=5 // pred_check_branch
        %2718 = sbr.rel (%p2716) target = $region104
      $region103: #{tpu_custom_call.1} parent=5 // pred_region
        %s2719 = ssub.s32 %s19, 2
      $region104: #{tpu_custom_call.1} parent=5 // pred_fallthru
        _
    $region6: #{tpu_custom_call.1} parent=1 // loop_footer
      %s23 = sadd.s32 1, %s19
    $region7: #{tpu_custom_call.1} parent=1 // loop_footer_branch
      %18 = sbr.rel target = $region3
    $region8: #{tpu_custom_call.1} parent=1 // loop_exit
      _
    %2720 = vsyncpa [#allocation6], 1
    %s2721 = scalar_lea.sflag [#allocation6], 1
    %2722 = vsyncpa %s2721, 1
    %2723 = vsyncpa [#allocation11], 1
    %2724 = vsyncpa [#allocation7], 1
    %s2725 = scalar_lea.sflag [#allocation7], 1
    %2726 = vsyncpa %s2725, 1
    %2727 = vsyncpa [#allocation8], 1
    %s2728 = scalar_lea.sflag [#allocation8], 1
    %2729 = vsyncpa %s2728, 1

</llo_original>
